<compile_context>
chip_gen: v5e
topology: v5e:2x2
jax: 0.10.0
libtpu: 0.0.40
codegen_flags: <defaults>
</compile_context>

<pallas_src>
import numpy as np
import jax
import jax.numpy as jnp
from jax import lax
from jax.experimental import pallas as pl
from jax.experimental.pallas import tpu as pltpu


# ----------------------------------------------------------------------------------
# Pallas kernel: one FashionMNIST image (1x28x28) per grid step.
# ----------------------------------------------------------------------------------
def _gate_cnn_fashion_kernel(patches_ref, w1_ref, b1_ref, w2_ref, b2_ref, sel_ref,
                             wfc1_ref, bfc1_ref, wfc2_ref, bfc2_ref, wfc3_ref, bfc3_ref,
                             out_ref,
                             s_c1, s_a, s_p1, s_c2, s_q):
    f32 = jnp.float32

    # ---- conv1 (1->6, 5x5, valid) as ONE im2col matmul + bias + ReLU -----------------
    # patches_ref block: (1, 576, 25), rows = i*24 + j, cols = di*5 + dj
    c1 = jnp.dot(patches_ref[0], w1_ref[...], preferred_element_type=f32) + b1_ref[...]
    s_c1[...] = jnp.maximum(c1, 0.0)                       # (576, 6): rows=(i,j), lanes=oc

    # ---- maxpool1 (2x2, stride 2) -----------------------------------------------------
    # width pairs = adjacent rows -> stride-2 sublane reads; height pairs = 12-row blocks
    a = jnp.maximum(s_c1[pl.ds(0, 288, 2), :],
                    s_c1[pl.ds(1, 288, 2), :])             # (288, 6): rows = i*12 + j2
    s_a[...] = a
    for i2 in range(12):
        top = s_a[24 * i2:24 * i2 + 12, :]
        bot = s_a[24 * i2 + 12:24 * i2 + 24, :]
        s_p1[12 * i2:12 * i2 + 12, :] = jnp.maximum(top, bot)   # rows = i2*12 + j2
    s_p1[144:160, :] = jnp.zeros((16, 6), f32)             # zero the over-read pad rows

    # ---- conv2 (6->12, 5x5, valid): 25 tap matmuls over a sliding 96-row window, then
    #      one selection matmul compacts rows (oi*12+oj) -> dense (oi*8+oj) -------------
    acc = jnp.zeros((96, 12), f32)
    for tap in range(25):
        di, dj = tap // 5, tap % 5
        off = di * 12 + dj
        acc = acc + jnp.dot(s_p1[off:off + 96, :], w2_ref[tap],
                            preferred_element_type=f32)
    c2 = jnp.dot(sel_ref[...], acc, preferred_element_type=f32) + b2_ref[...]
    s_c2[...] = jnp.maximum(c2, 0.0)                       # (64, 12): rows = oi*8 + oj

    # ---- maxpool2 (2x2, stride 2): width half here, height half fused into fc1 --------
    q = jnp.maximum(s_c2[pl.ds(0, 32, 2), :],
                    s_c2[pl.ds(1, 32, 2), :])              # (32, 12): rows = oi*4 + pj
    s_q[...] = q

    # ---- fc1 (12*4*4 -> 84): 16 independent row matmuls, shallow tree-sum, ReLU --------
    parts = []
    for pi in range(4):
        m_pi = jnp.maximum(s_q[pi * 8:pi * 8 + 4, :],
                           s_q[pi * 8 + 4:pi * 8 + 8, :])  # (4, 12): rows = pj, lanes = oc
        for pj in range(4):
            parts.append(jnp.dot(m_pi[pj:pj + 1, :], wfc1_ref[pi * 4 + pj],
                                 preferred_element_type=f32))
    while len(parts) > 1:
        parts = [parts[i] + parts[i + 1] for i in range(0, len(parts), 2)]
    h1 = jnp.maximum(parts[0] + bfc1_ref[...], 0.0)        # (1, 84)
    # TODO(synk): nn.Dropout after fc1 (and the unused nn.Dropout2d) are identity in eval
    # mode; training-mode stochastic dropout is not implemented.

    # ---- fc2 (84->42) + ReLU, fc3 (42->1) lane-padded to 128 + sigmoid -----------------
    h2 = jnp.maximum(jnp.dot(h1, wfc2_ref[...], preferred_element_type=f32)
                     + bfc2_ref[...], 0.0)                 # (1, 42)
    logit = jnp.dot(h2, wfc3_ref[...], preferred_element_type=f32) + bfc3_ref[...]
    out_ref[0] = jax.nn.sigmoid(logit)                     # (1, 128); lane 0 = gate value


# ----------------------------------------------------------------------------------
# Wrapper: layout plumbing (im2col of the input, weight repacking) + pallas_call.
# ----------------------------------------------------------------------------------
def _conv2_row_select():
    """0/1 matrix mapping the strided conv2 accumulator rows (oi*12+oj) to dense rows."""
    sel = np.zeros((64, 96), np.float32)
    for oi in range(8):
        for oj in range(8):
            sel[oi * 8 + oj, oi * 12 + oj] = 1.0
    return sel


def gate_cnn_forward(x, params):
    """x: (N, 1, 28, 28) float32 -> (N, 1) sigmoid gate, matching GateCNNFashion.forward."""
    x = x.astype(jnp.float32)
    n = x.shape[0]
    xs = x[:, 0]                                           # (N, 28, 28)

    # im2col for conv1 (pure layout work, done host/XLA-side): rows = i*24+j, cols = di*5+dj
    patches = jnp.stack([xs[:, di:di + 24, dj:dj + 24]
                         for di in range(5) for dj in range(5)], axis=-1)
    patches = patches.reshape(n, 576, 25)

    # conv weights in matmul form
    w1k = params["conv1_w"][:, 0].transpose(1, 2, 0).reshape(25, 6)       # [di*5+dj, oc]
    b1k = params["conv1_b"].reshape(1, 6)
    w2k = params["conv2_w"].transpose(2, 3, 1, 0).reshape(25, 6, 12)      # [tap, ic, oc]
    b2k = params["conv2_b"].reshape(1, 12)
    sel = jnp.asarray(_conv2_row_select())

    # fc1 regrouped to (spatial position r=pi*4+pj, channel oc, unit), faithful to the
    # PyTorch NCHW flatten order (feature index = oc*16 + pi*4 + pj).
    wfc1k = params["fc1_w"].T.reshape(12, 16, 84).transpose(1, 0, 2)      # (16, 12, 84)
    bfc1k = params["fc1_b"].reshape(1, 84)
    wfc2k = params["fc2_w"].T                                             # (84, 42)
    bfc2k = params["fc2_b"].reshape(1, 42)
    # fc3 lane-padded to 128 so the final store is lane-dense (wrapper slices lane 0)
    wfc3k = jnp.zeros((42, 128), jnp.float32).at[:, 0].set(params["fc3_w"][0])
    bfc3k = jnp.zeros((1, 128), jnp.float32).at[0, 0].set(params["fc3_b"][0])

    weights = [w1k, b1k, w2k, b2k, sel, wfc1k, bfc1k, wfc2k, bfc2k, wfc3k, bfc3k]

    def _const_spec(shape):
        nd = len(shape)
        return pl.BlockSpec(shape, lambda i, _nd=nd: (0,) * _nd)

    in_specs = ([pl.BlockSpec((1, 576, 25), lambda i: (i, 0, 0))]
                + [_const_spec(w.shape) for w in weights])
    out_spec = pl.BlockSpec((1, 1, 128), lambda i: (i, 0, 0))

    out = pl.pallas_call(
        _gate_cnn_fashion_kernel,
        out_shape=jax.ShapeDtypeStruct((n, 1, 128), jnp.float32),
        grid_spec=pltpu.PrefetchScalarGridSpec(
            num_scalar_prefetch=0,
            grid=(n,),
            in_specs=in_specs,
            out_specs=out_spec,
            scratch_shapes=[
                pltpu.VMEM((576, 6), jnp.float32),   # conv1 output (relu'd)
                pltpu.VMEM((288, 6), jnp.float32),   # pool1 width-halved
                pltpu.VMEM((160, 6), jnp.float32),   # pooled 12x12x6 map (+zero pad rows)
                pltpu.VMEM((64, 12), jnp.float32),   # conv2 output (relu'd)
                pltpu.VMEM((32, 12), jnp.float32),   # pool2 width-halved
            ]),
        compiler_params=pltpu.CompilerParams(
            dimension_semantics=("parallel",)),
    )(patches, *weights)

    return out[:, 0, :1]                                   # (N, 1)


# ----------------------------------------------------------------------------------
# Parameters (PyTorch-layout) and a pure-JAX reference mirroring the nn.Module.
# ----------------------------------------------------------------------------------
def init_params(key):
    ks = jax.random.split(key, 10)

    def unif(k, shape, fan_in):
        b = 1.0 / np.sqrt(fan_in)
        return jax.random.uniform(k, shape, jnp.float32, -b, b)

    return dict(
        conv1_w=unif(ks[0], (6, 1, 5, 5), 25), conv1_b=unif(ks[1], (6,), 25),
        conv2_w=unif(ks[2], (12, 6, 5, 5), 150), conv2_b=unif(ks[3], (12,), 150),
        fc1_w=unif(ks[4], (84, 192), 192), fc1_b=unif(ks[5], (84,), 192),
        fc2_w=unif(ks[6], (42, 84), 84), fc2_b=unif(ks[7], (42,), 84),
        fc3_w=unif(ks[8], (1, 42), 42), fc3_b=unif(ks[9], (1,), 42),
    )


def reference_forward(x, p):
    """Pure-JAX NCHW reference of GateCNNFashion.forward (eval mode)."""
    dn = ("NCHW", "OIHW", "NCHW")
    y = lax.conv_general_dilated(x, p["conv1_w"], (1, 1), "VALID", dimension_numbers=dn)
    y = jnp.maximum(y + p["conv1_b"].reshape(1, -1, 1, 1), 0.0)
    y = lax.reduce_window(y, -jnp.inf, lax.max, (1, 1, 2, 2), (1, 1, 2, 2), "VALID")
    y = lax.conv_general_dilated(y, p["conv2_w"], (1, 1), "VALID", dimension_numbers=dn)
    y = jnp.maximum(y + p["conv2_b"].reshape(1, -1, 1, 1), 0.0)
    y = lax.reduce_window(y, -jnp.inf, lax.max, (1, 1, 2, 2), (1, 1, 2, 2), "VALID")
    f = y.reshape(y.shape[0], 12 * 4 * 4)                  # NCHW flatten, like x.view(-1, 192)
    h1 = jnp.maximum(f @ p["fc1_w"].T + p["fc1_b"], 0.0)
    h2 = jnp.maximum(h1 @ p["fc2_w"].T + p["fc2_b"], 0.0)
    return jax.nn.sigmoid(h2 @ p["fc3_w"].T + p["fc3_b"])


if __name__ == "__main__":
    key = jax.random.PRNGKey(0)
    kp, kx = jax.random.split(key)
    params = init_params(kp)

    x = jax.random.normal(kx, (2, 1, 28, 28), jnp.float32)   # batch=2 FashionMNIST-sized input

    out = jax.jit(gate_cnn_forward)(x, params)
    out = jax.block_until_ready(out)

    ref = reference_forward(x, params)
    assert out.shape == (2, 1)
    assert np.allclose(np.asarray(out), np.asarray(ref), atol=2e-3), (out, ref)
    print("KERNEL_OK")
</pallas_src>

<mosaic_0001>
module attributes {stable_mosaic.version = 11 : i64} {
  func.func @_gate_cnn_fashion_kernel(%arg0: i32, %arg1: memref<1x576x25xf32, #tpu.memory_space<vmem>>, %arg2: memref<25x6xf32, #tpu.memory_space<vmem>>, %arg3: memref<1x6xf32, #tpu.memory_space<vmem>>, %arg4: memref<25x6x12xf32, #tpu.memory_space<vmem>>, %arg5: memref<1x12xf32, #tpu.memory_space<vmem>>, %arg6: memref<64x96xf32, #tpu.memory_space<vmem>>, %arg7: memref<16x12x84xf32, #tpu.memory_space<vmem>>, %arg8: memref<1x84xf32, #tpu.memory_space<vmem>>, %arg9: memref<84x42xf32, #tpu.memory_space<vmem>>, %arg10: memref<1x42xf32, #tpu.memory_space<vmem>>, %arg11: memref<42x128xf32, #tpu.memory_space<vmem>>, %arg12: memref<1x128xf32, #tpu.memory_space<vmem>>, %arg13: memref<1x1x128xf32, #tpu.memory_space<vmem>>, %arg14: memref<576x6xf32, #tpu.memory_space<vmem>>, %arg15: memref<288x6xf32, #tpu.memory_space<vmem>>, %arg16: memref<160x6xf32, #tpu.memory_space<vmem>>, %arg17: memref<64x12xf32, #tpu.memory_space<vmem>>, %arg18: memref<32x12xf32, #tpu.memory_space<vmem>>) attributes {dimension_semantics = [#tpu.dimension_semantics<parallel>], iteration_bounds = array<i64: 2>, scalar_prefetch = 0 : i64, scratch_operands = 5 : i64, tpu.core_type = #tpu.core_type<tc>, window_params = [{transform_indices = @transform_0, window_bounds = array<i64: 1, 576, 25>}, {pipeline_mode = #tpu.pipeline_mode<synchronous>, transform_indices = @transform_1, window_bounds = array<i64: 25, 6>}, {pipeline_mode = #tpu.pipeline_mode<synchronous>, transform_indices = @transform_2, window_bounds = array<i64: 1, 6>}, {pipeline_mode = #tpu.pipeline_mode<synchronous>, transform_indices = @transform_3, window_bounds = array<i64: 25, 6, 12>}, {pipeline_mode = #tpu.pipeline_mode<synchronous>, transform_indices = @transform_4, window_bounds = array<i64: 1, 12>}, {pipeline_mode = #tpu.pipeline_mode<synchronous>, transform_indices = @transform_5, window_bounds = array<i64: 64, 96>}, {pipeline_mode = #tpu.pipeline_mode<synchronous>, transform_indices = @transform_6, window_bounds = array<i64: 16, 12, 84>}, {pipeline_mode = #tpu.pipeline_mode<synchronous>, transform_indices = @transform_7, window_bounds = array<i64: 1, 84>}, {pipeline_mode = #tpu.pipeline_mode<synchronous>, transform_indices = @transform_8, window_bounds = array<i64: 84, 42>}, {pipeline_mode = #tpu.pipeline_mode<synchronous>, transform_indices = @transform_9, window_bounds = array<i64: 1, 42>}, {pipeline_mode = #tpu.pipeline_mode<synchronous>, transform_indices = @transform_10, window_bounds = array<i64: 42, 128>}, {pipeline_mode = #tpu.pipeline_mode<synchronous>, transform_indices = @transform_11, window_bounds = array<i64: 1, 128>}, {transform_indices = @transform_12, window_bounds = array<i64: 1, 1, 128>}]} {
    %c0 = arith.constant 0 : index
    %c0_0 = arith.constant 0 : index
    %c0_1 = arith.constant 0 : index
    %0 = vector.load %arg1[%c0, %c0_0, %c0_1] : memref<1x576x25xf32, #tpu.memory_space<vmem>>, vector<1x576x25xf32>
    %1 = vector.shape_cast %0 : vector<1x576x25xf32> to vector<576x25xf32>
    %c0_2 = arith.constant 0 : index
    %c0_3 = arith.constant 0 : index
    %2 = vector.load %arg2[%c0_2, %c0_3] : memref<25x6xf32, #tpu.memory_space<vmem>>, vector<25x6xf32>
    %cst = arith.constant dense<0.000000e+00> : vector<576x6xf32>
    %3 = tpu.matmul %1, %2, %cst {dimension_numbers = #tpu.dot_dimension_numbers<[1], [0], [0], [1], [0, 0, 1, 1], [], []>} : vector<576x25xf32>, vector<25x6xf32>, vector<576x6xf32> -> vector<576x6xf32>
    %c0_4 = arith.constant 0 : index
    %c0_5 = arith.constant 0 : index
    %4 = vector.load %arg3[%c0_4, %c0_5] : memref<1x6xf32, #tpu.memory_space<vmem>>, vector<1x6xf32>
    %5 = vector.broadcast %4 : vector<1x6xf32> to vector<576x6xf32>
    %6 = arith.addf %3, %5 : vector<576x6xf32>
    %cst_6 = arith.constant 0.000000e+00 : f32
    %7 = vector.broadcast %cst_6 : f32 to vector<576x6xf32>
    %8 = arith.maximumf %6, %7 : vector<576x6xf32>
    %c0_7 = arith.constant 0 : index
    %c0_8 = arith.constant 0 : index
    %9 = vector.load %arg14[%c0_7, %c0_8] : memref<576x6xf32, #tpu.memory_space<vmem>>, vector<576x6xf32>
    tpu.vector_store %arg14[%c0_7, %c0_8], %8 {strides = array<i32>} : memref<576x6xf32, #tpu.memory_space<vmem>>, vector<576x6xf32>,
    %c0_9 = arith.constant 0 : index
    %c0_10 = arith.constant 0 : index
    %10 = tpu.strided_load %arg14[%c0_9, %c0_10] {strides = array<i32: 2, 1>} : memref<576x6xf32, #tpu.memory_space<vmem>>, vector<288x6xf32>
    %c1 = arith.constant 1 : index
    %c0_11 = arith.constant 0 : index
    %11 = tpu.strided_load %arg14[%c1, %c0_11] {strides = array<i32: 2, 1>} : memref<576x6xf32, #tpu.memory_space<vmem>>, vector<288x6xf32>
    %12 = arith.maximumf %10, %11 : vector<288x6xf32>
    %c0_12 = arith.constant 0 : index
    %c0_13 = arith.constant 0 : index
    %13 = vector.load %arg15[%c0_12, %c0_13] : memref<288x6xf32, #tpu.memory_space<vmem>>, vector<288x6xf32>
    tpu.vector_store %arg15[%c0_12, %c0_13], %12 {strides = array<i32>} : memref<288x6xf32, #tpu.memory_space<vmem>>, vector<288x6xf32>,
    %c0_14 = arith.constant 0 : index
    %c0_15 = arith.constant 0 : index
    %14 = vector.load %arg15[%c0_14, %c0_15] : memref<288x6xf32, #tpu.memory_space<vmem>>, vector<12x6xf32>
    %c12 = arith.constant 12 : index
    %c0_16 = arith.constant 0 : index
    %15 = vector.load %arg15[%c12, %c0_16] : memref<288x6xf32, #tpu.memory_space<vmem>>, vector<12x6xf32>
    %16 = arith.maximumf %14, %15 : vector<12x6xf32>
    %c0_17 = arith.constant 0 : index
    %c0_18 = arith.constant 0 : index
    %17 = vector.load %arg16[%c0_17, %c0_18] : memref<160x6xf32, #tpu.memory_space<vmem>>, vector<12x6xf32>
    tpu.vector_store %arg16[%c0_17, %c0_18], %16 {strides = array<i32>} : memref<160x6xf32, #tpu.memory_space<vmem>>, vector<12x6xf32>,
    %c24 = arith.constant 24 : index
    %c0_19 = arith.constant 0 : index
    %18 = vector.load %arg15[%c24, %c0_19] : memref<288x6xf32, #tpu.memory_space<vmem>>, vector<12x6xf32>
    %c36 = arith.constant 36 : index
    %c0_20 = arith.constant 0 : index
    %19 = vector.load %arg15[%c36, %c0_20] : memref<288x6xf32, #tpu.memory_space<vmem>>, vector<12x6xf32>
    %20 = arith.maximumf %18, %19 : vector<12x6xf32>
    %c12_21 = arith.constant 12 : index
    %c0_22 = arith.constant 0 : index
    %21 = vector.load %arg16[%c12_21, %c0_22] : memref<160x6xf32, #tpu.memory_space<vmem>>, vector<12x6xf32>
    tpu.vector_store %arg16[%c12_21, %c0_22], %20 {strides = array<i32>} : memref<160x6xf32, #tpu.memory_space<vmem>>, vector<12x6xf32>,
    %c48 = arith.constant 48 : index
    %c0_23 = arith.constant 0 : index
    %22 = vector.load %arg15[%c48, %c0_23] : memref<288x6xf32, #tpu.memory_space<vmem>>, vector<12x6xf32>
    %c60 = arith.constant 60 : index
    %c0_24 = arith.constant 0 : index
    %23 = vector.load %arg15[%c60, %c0_24] : memref<288x6xf32, #tpu.memory_space<vmem>>, vector<12x6xf32>
    %24 = arith.maximumf %22, %23 : vector<12x6xf32>
    %c24_25 = arith.constant 24 : index
    %c0_26 = arith.constant 0 : index
    %25 = vector.load %arg16[%c24_25, %c0_26] : memref<160x6xf32, #tpu.memory_space<vmem>>, vector<12x6xf32>
    tpu.vector_store %arg16[%c24_25, %c0_26], %24 {strides = array<i32>} : memref<160x6xf32, #tpu.memory_space<vmem>>, vector<12x6xf32>,
    %c72 = arith.constant 72 : index
    %c0_27 = arith.constant 0 : index
    %26 = vector.load %arg15[%c72, %c0_27] : memref<288x6xf32, #tpu.memory_space<vmem>>, vector<12x6xf32>
    %c84 = arith.constant 84 : index
    %c0_28 = arith.constant 0 : index
    %27 = vector.load %arg15[%c84, %c0_28] : memref<288x6xf32, #tpu.memory_space<vmem>>, vector<12x6xf32>
    %28 = arith.maximumf %26, %27 : vector<12x6xf32>
    %c36_29 = arith.constant 36 : index
    %c0_30 = arith.constant 0 : index
    %29 = vector.load %arg16[%c36_29, %c0_30] : memref<160x6xf32, #tpu.memory_space<vmem>>, vector<12x6xf32>
    tpu.vector_store %arg16[%c36_29, %c0_30], %28 {strides = array<i32>} : memref<160x6xf32, #tpu.memory_space<vmem>>, vector<12x6xf32>,
    %c96 = arith.constant 96 : index
    %c0_31 = arith.constant 0 : index
    %30 = vector.load %arg15[%c96, %c0_31] : memref<288x6xf32, #tpu.memory_space<vmem>>, vector<12x6xf32>
    %c108 = arith.constant 108 : index
    %c0_32 = arith.constant 0 : index
    %31 = vector.load %arg15[%c108, %c0_32] : memref<288x6xf32, #tpu.memory_space<vmem>>, vector<12x6xf32>
    %32 = arith.maximumf %30, %31 : vector<12x6xf32>
    %c48_33 = arith.constant 48 : index
    %c0_34 = arith.constant 0 : index
    %33 = vector.load %arg16[%c48_33, %c0_34] : memref<160x6xf32, #tpu.memory_space<vmem>>, vector<12x6xf32>
    tpu.vector_store %arg16[%c48_33, %c0_34], %32 {strides = array<i32>} : memref<160x6xf32, #tpu.memory_space<vmem>>, vector<12x6xf32>,
    %c120 = arith.constant 120 : index
    %c0_35 = arith.constant 0 : index
    %34 = vector.load %arg15[%c120, %c0_35] : memref<288x6xf32, #tpu.memory_space<vmem>>, vector<12x6xf32>
    %c132 = arith.constant 132 : index
    %c0_36 = arith.constant 0 : index
    %35 = vector.load %arg15[%c132, %c0_36] : memref<288x6xf32, #tpu.memory_space<vmem>>, vector<12x6xf32>
    %36 = arith.maximumf %34, %35 : vector<12x6xf32>
    %c60_37 = arith.constant 60 : index
    %c0_38 = arith.constant 0 : index
    %37 = vector.load %arg16[%c60_37, %c0_38] : memref<160x6xf32, #tpu.memory_space<vmem>>, vector<12x6xf32>
    tpu.vector_store %arg16[%c60_37, %c0_38], %36 {strides = array<i32>} : memref<160x6xf32, #tpu.memory_space<vmem>>, vector<12x6xf32>,
    %c144 = arith.constant 144 : index
    %c0_39 = arith.constant 0 : index
    %38 = vector.load %arg15[%c144, %c0_39] : memref<288x6xf32, #tpu.memory_space<vmem>>, vector<12x6xf32>
    %c156 = arith.constant 156 : index
    %c0_40 = arith.constant 0 : index
    %39 = vector.load %arg15[%c156, %c0_40] : memref<288x6xf32, #tpu.memory_space<vmem>>, vector<12x6xf32>
    %40 = arith.maximumf %38, %39 : vector<12x6xf32>
    %c72_41 = arith.constant 72 : index
    %c0_42 = arith.constant 0 : index
    %41 = vector.load %arg16[%c72_41, %c0_42] : memref<160x6xf32, #tpu.memory_space<vmem>>, vector<12x6xf32>
    tpu.vector_store %arg16[%c72_41, %c0_42], %40 {strides = array<i32>} : memref<160x6xf32, #tpu.memory_space<vmem>>, vector<12x6xf32>,
    %c168 = arith.constant 168 : index
    %c0_43 = arith.constant 0 : index
    %42 = vector.load %arg15[%c168, %c0_43] : memref<288x6xf32, #tpu.memory_space<vmem>>, vector<12x6xf32>
    %c180 = arith.constant 180 : index
    %c0_44 = arith.constant 0 : index
    %43 = vector.load %arg15[%c180, %c0_44] : memref<288x6xf32, #tpu.memory_space<vmem>>, vector<12x6xf32>
    %44 = arith.maximumf %42, %43 : vector<12x6xf32>
    %c84_45 = arith.constant 84 : index
    %c0_46 = arith.constant 0 : index
    %45 = vector.load %arg16[%c84_45, %c0_46] : memref<160x6xf32, #tpu.memory_space<vmem>>, vector<12x6xf32>
    tpu.vector_store %arg16[%c84_45, %c0_46], %44 {strides = array<i32>} : memref<160x6xf32, #tpu.memory_space<vmem>>, vector<12x6xf32>,
    %c192 = arith.constant 192 : index
    %c0_47 = arith.constant 0 : index
    %46 = vector.load %arg15[%c192, %c0_47] : memref<288x6xf32, #tpu.memory_space<vmem>>, vector<12x6xf32>
    %c204 = arith.constant 204 : index
    %c0_48 = arith.constant 0 : index
    %47 = vector.load %arg15[%c204, %c0_48] : memref<288x6xf32, #tpu.memory_space<vmem>>, vector<12x6xf32>
    %48 = arith.maximumf %46, %47 : vector<12x6xf32>
    %c96_49 = arith.constant 96 : index
    %c0_50 = arith.constant 0 : index
    %49 = vector.load %arg16[%c96_49, %c0_50] : memref<160x6xf32, #tpu.memory_space<vmem>>, vector<12x6xf32>
    tpu.vector_store %arg16[%c96_49, %c0_50], %48 {strides = array<i32>} : memref<160x6xf32, #tpu.memory_space<vmem>>, vector<12x6xf32>,
    %c216 = arith.constant 216 : index
    %c0_51 = arith.constant 0 : index
    %50 = vector.load %arg15[%c216, %c0_51] : memref<288x6xf32, #tpu.memory_space<vmem>>, vector<12x6xf32>
    %c228 = arith.constant 228 : index
    %c0_52 = arith.constant 0 : index
    %51 = vector.load %arg15[%c228, %c0_52] : memref<288x6xf32, #tpu.memory_space<vmem>>, vector<12x6xf32>
    %52 = arith.maximumf %50, %51 : vector<12x6xf32>
    %c108_53 = arith.constant 108 : index
    %c0_54 = arith.constant 0 : index
    %53 = vector.load %arg16[%c108_53, %c0_54] : memref<160x6xf32, #tpu.memory_space<vmem>>, vector<12x6xf32>
    tpu.vector_store %arg16[%c108_53, %c0_54], %52 {strides = array<i32>} : memref<160x6xf32, #tpu.memory_space<vmem>>, vector<12x6xf32>,
    %c240 = arith.constant 240 : index
    %c0_55 = arith.constant 0 : index
    %54 = vector.load %arg15[%c240, %c0_55] : memref<288x6xf32, #tpu.memory_space<vmem>>, vector<12x6xf32>
    %c252 = arith.constant 252 : index
    %c0_56 = arith.constant 0 : index
    %55 = vector.load %arg15[%c252, %c0_56] : memref<288x6xf32, #tpu.memory_space<vmem>>, vector<12x6xf32>
    %56 = arith.maximumf %54, %55 : vector<12x6xf32>
    %c120_57 = arith.constant 120 : index
    %c0_58 = arith.constant 0 : index
    %57 = vector.load %arg16[%c120_57, %c0_58] : memref<160x6xf32, #tpu.memory_space<vmem>>, vector<12x6xf32>
    tpu.vector_store %arg16[%c120_57, %c0_58], %56 {strides = array<i32>} : memref<160x6xf32, #tpu.memory_space<vmem>>, vector<12x6xf32>,
    %c264 = arith.constant 264 : index
    %c0_59 = arith.constant 0 : index
    %58 = vector.load %arg15[%c264, %c0_59] : memref<288x6xf32, #tpu.memory_space<vmem>>, vector<12x6xf32>
    %c276 = arith.constant 276 : index
    %c0_60 = arith.constant 0 : index
    %59 = vector.load %arg15[%c276, %c0_60] : memref<288x6xf32, #tpu.memory_space<vmem>>, vector<12x6xf32>
    %60 = arith.maximumf %58, %59 : vector<12x6xf32>
    %c132_61 = arith.constant 132 : index
    %c0_62 = arith.constant 0 : index
    %61 = vector.load %arg16[%c132_61, %c0_62] : memref<160x6xf32, #tpu.memory_space<vmem>>, vector<12x6xf32>
    tpu.vector_store %arg16[%c132_61, %c0_62], %60 {strides = array<i32>} : memref<160x6xf32, #tpu.memory_space<vmem>>, vector<12x6xf32>,
    %cst_63 = arith.constant 0.000000e+00 : f32
    %62 = vector.broadcast %cst_63 : f32 to vector<16x6xf32>
    %c144_64 = arith.constant 144 : index
    %c0_65 = arith.constant 0 : index
    %63 = vector.load %arg16[%c144_64, %c0_65] : memref<160x6xf32, #tpu.memory_space<vmem>>, vector<16x6xf32>
    tpu.vector_store %arg16[%c144_64, %c0_65], %62 {strides = array<i32>} : memref<160x6xf32, #tpu.memory_space<vmem>>, vector<16x6xf32>,
    %cst_66 = arith.constant 0.000000e+00 : f32
    %64 = vector.broadcast %cst_66 : f32 to vector<96x12xf32>
    %c0_67 = arith.constant 0 : index
    %c0_68 = arith.constant 0 : index
    %65 = vector.load %arg16[%c0_67, %c0_68] : memref<160x6xf32, #tpu.memory_space<vmem>>, vector<96x6xf32>
    %c0_69 = arith.constant 0 : index
    %c0_70 = arith.constant 0 : index
    %c0_71 = arith.constant 0 : index
    %66 = vector.load %arg4[%c0_69, %c0_70, %c0_71] : memref<25x6x12xf32, #tpu.memory_space<vmem>>, vector<1x6x12xf32>
    %67 = vector.shape_cast %66 : vector<1x6x12xf32> to vector<6x12xf32>
    %cst_72 = arith.constant dense<0.000000e+00> : vector<96x12xf32>
    %68 = tpu.matmul %65, %67, %cst_72 {dimension_numbers = #tpu.dot_dimension_numbers<[1], [0], [0], [1], [0, 0, 1, 1], [], []>} : vector<96x6xf32>, vector<6x12xf32>, vector<96x12xf32> -> vector<96x12xf32>
    %69 = arith.addf %64, %68 : vector<96x12xf32>
    %c1_73 = arith.constant 1 : index
    %c0_74 = arith.constant 0 : index
    %70 = vector.load %arg16[%c1_73, %c0_74] : memref<160x6xf32, #tpu.memory_space<vmem>>, vector<96x6xf32>
    %c1_75 = arith.constant 1 : index
    %c0_76 = arith.constant 0 : index
    %c0_77 = arith.constant 0 : index
    %71 = vector.load %arg4[%c1_75, %c0_76, %c0_77] : memref<25x6x12xf32, #tpu.memory_space<vmem>>, vector<1x6x12xf32>
    %72 = vector.shape_cast %71 : vector<1x6x12xf32> to vector<6x12xf32>
    %cst_78 = arith.constant dense<0.000000e+00> : vector<96x12xf32>
    %73 = tpu.matmul %70, %72, %cst_78 {dimension_numbers = #tpu.dot_dimension_numbers<[1], [0], [0], [1], [0, 0, 1, 1], [], []>} : vector<96x6xf32>, vector<6x12xf32>, vector<96x12xf32> -> vector<96x12xf32>
    %74 = arith.addf %69, %73 : vector<96x12xf32>
    %c2 = arith.constant 2 : index
    %c0_79 = arith.constant 0 : index
    %75 = vector.load %arg16[%c2, %c0_79] : memref<160x6xf32, #tpu.memory_space<vmem>>, vector<96x6xf32>
    %c2_80 = arith.constant 2 : index
    %c0_81 = arith.constant 0 : index
    %c0_82 = arith.constant 0 : index
    %76 = vector.load %arg4[%c2_80, %c0_81, %c0_82] : memref<25x6x12xf32, #tpu.memory_space<vmem>>, vector<1x6x12xf32>
    %77 = vector.shape_cast %76 : vector<1x6x12xf32> to vector<6x12xf32>
    %cst_83 = arith.constant dense<0.000000e+00> : vector<96x12xf32>
    %78 = tpu.matmul %75, %77, %cst_83 {dimension_numbers = #tpu.dot_dimension_numbers<[1], [0], [0], [1], [0, 0, 1, 1], [], []>} : vector<96x6xf32>, vector<6x12xf32>, vector<96x12xf32> -> vector<96x12xf32>
    %79 = arith.addf %74, %78 : vector<96x12xf32>
    %c3 = arith.constant 3 : index
    %c0_84 = arith.constant 0 : index
    %80 = vector.load %arg16[%c3, %c0_84] : memref<160x6xf32, #tpu.memory_space<vmem>>, vector<96x6xf32>
    %c3_85 = arith.constant 3 : index
    %c0_86 = arith.constant 0 : index
    %c0_87 = arith.constant 0 : index
    %81 = vector.load %arg4[%c3_85, %c0_86, %c0_87] : memref<25x6x12xf32, #tpu.memory_space<vmem>>, vector<1x6x12xf32>
    %82 = vector.shape_cast %81 : vector<1x6x12xf32> to vector<6x12xf32>
    %cst_88 = arith.constant dense<0.000000e+00> : vector<96x12xf32>
    %83 = tpu.matmul %80, %82, %cst_88 {dimension_numbers = #tpu.dot_dimension_numbers<[1], [0], [0], [1], [0, 0, 1, 1], [], []>} : vector<96x6xf32>, vector<6x12xf32>, vector<96x12xf32> -> vector<96x12xf32>
    %84 = arith.addf %79, %83 : vector<96x12xf32>
    %c4 = arith.constant 4 : index
    %c0_89 = arith.constant 0 : index
    %85 = vector.load %arg16[%c4, %c0_89] : memref<160x6xf32, #tpu.memory_space<vmem>>, vector<96x6xf32>
    %c4_90 = arith.constant 4 : index
    %c0_91 = arith.constant 0 : index
    %c0_92 = arith.constant 0 : index
    %86 = vector.load %arg4[%c4_90, %c0_91, %c0_92] : memref<25x6x12xf32, #tpu.memory_space<vmem>>, vector<1x6x12xf32>
    %87 = vector.shape_cast %86 : vector<1x6x12xf32> to vector<6x12xf32>
    %cst_93 = arith.constant dense<0.000000e+00> : vector<96x12xf32>
    %88 = tpu.matmul %85, %87, %cst_93 {dimension_numbers = #tpu.dot_dimension_numbers<[1], [0], [0], [1], [0, 0, 1, 1], [], []>} : vector<96x6xf32>, vector<6x12xf32>, vector<96x12xf32> -> vector<96x12xf32>
    %89 = arith.addf %84, %88 : vector<96x12xf32>
    %c12_94 = arith.constant 12 : index
    %c0_95 = arith.constant 0 : index
    %90 = vector.load %arg16[%c12_94, %c0_95] : memref<160x6xf32, #tpu.memory_space<vmem>>, vector<96x6xf32>
    %c5 = arith.constant 5 : index
    %c0_96 = arith.constant 0 : index
    %c0_97 = arith.constant 0 : index
    %91 = vector.load %arg4[%c5, %c0_96, %c0_97] : memref<25x6x12xf32, #tpu.memory_space<vmem>>, vector<1x6x12xf32>
    %92 = vector.shape_cast %91 : vector<1x6x12xf32> to vector<6x12xf32>
    %cst_98 = arith.constant dense<0.000000e+00> : vector<96x12xf32>
    %93 = tpu.matmul %90, %92, %cst_98 {dimension_numbers = #tpu.dot_dimension_numbers<[1], [0], [0], [1], [0, 0, 1, 1], [], []>} : vector<96x6xf32>, vector<6x12xf32>, vector<96x12xf32> -> vector<96x12xf32>
    %94 = arith.addf %89, %93 : vector<96x12xf32>
    %c13 = arith.constant 13 : index
    %c0_99 = arith.constant 0 : index
    %95 = vector.load %arg16[%c13, %c0_99] : memref<160x6xf32, #tpu.memory_space<vmem>>, vector<96x6xf32>
    %c6 = arith.constant 6 : index
    %c0_100 = arith.constant 0 : index
    %c0_101 = arith.constant 0 : index
    %96 = vector.load %arg4[%c6, %c0_100, %c0_101] : memref<25x6x12xf32, #tpu.memory_space<vmem>>, vector<1x6x12xf32>
    %97 = vector.shape_cast %96 : vector<1x6x12xf32> to vector<6x12xf32>
    %cst_102 = arith.constant dense<0.000000e+00> : vector<96x12xf32>
    %98 = tpu.matmul %95, %97, %cst_102 {dimension_numbers = #tpu.dot_dimension_numbers<[1], [0], [0], [1], [0, 0, 1, 1], [], []>} : vector<96x6xf32>, vector<6x12xf32>, vector<96x12xf32> -> vector<96x12xf32>
    %99 = arith.addf %94, %98 : vector<96x12xf32>
    %c14 = arith.constant 14 : index
    %c0_103 = arith.constant 0 : index
    %100 = vector.load %arg16[%c14, %c0_103] : memref<160x6xf32, #tpu.memory_space<vmem>>, vector<96x6xf32>
    %c7 = arith.constant 7 : index
    %c0_104 = arith.constant 0 : index
    %c0_105 = arith.constant 0 : index
    %101 = vector.load %arg4[%c7, %c0_104, %c0_105] : memref<25x6x12xf32, #tpu.memory_space<vmem>>, vector<1x6x12xf32>
    %102 = vector.shape_cast %101 : vector<1x6x12xf32> to vector<6x12xf32>
    %cst_106 = arith.constant dense<0.000000e+00> : vector<96x12xf32>
    %103 = tpu.matmul %100, %102, %cst_106 {dimension_numbers = #tpu.dot_dimension_numbers<[1], [0], [0], [1], [0, 0, 1, 1], [], []>} : vector<96x6xf32>, vector<6x12xf32>, vector<96x12xf32> -> vector<96x12xf32>
    %104 = arith.addf %99, %103 : vector<96x12xf32>
    %c15 = arith.constant 15 : index
    %c0_107 = arith.constant 0 : index
    %105 = vector.load %arg16[%c15, %c0_107] : memref<160x6xf32, #tpu.memory_space<vmem>>, vector<96x6xf32>
    %c8 = arith.constant 8 : index
    %c0_108 = arith.constant 0 : index
    %c0_109 = arith.constant 0 : index
    %106 = vector.load %arg4[%c8, %c0_108, %c0_109] : memref<25x6x12xf32, #tpu.memory_space<vmem>>, vector<1x6x12xf32>
    %107 = vector.shape_cast %106 : vector<1x6x12xf32> to vector<6x12xf32>
    %cst_110 = arith.constant dense<0.000000e+00> : vector<96x12xf32>
    %108 = tpu.matmul %105, %107, %cst_110 {dimension_numbers = #tpu.dot_dimension_numbers<[1], [0], [0], [1], [0, 0, 1, 1], [], []>} : vector<96x6xf32>, vector<6x12xf32>, vector<96x12xf32> -> vector<96x12xf32>
    %109 = arith.addf %104, %108 : vector<96x12xf32>
    %c16 = arith.constant 16 : index
    %c0_111 = arith.constant 0 : index
    %110 = vector.load %arg16[%c16, %c0_111] : memref<160x6xf32, #tpu.memory_space<vmem>>, vector<96x6xf32>
    %c9 = arith.constant 9 : index
    %c0_112 = arith.constant 0 : index
    %c0_113 = arith.constant 0 : index
    %111 = vector.load %arg4[%c9, %c0_112, %c0_113] : memref<25x6x12xf32, #tpu.memory_space<vmem>>, vector<1x6x12xf32>
    %112 = vector.shape_cast %111 : vector<1x6x12xf32> to vector<6x12xf32>
    %cst_114 = arith.constant dense<0.000000e+00> : vector<96x12xf32>
    %113 = tpu.matmul %110, %112, %cst_114 {dimension_numbers = #tpu.dot_dimension_numbers<[1], [0], [0], [1], [0, 0, 1, 1], [], []>} : vector<96x6xf32>, vector<6x12xf32>, vector<96x12xf32> -> vector<96x12xf32>
    %114 = arith.addf %109, %113 : vector<96x12xf32>
    %c24_115 = arith.constant 24 : index
    %c0_116 = arith.constant 0 : index
    %115 = vector.load %arg16[%c24_115, %c0_116] : memref<160x6xf32, #tpu.memory_space<vmem>>, vector<96x6xf32>
    %c10 = arith.constant 10 : index
    %c0_117 = arith.constant 0 : index
    %c0_118 = arith.constant 0 : index
    %116 = vector.load %arg4[%c10, %c0_117, %c0_118] : memref<25x6x12xf32, #tpu.memory_space<vmem>>, vector<1x6x12xf32>
    %117 = vector.shape_cast %116 : vector<1x6x12xf32> to vector<6x12xf32>
    %cst_119 = arith.constant dense<0.000000e+00> : vector<96x12xf32>
    %118 = tpu.matmul %115, %117, %cst_119 {dimension_numbers = #tpu.dot_dimension_numbers<[1], [0], [0], [1], [0, 0, 1, 1], [], []>} : vector<96x6xf32>, vector<6x12xf32>, vector<96x12xf32> -> vector<96x12xf32>
    %119 = arith.addf %114, %118 : vector<96x12xf32>
    %c25 = arith.constant 25 : index
    %c0_120 = arith.constant 0 : index
    %120 = vector.load %arg16[%c25, %c0_120] : memref<160x6xf32, #tpu.memory_space<vmem>>, vector<96x6xf32>
    %c11 = arith.constant 11 : index
    %c0_121 = arith.constant 0 : index
    %c0_122 = arith.constant 0 : index
    %121 = vector.load %arg4[%c11, %c0_121, %c0_122] : memref<25x6x12xf32, #tpu.memory_space<vmem>>, vector<1x6x12xf32>
    %122 = vector.shape_cast %121 : vector<1x6x12xf32> to vector<6x12xf32>
    %cst_123 = arith.constant dense<0.000000e+00> : vector<96x12xf32>
    %123 = tpu.matmul %120, %122, %cst_123 {dimension_numbers = #tpu.dot_dimension_numbers<[1], [0], [0], [1], [0, 0, 1, 1], [], []>} : vector<96x6xf32>, vector<6x12xf32>, vector<96x12xf32> -> vector<96x12xf32>
    %124 = arith.addf %119, %123 : vector<96x12xf32>
    %c26 = arith.constant 26 : index
    %c0_124 = arith.constant 0 : index
    %125 = vector.load %arg16[%c26, %c0_124] : memref<160x6xf32, #tpu.memory_space<vmem>>, vector<96x6xf32>
    %c12_125 = arith.constant 12 : index
    %c0_126 = arith.constant 0 : index
    %c0_127 = arith.constant 0 : index
    %126 = vector.load %arg4[%c12_125, %c0_126, %c0_127] : memref<25x6x12xf32, #tpu.memory_space<vmem>>, vector<1x6x12xf32>
    %127 = vector.shape_cast %126 : vector<1x6x12xf32> to vector<6x12xf32>
    %cst_128 = arith.constant dense<0.000000e+00> : vector<96x12xf32>
    %128 = tpu.matmul %125, %127, %cst_128 {dimension_numbers = #tpu.dot_dimension_numbers<[1], [0], [0], [1], [0, 0, 1, 1], [], []>} : vector<96x6xf32>, vector<6x12xf32>, vector<96x12xf32> -> vector<96x12xf32>
    %129 = arith.addf %124, %128 : vector<96x12xf32>
    %c27 = arith.constant 27 : index
    %c0_129 = arith.constant 0 : index
    %130 = vector.load %arg16[%c27, %c0_129] : memref<160x6xf32, #tpu.memory_space<vmem>>, vector<96x6xf32>
    %c13_130 = arith.constant 13 : index
    %c0_131 = arith.constant 0 : index
    %c0_132 = arith.constant 0 : index
    %131 = vector.load %arg4[%c13_130, %c0_131, %c0_132] : memref<25x6x12xf32, #tpu.memory_space<vmem>>, vector<1x6x12xf32>
    %132 = vector.shape_cast %131 : vector<1x6x12xf32> to vector<6x12xf32>
    %cst_133 = arith.constant dense<0.000000e+00> : vector<96x12xf32>
    %133 = tpu.matmul %130, %132, %cst_133 {dimension_numbers = #tpu.dot_dimension_numbers<[1], [0], [0], [1], [0, 0, 1, 1], [], []>} : vector<96x6xf32>, vector<6x12xf32>, vector<96x12xf32> -> vector<96x12xf32>
    %134 = arith.addf %129, %133 : vector<96x12xf32>
    %c28 = arith.constant 28 : index
    %c0_134 = arith.constant 0 : index
    %135 = vector.load %arg16[%c28, %c0_134] : memref<160x6xf32, #tpu.memory_space<vmem>>, vector<96x6xf32>
    %c14_135 = arith.constant 14 : index
    %c0_136 = arith.constant 0 : index
    %c0_137 = arith.constant 0 : index
    %136 = vector.load %arg4[%c14_135, %c0_136, %c0_137] : memref<25x6x12xf32, #tpu.memory_space<vmem>>, vector<1x6x12xf32>
    %137 = vector.shape_cast %136 : vector<1x6x12xf32> to vector<6x12xf32>
    %cst_138 = arith.constant dense<0.000000e+00> : vector<96x12xf32>
    %138 = tpu.matmul %135, %137, %cst_138 {dimension_numbers = #tpu.dot_dimension_numbers<[1], [0], [0], [1], [0, 0, 1, 1], [], []>} : vector<96x6xf32>, vector<6x12xf32>, vector<96x12xf32> -> vector<96x12xf32>
    %139 = arith.addf %134, %138 : vector<96x12xf32>
    %c36_139 = arith.constant 36 : index
    %c0_140 = arith.constant 0 : index
    %140 = vector.load %arg16[%c36_139, %c0_140] : memref<160x6xf32, #tpu.memory_space<vmem>>, vector<96x6xf32>
    %c15_141 = arith.constant 15 : index
    %c0_142 = arith.constant 0 : index
    %c0_143 = arith.constant 0 : index
    %141 = vector.load %arg4[%c15_141, %c0_142, %c0_143] : memref<25x6x12xf32, #tpu.memory_space<vmem>>, vector<1x6x12xf32>
    %142 = vector.shape_cast %141 : vector<1x6x12xf32> to vector<6x12xf32>
    %cst_144 = arith.constant dense<0.000000e+00> : vector<96x12xf32>
    %143 = tpu.matmul %140, %142, %cst_144 {dimension_numbers = #tpu.dot_dimension_numbers<[1], [0], [0], [1], [0, 0, 1, 1], [], []>} : vector<96x6xf32>, vector<6x12xf32>, vector<96x12xf32> -> vector<96x12xf32>
    %144 = arith.addf %139, %143 : vector<96x12xf32>
    %c37 = arith.constant 37 : index
    %c0_145 = arith.constant 0 : index
    %145 = vector.load %arg16[%c37, %c0_145] : memref<160x6xf32, #tpu.memory_space<vmem>>, vector<96x6xf32>
    %c16_146 = arith.constant 16 : index
    %c0_147 = arith.constant 0 : index
    %c0_148 = arith.constant 0 : index
    %146 = vector.load %arg4[%c16_146, %c0_147, %c0_148] : memref<25x6x12xf32, #tpu.memory_space<vmem>>, vector<1x6x12xf32>
    %147 = vector.shape_cast %146 : vector<1x6x12xf32> to vector<6x12xf32>
    %cst_149 = arith.constant dense<0.000000e+00> : vector<96x12xf32>
    %148 = tpu.matmul %145, %147, %cst_149 {dimension_numbers = #tpu.dot_dimension_numbers<[1], [0], [0], [1], [0, 0, 1, 1], [], []>} : vector<96x6xf32>, vector<6x12xf32>, vector<96x12xf32> -> vector<96x12xf32>
    %149 = arith.addf %144, %148 : vector<96x12xf32>
    %c38 = arith.constant 38 : index
    %c0_150 = arith.constant 0 : index
    %150 = vector.load %arg16[%c38, %c0_150] : memref<160x6xf32, #tpu.memory_space<vmem>>, vector<96x6xf32>
    %c17 = arith.constant 17 : index
    %c0_151 = arith.constant 0 : index
    %c0_152 = arith.constant 0 : index
    %151 = vector.load %arg4[%c17, %c0_151, %c0_152] : memref<25x6x12xf32, #tpu.memory_space<vmem>>, vector<1x6x12xf32>
    %152 = vector.shape_cast %151 : vector<1x6x12xf32> to vector<6x12xf32>
    %cst_153 = arith.constant dense<0.000000e+00> : vector<96x12xf32>
    %153 = tpu.matmul %150, %152, %cst_153 {dimension_numbers = #tpu.dot_dimension_numbers<[1], [0], [0], [1], [0, 0, 1, 1], [], []>} : vector<96x6xf32>, vector<6x12xf32>, vector<96x12xf32> -> vector<96x12xf32>
    %154 = arith.addf %149, %153 : vector<96x12xf32>
    %c39 = arith.constant 39 : index
    %c0_154 = arith.constant 0 : index
    %155 = vector.load %arg16[%c39, %c0_154] : memref<160x6xf32, #tpu.memory_space<vmem>>, vector<96x6xf32>
    %c18 = arith.constant 18 : index
    %c0_155 = arith.constant 0 : index
    %c0_156 = arith.constant 0 : index
    %156 = vector.load %arg4[%c18, %c0_155, %c0_156] : memref<25x6x12xf32, #tpu.memory_space<vmem>>, vector<1x6x12xf32>
    %157 = vector.shape_cast %156 : vector<1x6x12xf32> to vector<6x12xf32>
    %cst_157 = arith.constant dense<0.000000e+00> : vector<96x12xf32>
    %158 = tpu.matmul %155, %157, %cst_157 {dimension_numbers = #tpu.dot_dimension_numbers<[1], [0], [0], [1], [0, 0, 1, 1], [], []>} : vector<96x6xf32>, vector<6x12xf32>, vector<96x12xf32> -> vector<96x12xf32>
    %159 = arith.addf %154, %158 : vector<96x12xf32>
    %c40 = arith.constant 40 : index
    %c0_158 = arith.constant 0 : index
    %160 = vector.load %arg16[%c40, %c0_158] : memref<160x6xf32, #tpu.memory_space<vmem>>, vector<96x6xf32>
    %c19 = arith.constant 19 : index
    %c0_159 = arith.constant 0 : index
    %c0_160 = arith.constant 0 : index
    %161 = vector.load %arg4[%c19, %c0_159, %c0_160] : memref<25x6x12xf32, #tpu.memory_space<vmem>>, vector<1x6x12xf32>
    %162 = vector.shape_cast %161 : vector<1x6x12xf32> to vector<6x12xf32>
    %cst_161 = arith.constant dense<0.000000e+00> : vector<96x12xf32>
    %163 = tpu.matmul %160, %162, %cst_161 {dimension_numbers = #tpu.dot_dimension_numbers<[1], [0], [0], [1], [0, 0, 1, 1], [], []>} : vector<96x6xf32>, vector<6x12xf32>, vector<96x12xf32> -> vector<96x12xf32>
    %164 = arith.addf %159, %163 : vector<96x12xf32>
    %c48_162 = arith.constant 48 : index
    %c0_163 = arith.constant 0 : index
    %165 = vector.load %arg16[%c48_162, %c0_163] : memref<160x6xf32, #tpu.memory_space<vmem>>, vector<96x6xf32>
    %c20 = arith.constant 20 : index
    %c0_164 = arith.constant 0 : index
    %c0_165 = arith.constant 0 : index
    %166 = vector.load %arg4[%c20, %c0_164, %c0_165] : memref<25x6x12xf32, #tpu.memory_space<vmem>>, vector<1x6x12xf32>
    %167 = vector.shape_cast %166 : vector<1x6x12xf32> to vector<6x12xf32>
    %cst_166 = arith.constant dense<0.000000e+00> : vector<96x12xf32>
    %168 = tpu.matmul %165, %167, %cst_166 {dimension_numbers = #tpu.dot_dimension_numbers<[1], [0], [0], [1], [0, 0, 1, 1], [], []>} : vector<96x6xf32>, vector<6x12xf32>, vector<96x12xf32> -> vector<96x12xf32>
    %169 = arith.addf %164, %168 : vector<96x12xf32>
    %c49 = arith.constant 49 : index
    %c0_167 = arith.constant 0 : index
    %170 = vector.load %arg16[%c49, %c0_167] : memref<160x6xf32, #tpu.memory_space<vmem>>, vector<96x6xf32>
    %c21 = arith.constant 21 : index
    %c0_168 = arith.constant 0 : index
    %c0_169 = arith.constant 0 : index
    %171 = vector.load %arg4[%c21, %c0_168, %c0_169] : memref<25x6x12xf32, #tpu.memory_space<vmem>>, vector<1x6x12xf32>
    %172 = vector.shape_cast %171 : vector<1x6x12xf32> to vector<6x12xf32>
    %cst_170 = arith.constant dense<0.000000e+00> : vector<96x12xf32>
    %173 = tpu.matmul %170, %172, %cst_170 {dimension_numbers = #tpu.dot_dimension_numbers<[1], [0], [0], [1], [0, 0, 1, 1], [], []>} : vector<96x6xf32>, vector<6x12xf32>, vector<96x12xf32> -> vector<96x12xf32>
    %174 = arith.addf %169, %173 : vector<96x12xf32>
    %c50 = arith.constant 50 : index
    %c0_171 = arith.constant 0 : index
    %175 = vector.load %arg16[%c50, %c0_171] : memref<160x6xf32, #tpu.memory_space<vmem>>, vector<96x6xf32>
    %c22 = arith.constant 22 : index
    %c0_172 = arith.constant 0 : index
    %c0_173 = arith.constant 0 : index
    %176 = vector.load %arg4[%c22, %c0_172, %c0_173] : memref<25x6x12xf32, #tpu.memory_space<vmem>>, vector<1x6x12xf32>
    %177 = vector.shape_cast %176 : vector<1x6x12xf32> to vector<6x12xf32>
    %cst_174 = arith.constant dense<0.000000e+00> : vector<96x12xf32>
    %178 = tpu.matmul %175, %177, %cst_174 {dimension_numbers = #tpu.dot_dimension_numbers<[1], [0], [0], [1], [0, 0, 1, 1], [], []>} : vector<96x6xf32>, vector<6x12xf32>, vector<96x12xf32> -> vector<96x12xf32>
    %179 = arith.addf %174, %178 : vector<96x12xf32>
    %c51 = arith.constant 51 : index
    %c0_175 = arith.constant 0 : index
    %180 = vector.load %arg16[%c51, %c0_175] : memref<160x6xf32, #tpu.memory_space<vmem>>, vector<96x6xf32>
    %c23 = arith.constant 23 : index
    %c0_176 = arith.constant 0 : index
    %c0_177 = arith.constant 0 : index
    %181 = vector.load %arg4[%c23, %c0_176, %c0_177] : memref<25x6x12xf32, #tpu.memory_space<vmem>>, vector<1x6x12xf32>
    %182 = vector.shape_cast %181 : vector<1x6x12xf32> to vector<6x12xf32>
    %cst_178 = arith.constant dense<0.000000e+00> : vector<96x12xf32>
    %183 = tpu.matmul %180, %182, %cst_178 {dimension_numbers = #tpu.dot_dimension_numbers<[1], [0], [0], [1], [0, 0, 1, 1], [], []>} : vector<96x6xf32>, vector<6x12xf32>, vector<96x12xf32> -> vector<96x12xf32>
    %184 = arith.addf %179, %183 : vector<96x12xf32>
    %c52 = arith.constant 52 : index
    %c0_179 = arith.constant 0 : index
    %185 = vector.load %arg16[%c52, %c0_179] : memref<160x6xf32, #tpu.memory_space<vmem>>, vector<96x6xf32>
    %c24_180 = arith.constant 24 : index
    %c0_181 = arith.constant 0 : index
    %c0_182 = arith.constant 0 : index
    %186 = vector.load %arg4[%c24_180, %c0_181, %c0_182] : memref<25x6x12xf32, #tpu.memory_space<vmem>>, vector<1x6x12xf32>
    %187 = vector.shape_cast %186 : vector<1x6x12xf32> to vector<6x12xf32>
    %cst_183 = arith.constant dense<0.000000e+00> : vector<96x12xf32>
    %188 = tpu.matmul %185, %187, %cst_183 {dimension_numbers = #tpu.dot_dimension_numbers<[1], [0], [0], [1], [0, 0, 1, 1], [], []>} : vector<96x6xf32>, vector<6x12xf32>, vector<96x12xf32> -> vector<96x12xf32>
    %189 = arith.addf %184, %188 : vector<96x12xf32>
    %c0_184 = arith.constant 0 : index
    %c0_185 = arith.constant 0 : index
    %190 = vector.load %arg6[%c0_184, %c0_185] : memref<64x96xf32, #tpu.memory_space<vmem>>, vector<64x96xf32>
    %cst_186 = arith.constant dense<0.000000e+00> : vector<64x12xf32>
    %191 = tpu.matmul %190, %189, %cst_186 {dimension_numbers = #tpu.dot_dimension_numbers<[1], [0], [0], [1], [0, 0, 1, 1], [], []>} : vector<64x96xf32>, vector<96x12xf32>, vector<64x12xf32> -> vector<64x12xf32>
    %c0_187 = arith.constant 0 : index
    %c0_188 = arith.constant 0 : index
    %192 = vector.load %arg5[%c0_187, %c0_188] : memref<1x12xf32, #tpu.memory_space<vmem>>, vector<1x12xf32>
    %193 = vector.broadcast %192 : vector<1x12xf32> to vector<64x12xf32>
    %194 = arith.addf %191, %193 : vector<64x12xf32>
    %cst_189 = arith.constant 0.000000e+00 : f32
    %195 = vector.broadcast %cst_189 : f32 to vector<64x12xf32>
    %196 = arith.maximumf %194, %195 : vector<64x12xf32>
    %c0_190 = arith.constant 0 : index
    %c0_191 = arith.constant 0 : index
    %197 = vector.load %arg17[%c0_190, %c0_191] : memref<64x12xf32, #tpu.memory_space<vmem>>, vector<64x12xf32>
    tpu.vector_store %arg17[%c0_190, %c0_191], %196 {strides = array<i32>} : memref<64x12xf32, #tpu.memory_space<vmem>>, vector<64x12xf32>,
    %c0_192 = arith.constant 0 : index
    %c0_193 = arith.constant 0 : index
    %198 = tpu.strided_load %arg17[%c0_192, %c0_193] {strides = array<i32: 2, 1>} : memref<64x12xf32, #tpu.memory_space<vmem>>, vector<32x12xf32>
    %c1_194 = arith.constant 1 : index
    %c0_195 = arith.constant 0 : index
    %199 = tpu.strided_load %arg17[%c1_194, %c0_195] {strides = array<i32: 2, 1>} : memref<64x12xf32, #tpu.memory_space<vmem>>, vector<32x12xf32>
    %200 = arith.maximumf %198, %199 : vector<32x12xf32>
    %c0_196 = arith.constant 0 : index
    %c0_197 = arith.constant 0 : index
    %201 = vector.load %arg18[%c0_196, %c0_197] : memref<32x12xf32, #tpu.memory_space<vmem>>, vector<32x12xf32>
    tpu.vector_store %arg18[%c0_196, %c0_197], %200 {strides = array<i32>} : memref<32x12xf32, #tpu.memory_space<vmem>>, vector<32x12xf32>,
    %c0_198 = arith.constant 0 : index
    %c0_199 = arith.constant 0 : index
    %202 = vector.load %arg18[%c0_198, %c0_199] : memref<32x12xf32, #tpu.memory_space<vmem>>, vector<4x12xf32>
    %c4_200 = arith.constant 4 : index
    %c0_201 = arith.constant 0 : index
    %203 = vector.load %arg18[%c4_200, %c0_201] : memref<32x12xf32, #tpu.memory_space<vmem>>, vector<4x12xf32>
    %204 = arith.maximumf %202, %203 : vector<4x12xf32>
    %205 = vector.extract_strided_slice %204 {offsets = [0, 0], sizes = [1, 12], strides = [1, 1]} : vector<4x12xf32> to vector<1x12xf32>
    %c0_202 = arith.constant 0 : index
    %c0_203 = arith.constant 0 : index
    %c0_204 = arith.constant 0 : index
    %206 = vector.load %arg7[%c0_202, %c0_203, %c0_204] : memref<16x12x84xf32, #tpu.memory_space<vmem>>, vector<1x12x84xf32>
    %207 = vector.shape_cast %206 : vector<1x12x84xf32> to vector<12x84xf32>
    %cst_205 = arith.constant dense<0.000000e+00> : vector<1x84xf32>
    %208 = tpu.matmul %205, %207, %cst_205 {dimension_numbers = #tpu.dot_dimension_numbers<[1], [0], [0], [1], [0, 0, 1, 1], [], []>} : vector<1x12xf32>, vector<12x84xf32>, vector<1x84xf32> -> vector<1x84xf32>
    %209 = vector.extract_strided_slice %204 {offsets = [1, 0], sizes = [1, 12], strides = [1, 1]} : vector<4x12xf32> to vector<1x12xf32>
    %c1_206 = arith.constant 1 : index
    %c0_207 = arith.constant 0 : index
    %c0_208 = arith.constant 0 : index
    %210 = vector.load %arg7[%c1_206, %c0_207, %c0_208] : memref<16x12x84xf32, #tpu.memory_space<vmem>>, vector<1x12x84xf32>
    %211 = vector.shape_cast %210 : vector<1x12x84xf32> to vector<12x84xf32>
    %cst_209 = arith.constant dense<0.000000e+00> : vector<1x84xf32>
    %212 = tpu.matmul %209, %211, %cst_209 {dimension_numbers = #tpu.dot_dimension_numbers<[1], [0], [0], [1], [0, 0, 1, 1], [], []>} : vector<1x12xf32>, vector<12x84xf32>, vector<1x84xf32> -> vector<1x84xf32>
    %213 = vector.extract_strided_slice %204 {offsets = [2, 0], sizes = [1, 12], strides = [1, 1]} : vector<4x12xf32> to vector<1x12xf32>
    %c2_210 = arith.constant 2 : index
    %c0_211 = arith.constant 0 : index
    %c0_212 = arith.constant 0 : index
    %214 = vector.load %arg7[%c2_210, %c0_211, %c0_212] : memref<16x12x84xf32, #tpu.memory_space<vmem>>, vector<1x12x84xf32>
    %215 = vector.shape_cast %214 : vector<1x12x84xf32> to vector<12x84xf32>
    %cst_213 = arith.constant dense<0.000000e+00> : vector<1x84xf32>
    %216 = tpu.matmul %213, %215, %cst_213 {dimension_numbers = #tpu.dot_dimension_numbers<[1], [0], [0], [1], [0, 0, 1, 1], [], []>} : vector<1x12xf32>, vector<12x84xf32>, vector<1x84xf32> -> vector<1x84xf32>
    %217 = vector.extract_strided_slice %204 {offsets = [3, 0], sizes = [1, 12], strides = [1, 1]} : vector<4x12xf32> to vector<1x12xf32>
    %c3_214 = arith.constant 3 : index
    %c0_215 = arith.constant 0 : index
    %c0_216 = arith.constant 0 : index
    %218 = vector.load %arg7[%c3_214, %c0_215, %c0_216] : memref<16x12x84xf32, #tpu.memory_space<vmem>>, vector<1x12x84xf32>
    %219 = vector.shape_cast %218 : vector<1x12x84xf32> to vector<12x84xf32>
    %cst_217 = arith.constant dense<0.000000e+00> : vector<1x84xf32>
    %220 = tpu.matmul %217, %219, %cst_217 {dimension_numbers = #tpu.dot_dimension_numbers<[1], [0], [0], [1], [0, 0, 1, 1], [], []>} : vector<1x12xf32>, vector<12x84xf32>, vector<1x84xf32> -> vector<1x84xf32>
    %c8_218 = arith.constant 8 : index
    %c0_219 = arith.constant 0 : index
    %221 = vector.load %arg18[%c8_218, %c0_219] : memref<32x12xf32, #tpu.memory_space<vmem>>, vector<4x12xf32>
    %c12_220 = arith.constant 12 : index
    %c0_221 = arith.constant 0 : index
    %222 = vector.load %arg18[%c12_220, %c0_221] : memref<32x12xf32, #tpu.memory_space<vmem>>, vector<4x12xf32>
    %223 = arith.maximumf %221, %222 : vector<4x12xf32>
    %224 = vector.extract_strided_slice %223 {offsets = [0, 0], sizes = [1, 12], strides = [1, 1]} : vector<4x12xf32> to vector<1x12xf32>
    %c4_222 = arith.constant 4 : index
    %c0_223 = arith.constant 0 : index
    %c0_224 = arith.constant 0 : index
    %225 = vector.load %arg7[%c4_222, %c0_223, %c0_224] : memref<16x12x84xf32, #tpu.memory_space<vmem>>, vector<1x12x84xf32>
    %226 = vector.shape_cast %225 : vector<1x12x84xf32> to vector<12x84xf32>
    %cst_225 = arith.constant dense<0.000000e+00> : vector<1x84xf32>
    %227 = tpu.matmul %224, %226, %cst_225 {dimension_numbers = #tpu.dot_dimension_numbers<[1], [0], [0], [1], [0, 0, 1, 1], [], []>} : vector<1x12xf32>, vector<12x84xf32>, vector<1x84xf32> -> vector<1x84xf32>
    %228 = vector.extract_strided_slice %223 {offsets = [1, 0], sizes = [1, 12], strides = [1, 1]} : vector<4x12xf32> to vector<1x12xf32>
    %c5_226 = arith.constant 5 : index
    %c0_227 = arith.constant 0 : index
    %c0_228 = arith.constant 0 : index
    %229 = vector.load %arg7[%c5_226, %c0_227, %c0_228] : memref<16x12x84xf32, #tpu.memory_space<vmem>>, vector<1x12x84xf32>
    %230 = vector.shape_cast %229 : vector<1x12x84xf32> to vector<12x84xf32>
    %cst_229 = arith.constant dense<0.000000e+00> : vector<1x84xf32>
    %231 = tpu.matmul %228, %230, %cst_229 {dimension_numbers = #tpu.dot_dimension_numbers<[1], [0], [0], [1], [0, 0, 1, 1], [], []>} : vector<1x12xf32>, vector<12x84xf32>, vector<1x84xf32> -> vector<1x84xf32>
    %232 = vector.extract_strided_slice %223 {offsets = [2, 0], sizes = [1, 12], strides = [1, 1]} : vector<4x12xf32> to vector<1x12xf32>
    %c6_230 = arith.constant 6 : index
    %c0_231 = arith.constant 0 : index
    %c0_232 = arith.constant 0 : index
    %233 = vector.load %arg7[%c6_230, %c0_231, %c0_232] : memref<16x12x84xf32, #tpu.memory_space<vmem>>, vector<1x12x84xf32>
    %234 = vector.shape_cast %233 : vector<1x12x84xf32> to vector<12x84xf32>
    %cst_233 = arith.constant dense<0.000000e+00> : vector<1x84xf32>
    %235 = tpu.matmul %232, %234, %cst_233 {dimension_numbers = #tpu.dot_dimension_numbers<[1], [0], [0], [1], [0, 0, 1, 1], [], []>} : vector<1x12xf32>, vector<12x84xf32>, vector<1x84xf32> -> vector<1x84xf32>
    %236 = vector.extract_strided_slice %223 {offsets = [3, 0], sizes = [1, 12], strides = [1, 1]} : vector<4x12xf32> to vector<1x12xf32>
    %c7_234 = arith.constant 7 : index
    %c0_235 = arith.constant 0 : index
    %c0_236 = arith.constant 0 : index
    %237 = vector.load %arg7[%c7_234, %c0_235, %c0_236] : memref<16x12x84xf32, #tpu.memory_space<vmem>>, vector<1x12x84xf32>
    %238 = vector.shape_cast %237 : vector<1x12x84xf32> to vector<12x84xf32>
    %cst_237 = arith.constant dense<0.000000e+00> : vector<1x84xf32>
    %239 = tpu.matmul %236, %238, %cst_237 {dimension_numbers = #tpu.dot_dimension_numbers<[1], [0], [0], [1], [0, 0, 1, 1], [], []>} : vector<1x12xf32>, vector<12x84xf32>, vector<1x84xf32> -> vector<1x84xf32>
    %c16_238 = arith.constant 16 : index
    %c0_239 = arith.constant 0 : index
    %240 = vector.load %arg18[%c16_238, %c0_239] : memref<32x12xf32, #tpu.memory_space<vmem>>, vector<4x12xf32>
    %c20_240 = arith.constant 20 : index
    %c0_241 = arith.constant 0 : index
    %241 = vector.load %arg18[%c20_240, %c0_241] : memref<32x12xf32, #tpu.memory_space<vmem>>, vector<4x12xf32>
    %242 = arith.maximumf %240, %241 : vector<4x12xf32>
    %243 = vector.extract_strided_slice %242 {offsets = [0, 0], sizes = [1, 12], strides = [1, 1]} : vector<4x12xf32> to vector<1x12xf32>
    %c8_242 = arith.constant 8 : index
    %c0_243 = arith.constant 0 : index
    %c0_244 = arith.constant 0 : index
    %244 = vector.load %arg7[%c8_242, %c0_243, %c0_244] : memref<16x12x84xf32, #tpu.memory_space<vmem>>, vector<1x12x84xf32>
    %245 = vector.shape_cast %244 : vector<1x12x84xf32> to vector<12x84xf32>
    %cst_245 = arith.constant dense<0.000000e+00> : vector<1x84xf32>
    %246 = tpu.matmul %243, %245, %cst_245 {dimension_numbers = #tpu.dot_dimension_numbers<[1], [0], [0], [1], [0, 0, 1, 1], [], []>} : vector<1x12xf32>, vector<12x84xf32>, vector<1x84xf32> -> vector<1x84xf32>
    %247 = vector.extract_strided_slice %242 {offsets = [1, 0], sizes = [1, 12], strides = [1, 1]} : vector<4x12xf32> to vector<1x12xf32>
    %c9_246 = arith.constant 9 : index
    %c0_247 = arith.constant 0 : index
    %c0_248 = arith.constant 0 : index
    %248 = vector.load %arg7[%c9_246, %c0_247, %c0_248] : memref<16x12x84xf32, #tpu.memory_space<vmem>>, vector<1x12x84xf32>
    %249 = vector.shape_cast %248 : vector<1x12x84xf32> to vector<12x84xf32>
    %cst_249 = arith.constant dense<0.000000e+00> : vector<1x84xf32>
    %250 = tpu.matmul %247, %249, %cst_249 {dimension_numbers = #tpu.dot_dimension_numbers<[1], [0], [0], [1], [0, 0, 1, 1], [], []>} : vector<1x12xf32>, vector<12x84xf32>, vector<1x84xf32> -> vector<1x84xf32>
    %251 = vector.extract_strided_slice %242 {offsets = [2, 0], sizes = [1, 12], strides = [1, 1]} : vector<4x12xf32> to vector<1x12xf32>
    %c10_250 = arith.constant 10 : index
    %c0_251 = arith.constant 0 : index
    %c0_252 = arith.constant 0 : index
    %252 = vector.load %arg7[%c10_250, %c0_251, %c0_252] : memref<16x12x84xf32, #tpu.memory_space<vmem>>, vector<1x12x84xf32>
    %253 = vector.shape_cast %252 : vector<1x12x84xf32> to vector<12x84xf32>
    %cst_253 = arith.constant dense<0.000000e+00> : vector<1x84xf32>
    %254 = tpu.matmul %251, %253, %cst_253 {dimension_numbers = #tpu.dot_dimension_numbers<[1], [0], [0], [1], [0, 0, 1, 1], [], []>} : vector<1x12xf32>, vector<12x84xf32>, vector<1x84xf32> -> vector<1x84xf32>
    %255 = vector.extract_strided_slice %242 {offsets = [3, 0], sizes = [1, 12], strides = [1, 1]} : vector<4x12xf32> to vector<1x12xf32>
    %c11_254 = arith.constant 11 : index
    %c0_255 = arith.constant 0 : index
    %c0_256 = arith.constant 0 : index
    %256 = vector.load %arg7[%c11_254, %c0_255, %c0_256] : memref<16x12x84xf32, #tpu.memory_space<vmem>>, vector<1x12x84xf32>
    %257 = vector.shape_cast %256 : vector<1x12x84xf32> to vector<12x84xf32>
    %cst_257 = arith.constant dense<0.000000e+00> : vector<1x84xf32>
    %258 = tpu.matmul %255, %257, %cst_257 {dimension_numbers = #tpu.dot_dimension_numbers<[1], [0], [0], [1], [0, 0, 1, 1], [], []>} : vector<1x12xf32>, vector<12x84xf32>, vector<1x84xf32> -> vector<1x84xf32>
    %c24_258 = arith.constant 24 : index
    %c0_259 = arith.constant 0 : index
    %259 = vector.load %arg18[%c24_258, %c0_259] : memref<32x12xf32, #tpu.memory_space<vmem>>, vector<4x12xf32>
    %c28_260 = arith.constant 28 : index
    %c0_261 = arith.constant 0 : index
    %260 = vector.load %arg18[%c28_260, %c0_261] : memref<32x12xf32, #tpu.memory_space<vmem>>, vector<4x12xf32>
    %261 = arith.maximumf %259, %260 : vector<4x12xf32>
    %262 = vector.extract_strided_slice %261 {offsets = [0, 0], sizes = [1, 12], strides = [1, 1]} : vector<4x12xf32> to vector<1x12xf32>
    %c12_262 = arith.constant 12 : index
    %c0_263 = arith.constant 0 : index
    %c0_264 = arith.constant 0 : index
    %263 = vector.load %arg7[%c12_262, %c0_263, %c0_264] : memref<16x12x84xf32, #tpu.memory_space<vmem>>, vector<1x12x84xf32>
    %264 = vector.shape_cast %263 : vector<1x12x84xf32> to vector<12x84xf32>
    %cst_265 = arith.constant dense<0.000000e+00> : vector<1x84xf32>
    %265 = tpu.matmul %262, %264, %cst_265 {dimension_numbers = #tpu.dot_dimension_numbers<[1], [0], [0], [1], [0, 0, 1, 1], [], []>} : vector<1x12xf32>, vector<12x84xf32>, vector<1x84xf32> -> vector<1x84xf32>
    %266 = vector.extract_strided_slice %261 {offsets = [1, 0], sizes = [1, 12], strides = [1, 1]} : vector<4x12xf32> to vector<1x12xf32>
    %c13_266 = arith.constant 13 : index
    %c0_267 = arith.constant 0 : index
    %c0_268 = arith.constant 0 : index
    %267 = vector.load %arg7[%c13_266, %c0_267, %c0_268] : memref<16x12x84xf32, #tpu.memory_space<vmem>>, vector<1x12x84xf32>
    %268 = vector.shape_cast %267 : vector<1x12x84xf32> to vector<12x84xf32>
    %cst_269 = arith.constant dense<0.000000e+00> : vector<1x84xf32>
    %269 = tpu.matmul %266, %268, %cst_269 {dimension_numbers = #tpu.dot_dimension_numbers<[1], [0], [0], [1], [0, 0, 1, 1], [], []>} : vector<1x12xf32>, vector<12x84xf32>, vector<1x84xf32> -> vector<1x84xf32>
    %270 = vector.extract_strided_slice %261 {offsets = [2, 0], sizes = [1, 12], strides = [1, 1]} : vector<4x12xf32> to vector<1x12xf32>
    %c14_270 = arith.constant 14 : index
    %c0_271 = arith.constant 0 : index
    %c0_272 = arith.constant 0 : index
    %271 = vector.load %arg7[%c14_270, %c0_271, %c0_272] : memref<16x12x84xf32, #tpu.memory_space<vmem>>, vector<1x12x84xf32>
    %272 = vector.shape_cast %271 : vector<1x12x84xf32> to vector<12x84xf32>
    %cst_273 = arith.constant dense<0.000000e+00> : vector<1x84xf32>
    %273 = tpu.matmul %270, %272, %cst_273 {dimension_numbers = #tpu.dot_dimension_numbers<[1], [0], [0], [1], [0, 0, 1, 1], [], []>} : vector<1x12xf32>, vector<12x84xf32>, vector<1x84xf32> -> vector<1x84xf32>
    %274 = vector.extract_strided_slice %261 {offsets = [3, 0], sizes = [1, 12], strides = [1, 1]} : vector<4x12xf32> to vector<1x12xf32>
    %c15_274 = arith.constant 15 : index
    %c0_275 = arith.constant 0 : index
    %c0_276 = arith.constant 0 : index
    %275 = vector.load %arg7[%c15_274, %c0_275, %c0_276] : memref<16x12x84xf32, #tpu.memory_space<vmem>>, vector<1x12x84xf32>
    %276 = vector.shape_cast %275 : vector<1x12x84xf32> to vector<12x84xf32>
    %cst_277 = arith.constant dense<0.000000e+00> : vector<1x84xf32>
    %277 = tpu.matmul %274, %276, %cst_277 {dimension_numbers = #tpu.dot_dimension_numbers<[1], [0], [0], [1], [0, 0, 1, 1], [], []>} : vector<1x12xf32>, vector<12x84xf32>, vector<1x84xf32> -> vector<1x84xf32>
    %278 = arith.addf %208, %212 : vector<1x84xf32>
    %279 = arith.addf %216, %220 : vector<1x84xf32>
    %280 = arith.addf %227, %231 : vector<1x84xf32>
    %281 = arith.addf %235, %239 : vector<1x84xf32>
    %282 = arith.addf %246, %250 : vector<1x84xf32>
    %283 = arith.addf %254, %258 : vector<1x84xf32>
    %284 = arith.addf %265, %269 : vector<1x84xf32>
    %285 = arith.addf %273, %277 : vector<1x84xf32>
    %286 = arith.addf %278, %279 : vector<1x84xf32>
    %287 = arith.addf %280, %281 : vector<1x84xf32>
    %288 = arith.addf %282, %283 : vector<1x84xf32>
    %289 = arith.addf %284, %285 : vector<1x84xf32>
    %290 = arith.addf %286, %287 : vector<1x84xf32>
    %291 = arith.addf %288, %289 : vector<1x84xf32>
    %292 = arith.addf %290, %291 : vector<1x84xf32>
    %c0_278 = arith.constant 0 : index
    %c0_279 = arith.constant 0 : index
    %293 = vector.load %arg8[%c0_278, %c0_279] : memref<1x84xf32, #tpu.memory_space<vmem>>, vector<1x84xf32>
    %294 = arith.addf %292, %293 : vector<1x84xf32>
    %cst_280 = arith.constant 0.000000e+00 : f32
    %295 = vector.broadcast %cst_280 : f32 to vector<1x84xf32>
    %296 = arith.maximumf %294, %295 : vector<1x84xf32>
    %c0_281 = arith.constant 0 : index
    %c0_282 = arith.constant 0 : index
    %297 = vector.load %arg9[%c0_281, %c0_282] : memref<84x42xf32, #tpu.memory_space<vmem>>, vector<84x42xf32>
    %cst_283 = arith.constant dense<0.000000e+00> : vector<1x42xf32>
    %298 = tpu.matmul %296, %297, %cst_283 {dimension_numbers = #tpu.dot_dimension_numbers<[1], [0], [0], [1], [0, 0, 1, 1], [], []>} : vector<1x84xf32>, vector<84x42xf32>, vector<1x42xf32> -> vector<1x42xf32>
    %c0_284 = arith.constant 0 : index
    %c0_285 = arith.constant 0 : index
    %299 = vector.load %arg10[%c0_284, %c0_285] : memref<1x42xf32, #tpu.memory_space<vmem>>, vector<1x42xf32>
    %300 = arith.addf %298, %299 : vector<1x42xf32>
    %cst_286 = arith.constant 0.000000e+00 : f32
    %301 = vector.broadcast %cst_286 : f32 to vector<1x42xf32>
    %302 = arith.maximumf %300, %301 : vector<1x42xf32>
    %c0_287 = arith.constant 0 : index
    %c0_288 = arith.constant 0 : index
    %303 = vector.load %arg11[%c0_287, %c0_288] : memref<42x128xf32, #tpu.memory_space<vmem>>, vector<42x128xf32>
    %cst_289 = arith.constant dense<0.000000e+00> : vector<1x128xf32>
    %304 = tpu.matmul %302, %303, %cst_289 {dimension_numbers = #tpu.dot_dimension_numbers<[1], [0], [0], [1], [0, 0, 1, 1], [], []>} : vector<1x42xf32>, vector<42x128xf32>, vector<1x128xf32> -> vector<1x128xf32>
    %c0_290 = arith.constant 0 : index
    %c0_291 = arith.constant 0 : index
    %305 = vector.load %arg12[%c0_290, %c0_291] : memref<1x128xf32, #tpu.memory_space<vmem>>, vector<1x128xf32>
    %306 = arith.addf %304, %305 : vector<1x128xf32>
    %307 = arith.negf %306 : vector<1x128xf32>
    %308 = math.exp %307 : vector<1x128xf32>
    %cst_292 = arith.constant 1.000000e+00 : f32
    %309 = vector.broadcast %cst_292 : f32 to vector<1x128xf32>
    %310 = arith.addf %309, %308 : vector<1x128xf32>
    %311 = arith.divf %309, %310 : vector<1x128xf32>
    %c0_293 = arith.constant 0 : index
    %c0_294 = arith.constant 0 : index
    %c0_295 = arith.constant 0 : index
    %312 = vector.load %arg13[%c0_293, %c0_294, %c0_295] : memref<1x1x128xf32, #tpu.memory_space<vmem>>, vector<1x1x128xf32>
    %313 = vector.shape_cast %312 : vector<1x1x128xf32> to vector<1x128xf32>
    %314 = vector.shape_cast %311 : vector<1x128xf32> to vector<1x1x128xf32>
    tpu.vector_store %arg13[%c0_293, %c0_294, %c0_295], %314 {strides = array<i32>} : memref<1x1x128xf32, #tpu.memory_space<vmem>>, vector<1x1x128xf32>,
    return
  }
  func.func @transform_0(%arg0: i32) -> (i32, i32, i32) {
    %c0_i32 = arith.constant 0 : i32
    %c0_i32_0 = arith.constant 0 : i32
    %c0_i32_1 = arith.constant 0 : i32
    return %arg0, %c0_i32, %c0_i32_0 : i32, i32, i32
  }
  func.func @transform_1(%arg0: i32) -> (i32, i32) {
    %c0_i32 = arith.constant 0 : i32
    %c0_i32_0 = arith.constant 0 : i32
    %c0_i32_1 = arith.constant 0 : i32
    return %c0_i32, %c0_i32_0 : i32, i32
  }
  func.func @transform_2(%arg0: i32) -> (i32, i32) {
    %c0_i32 = arith.constant 0 : i32
    %c0_i32_0 = arith.constant 0 : i32
    %c0_i32_1 = arith.constant 0 : i32
    return %c0_i32, %c0_i32_0 : i32, i32
  }
  func.func @transform_3(%arg0: i32) -> (i32, i32, i32) {
    %c0_i32 = arith.constant 0 : i32
    %c0_i32_0 = arith.constant 0 : i32
    %c0_i32_1 = arith.constant 0 : i32
    %c0_i32_2 = arith.constant 0 : i32
    return %c0_i32, %c0_i32_0, %c0_i32_1 : i32, i32, i32
  }
  func.func @transform_4(%arg0: i32) -> (i32, i32) {
    %c0_i32 = arith.constant 0 : i32
    %c0_i32_0 = arith.constant 0 : i32
    %c0_i32_1 = arith.constant 0 : i32
    return %c0_i32, %c0_i32_0 : i32, i32
  }
  func.func @transform_5(%arg0: i32) -> (i32, i32) {
    %c0_i32 = arith.constant 0 : i32
    %c0_i32_0 = arith.constant 0 : i32
    %c0_i32_1 = arith.constant 0 : i32
    return %c0_i32, %c0_i32_0 : i32, i32
  }
  func.func @transform_6(%arg0: i32) -> (i32, i32, i32) {
    %c0_i32 = arith.constant 0 : i32
    %c0_i32_0 = arith.constant 0 : i32
    %c0_i32_1 = arith.constant 0 : i32
    %c0_i32_2 = arith.constant 0 : i32
    return %c0_i32, %c0_i32_0, %c0_i32_1 : i32, i32, i32
  }
  func.func @transform_7(%arg0: i32) -> (i32, i32) {
    %c0_i32 = arith.constant 0 : i32
    %c0_i32_0 = arith.constant 0 : i32
    %c0_i32_1 = arith.constant 0 : i32
    return %c0_i32, %c0_i32_0 : i32, i32
  }
  func.func @transform_8(%arg0: i32) -> (i32, i32) {
    %c0_i32 = arith.constant 0 : i32
    %c0_i32_0 = arith.constant 0 : i32
    %c0_i32_1 = arith.constant 0 : i32
    return %c0_i32, %c0_i32_0 : i32, i32
  }
  func.func @transform_9(%arg0: i32) -> (i32, i32) {
    %c0_i32 = arith.constant 0 : i32
    %c0_i32_0 = arith.constant 0 : i32
    %c0_i32_1 = arith.constant 0 : i32
    return %c0_i32, %c0_i32_0 : i32, i32
  }
  func.func @transform_10(%arg0: i32) -> (i32, i32) {
    %c0_i32 = arith.constant 0 : i32
    %c0_i32_0 = arith.constant 0 : i32
    %c0_i32_1 = arith.constant 0 : i32
    return %c0_i32, %c0_i32_0 : i32, i32
  }
  func.func @transform_11(%arg0: i32) -> (i32, i32) {
    %c0_i32 = arith.constant 0 : i32
    %c0_i32_0 = arith.constant 0 : i32
    %c0_i32_1 = arith.constant 0 : i32
    return %c0_i32, %c0_i32_0 : i32, i32
  }
  func.func @transform_12(%arg0: i32) -> (i32, i32, i32) {
    %c0_i32 = arith.constant 0 : i32
    %c0_i32_0 = arith.constant 0 : i32
    %c0_i32_1 = arith.constant 0 : i32
    return %arg0, %c0_i32, %c0_i32_0 : i32, i32, i32
  }
}

</mosaic_0001>

<llo_original>
// kernel: gate_cnn_forward.1
$region0: #{gate_cnn_forward.1}
  #allocation0 [shape = 'u32[]', space=smem, size = 0x4, offset = 0x4, fixed_abs, tag = 'smem constant byte address 0x4 - core index']
  #allocation1 [shape = 'u32[72,128]{1,0:T(1,128)}', space=vmem, size = 0x9000, scoped, tag = 'internal scratch']
  #allocation2 [shape = 'f32[576,6]{1,0:T(8,128)}', space=vmem, size = 0x48000, scoped, tag = 'scratch operand']
  #allocation3 [shape = 'f32[288,6]{1,0:T(8,128)}', space=vmem, size = 0x24000, scoped, tag = 'scratch operand']
  #allocation4 [shape = 'f32[160,6]{1,0:T(8,128)}', space=vmem, size = 0x14000, scoped, tag = 'scratch operand']
  #allocation5 [shape = 'f32[64,12]{1,0:T(8,128)}', space=vmem, size = 0x8000, scoped, tag = 'scratch operand']
  #allocation6 [shape = 'f32[32,12]{1,0:T(8,128)}', space=vmem, size = 0x4000, scoped, tag = 'scratch operand']
  %s0 = inlined_call_operand.vmem [shape: f32[2,576,25], index: 0, kind: input, shape index: {}]
  %s1 = inlined_call_operand.vmem [shape: f32[25,6], index: 1, kind: input, shape index: {}]
  %s2 = inlined_call_operand.vmem [shape: f32[1,6], index: 2, kind: input, shape index: {}]
  %s3 = inlined_call_operand.vmem [shape: f32[25,6,12], index: 3, kind: input, shape index: {}]
  %s4 = inlined_call_operand.vmem [shape: f32[1,12], index: 4, kind: input, shape index: {}]
  %s5 = inlined_call_operand.vmem [shape: f32[64,96], index: 5, kind: input, shape index: {}]
  %s6 = inlined_call_operand.vmem [shape: f32[16,12,84], index: 6, kind: input, shape index: {}]
  %s7 = inlined_call_operand.vmem [shape: f32[1,84], index: 7, kind: input, shape index: {}]
  %s8 = inlined_call_operand.vmem [shape: f32[84,42], index: 8, kind: input, shape index: {}]
  %s9 = inlined_call_operand.vmem [shape: f32[1,42], index: 9, kind: input, shape index: {}]
  %s10 = inlined_call_operand.vmem [shape: f32[42,128], index: 10, kind: input, shape index: {}]
  %s11 = inlined_call_operand.vmem [shape: f32[1,128], index: 11, kind: input, shape index: {}]
  %s12 = inlined_call_operand.vmem [shape: f32[2,1,128], index: 12, kind: output, shape index: {}]
  %s13 = sld [smem:[#allocation0]]
  $region81: #{gate_cnn_forward.1} parent=0
    _
  %s15 = ssub.s32 1, %s13
  %s16 = scalar_select 0, %s15, %s13
  loop: start=0, step=1, limit=4
  $region2: #{gate_cnn_forward.1} parent=0 // loop_pre_header
    _
  $region3: #{gate_cnn_forward.1} parent=0 // loop_header
    %s18 = sphi 0, %s22
    %p19 = scmp.ge.s32.totalorder %s18, 4
    %s28 = sphi 0, %s30
    %s31 = sphi 0, %s28
    %s32 = sphi 0, %s31
    %s48 = sphi 0, %s32
    %s52 = sphi 0, %s52
    %s54 = sphi 0, %s52
    %s55 = sphi 0, %s54
    %s69 = sphi 0, %s55
    %s73 = sphi 0, %s73
    %s75 = sphi 0, %s73
    %s76 = sphi 0, %s75
    %s90 = sphi 0, %s76
    %s94 = sphi 0, %s94
    %s96 = sphi 0, %s94
    %s97 = sphi 0, %s96
    %s111 = sphi 0, %s97
    %s115 = sphi 0, %s115
    %s117 = sphi 0, %s115
    %s118 = sphi 0, %s117
    %s132 = sphi 0, %s118
    %s136 = sphi 0, %s136
    %s138 = sphi 0, %s136
    %s139 = sphi 0, %s138
    %s153 = sphi 0, %s139
    %s157 = sphi 0, %s157
    %s159 = sphi 0, %s157
    %s160 = sphi 0, %s159
    %s174 = sphi 0, %s160
    %s178 = sphi 0, %s178
    %s180 = sphi 0, %s178
    %s181 = sphi 0, %s180
    %s195 = sphi 0, %s181
    %s199 = sphi 0, %s199
    %s201 = sphi 0, %s199
    %s202 = sphi 0, %s201
    %s216 = sphi 0, %s202
    %s220 = sphi 0, %s220
    %s222 = sphi 0, %s220
    %s223 = sphi 0, %s222
    %s237 = sphi 0, %s223
    %s241 = sphi 0, %s241
    %s243 = sphi 0, %s241
    %s244 = sphi 0, %s243
    %s258 = sphi 0, %s244
    %s262 = sphi 0, %s262
    %s264 = sphi 0, %s262
    %s265 = sphi 0, %s264
    %s279 = sphi 0, %s265
    %s285 = sphi 0, %s287
    %s288 = sphi 0, %s285
    %s289 = sphi 0, %s288
    %s305 = sphi 0, %s289
  $region4: #{gate_cnn_forward.1} parent=0 // loop_header_branch
    %21 = sbr.rel (%p19) target = $region8
  $region5: #{gate_cnn_forward.1} parent=0 // loop_body
    %s23 = ssub.s32 %s18, 1
    %s24 = ssub.s32 %s18, 2
    %s25 = sadd.s32 %s18, 1
    %s26 = ssub.s32 %s18, %s25
    %p27 = scmp.eq.s32.totalorder %s26, 0
    %s29 = sadd.s32 %s28, 1
    %s30 = scalar_select %p27, %s28, %s29
    %p33 = pneg %p27
    %p34 = scmp.eq.s32.totalorder %s18, 1
    %p35 = por %p33, %p34
    %p36 = scmp.ne.s32.totalorder %s28, %s31
    %p37 = scmp.eq.s32.totalorder %s18, 0
    %p38 = por %p36, %p37
    %p39 = scmp.ne.s32.totalorder %s28, %s31
    %p40 = scmp.eq.s32.totalorder %s23, 1
    %p41 = por %p39, %p40
    %p42 = scmp.ne.s32.totalorder %s31, %s32
    %p43 = scmp.eq.s32.totalorder %s23, 0
    %p44 = por %p42, %p43
    %p45 = scmp.ne.s32.totalorder %s31, %s32
    %p46 = scmp.eq.s32.totalorder %s24, 1
    %p47 = por %p45, %p46
    %p49 = scmp.ne.s32.totalorder %s32, %s48
    %p50 = scmp.eq.s32.totalorder %s24, 0
    %p51 = por %p49, %p50
    %s53 = sadd.s32 %s52, 1
    %p56 = scmp.eq.s32.totalorder %s18, 1
    %p57 = scmp.ne.s32.totalorder %s52, %s54
    %p58 = scmp.eq.s32.totalorder %s18, 0
    %p59 = por %p57, %p58
    %p60 = scmp.ne.s32.totalorder %s52, %s54
    %p61 = scmp.eq.s32.totalorder %s23, 1
    %p62 = por %p60, %p61
    %p63 = scmp.ne.s32.totalorder %s54, %s55
    %p64 = scmp.eq.s32.totalorder %s23, 0
    %p65 = por %p63, %p64
    %p66 = scmp.ne.s32.totalorder %s54, %s55
    %p67 = scmp.eq.s32.totalorder %s24, 1
    %p68 = por %p66, %p67
    %p70 = scmp.ne.s32.totalorder %s55, %s69
    %p71 = scmp.eq.s32.totalorder %s24, 0
    %p72 = por %p70, %p71
    %s74 = sadd.s32 %s73, 1
    %p77 = scmp.eq.s32.totalorder %s18, 1
    %p78 = scmp.ne.s32.totalorder %s73, %s75
    %p79 = scmp.eq.s32.totalorder %s18, 0
    %p80 = por %p78, %p79
    %p81 = scmp.ne.s32.totalorder %s73, %s75
    %p82 = scmp.eq.s32.totalorder %s23, 1
    %p83 = por %p81, %p82
    %p84 = scmp.ne.s32.totalorder %s75, %s76
    %p85 = scmp.eq.s32.totalorder %s23, 0
    %p86 = por %p84, %p85
    %p87 = scmp.ne.s32.totalorder %s75, %s76
    %p88 = scmp.eq.s32.totalorder %s24, 1
    %p89 = por %p87, %p88
    %p91 = scmp.ne.s32.totalorder %s76, %s90
    %p92 = scmp.eq.s32.totalorder %s24, 0
    %p93 = por %p91, %p92
    %s95 = sadd.s32 %s94, 1
    %p98 = scmp.eq.s32.totalorder %s18, 1
    %p99 = scmp.ne.s32.totalorder %s94, %s96
    %p100 = scmp.eq.s32.totalorder %s18, 0
    %p101 = por %p99, %p100
    %p102 = scmp.ne.s32.totalorder %s94, %s96
    %p103 = scmp.eq.s32.totalorder %s23, 1
    %p104 = por %p102, %p103
    %p105 = scmp.ne.s32.totalorder %s96, %s97
    %p106 = scmp.eq.s32.totalorder %s23, 0
    %p107 = por %p105, %p106
    %p108 = scmp.ne.s32.totalorder %s96, %s97
    %p109 = scmp.eq.s32.totalorder %s24, 1
    %p110 = por %p108, %p109
    %p112 = scmp.ne.s32.totalorder %s97, %s111
    %p113 = scmp.eq.s32.totalorder %s24, 0
    %p114 = por %p112, %p113
    %s116 = sadd.s32 %s115, 1
    %p119 = scmp.eq.s32.totalorder %s18, 1
    %p120 = scmp.ne.s32.totalorder %s115, %s117
    %p121 = scmp.eq.s32.totalorder %s18, 0
    %p122 = por %p120, %p121
    %p123 = scmp.ne.s32.totalorder %s115, %s117
    %p124 = scmp.eq.s32.totalorder %s23, 1
    %p125 = por %p123, %p124
    %p126 = scmp.ne.s32.totalorder %s117, %s118
    %p127 = scmp.eq.s32.totalorder %s23, 0
    %p128 = por %p126, %p127
    %p129 = scmp.ne.s32.totalorder %s117, %s118
    %p130 = scmp.eq.s32.totalorder %s24, 1
    %p131 = por %p129, %p130
    %p133 = scmp.ne.s32.totalorder %s118, %s132
    %p134 = scmp.eq.s32.totalorder %s24, 0
    %p135 = por %p133, %p134
    %s137 = sadd.s32 %s136, 1
    %p140 = scmp.eq.s32.totalorder %s18, 1
    %p141 = scmp.ne.s32.totalorder %s136, %s138
    %p142 = scmp.eq.s32.totalorder %s18, 0
    %p143 = por %p141, %p142
    %p144 = scmp.ne.s32.totalorder %s136, %s138
    %p145 = scmp.eq.s32.totalorder %s23, 1
    %p146 = por %p144, %p145
    %p147 = scmp.ne.s32.totalorder %s138, %s139
    %p148 = scmp.eq.s32.totalorder %s23, 0
    %p149 = por %p147, %p148
    %p150 = scmp.ne.s32.totalorder %s138, %s139
    %p151 = scmp.eq.s32.totalorder %s24, 1
    %p152 = por %p150, %p151
    %p154 = scmp.ne.s32.totalorder %s139, %s153
    %p155 = scmp.eq.s32.totalorder %s24, 0
    %p156 = por %p154, %p155
    %s158 = sadd.s32 %s157, 1
    %p161 = scmp.eq.s32.totalorder %s18, 1
    %p162 = scmp.ne.s32.totalorder %s157, %s159
    %p163 = scmp.eq.s32.totalorder %s18, 0
    %p164 = por %p162, %p163
    %p165 = scmp.ne.s32.totalorder %s157, %s159
    %p166 = scmp.eq.s32.totalorder %s23, 1
    %p167 = por %p165, %p166
    %p168 = scmp.ne.s32.totalorder %s159, %s160
    %p169 = scmp.eq.s32.totalorder %s23, 0
    %p170 = por %p168, %p169
    %p171 = scmp.ne.s32.totalorder %s159, %s160
    %p172 = scmp.eq.s32.totalorder %s24, 1
    %p173 = por %p171, %p172
    %p175 = scmp.ne.s32.totalorder %s160, %s174
    %p176 = scmp.eq.s32.totalorder %s24, 0
    %p177 = por %p175, %p176
    %s179 = sadd.s32 %s178, 1
    %p182 = scmp.eq.s32.totalorder %s18, 1
    %p183 = scmp.ne.s32.totalorder %s178, %s180
    %p184 = scmp.eq.s32.totalorder %s18, 0
    %p185 = por %p183, %p184
    %p186 = scmp.ne.s32.totalorder %s178, %s180
    %p187 = scmp.eq.s32.totalorder %s23, 1
    %p188 = por %p186, %p187
    %p189 = scmp.ne.s32.totalorder %s180, %s181
    %p190 = scmp.eq.s32.totalorder %s23, 0
    %p191 = por %p189, %p190
    %p192 = scmp.ne.s32.totalorder %s180, %s181
    %p193 = scmp.eq.s32.totalorder %s24, 1
    %p194 = por %p192, %p193
    %p196 = scmp.ne.s32.totalorder %s181, %s195
    %p197 = scmp.eq.s32.totalorder %s24, 0
    %p198 = por %p196, %p197
    %s200 = sadd.s32 %s199, 1
    %p203 = scmp.eq.s32.totalorder %s18, 1
    %p204 = scmp.ne.s32.totalorder %s199, %s201
    %p205 = scmp.eq.s32.totalorder %s18, 0
    %p206 = por %p204, %p205
    %p207 = scmp.ne.s32.totalorder %s199, %s201
    %p208 = scmp.eq.s32.totalorder %s23, 1
    %p209 = por %p207, %p208
    %p210 = scmp.ne.s32.totalorder %s201, %s202
    %p211 = scmp.eq.s32.totalorder %s23, 0
    %p212 = por %p210, %p211
    %p213 = scmp.ne.s32.totalorder %s201, %s202
    %p214 = scmp.eq.s32.totalorder %s24, 1
    %p215 = por %p213, %p214
    %p217 = scmp.ne.s32.totalorder %s202, %s216
    %p218 = scmp.eq.s32.totalorder %s24, 0
    %p219 = por %p217, %p218
    %s221 = sadd.s32 %s220, 1
    %p224 = scmp.eq.s32.totalorder %s18, 1
    %p225 = scmp.ne.s32.totalorder %s220, %s222
    %p226 = scmp.eq.s32.totalorder %s18, 0
    %p227 = por %p225, %p226
    %p228 = scmp.ne.s32.totalorder %s220, %s222
    %p229 = scmp.eq.s32.totalorder %s23, 1
    %p230 = por %p228, %p229
    %p231 = scmp.ne.s32.totalorder %s222, %s223
    %p232 = scmp.eq.s32.totalorder %s23, 0
    %p233 = por %p231, %p232
    %p234 = scmp.ne.s32.totalorder %s222, %s223
    %p235 = scmp.eq.s32.totalorder %s24, 1
    %p236 = por %p234, %p235
    %p238 = scmp.ne.s32.totalorder %s223, %s237
    %p239 = scmp.eq.s32.totalorder %s24, 0
    %p240 = por %p238, %p239
    %s242 = sadd.s32 %s241, 1
    %p245 = scmp.eq.s32.totalorder %s18, 1
    %p246 = scmp.ne.s32.totalorder %s241, %s243
    %p247 = scmp.eq.s32.totalorder %s18, 0
    %p248 = por %p246, %p247
    %p249 = scmp.ne.s32.totalorder %s241, %s243
    %p250 = scmp.eq.s32.totalorder %s23, 1
    %p251 = por %p249, %p250
    %p252 = scmp.ne.s32.totalorder %s243, %s244
    %p253 = scmp.eq.s32.totalorder %s23, 0
    %p254 = por %p252, %p253
    %p255 = scmp.ne.s32.totalorder %s243, %s244
    %p256 = scmp.eq.s32.totalorder %s24, 1
    %p257 = por %p255, %p256
    %p259 = scmp.ne.s32.totalorder %s244, %s258
    %p260 = scmp.eq.s32.totalorder %s24, 0
    %p261 = por %p259, %p260
    %s263 = sadd.s32 %s262, 1
    %p266 = scmp.eq.s32.totalorder %s18, 1
    %p267 = scmp.ne.s32.totalorder %s262, %s264
    %p268 = scmp.eq.s32.totalorder %s18, 0
    %p269 = por %p267, %p268
    %p270 = scmp.ne.s32.totalorder %s262, %s264
    %p271 = scmp.eq.s32.totalorder %s23, 1
    %p272 = por %p270, %p271
    %p273 = scmp.ne.s32.totalorder %s264, %s265
    %p274 = scmp.eq.s32.totalorder %s23, 0
    %p275 = por %p273, %p274
    %p276 = scmp.ne.s32.totalorder %s264, %s265
    %p277 = scmp.eq.s32.totalorder %s24, 1
    %p278 = por %p276, %p277
    %p280 = scmp.ne.s32.totalorder %s265, %s279
    %p281 = scmp.eq.s32.totalorder %s24, 0
    %p282 = por %p280, %p281
    %s283 = ssub.s32 %s18, %s25
    %p284 = scmp.eq.s32.totalorder %s283, 0
    %s286 = sadd.s32 %s285, 1
    %s287 = scalar_select %p284, %s285, %s286
    %p290 = pneg %p284
    %p291 = scmp.eq.s32.totalorder %s18, 1
    %p292 = por %p290, %p291
    %p293 = scmp.ne.s32.totalorder %s285, %s288
    %p294 = scmp.eq.s32.totalorder %s18, 0
    %p295 = por %p293, %p294
    %p296 = scmp.ne.s32.totalorder %s285, %s288
    %p297 = scmp.eq.s32.totalorder %s23, 1
    %p298 = por %p296, %p297
    %p299 = scmp.ne.s32.totalorder %s288, %s289
    %p300 = scmp.eq.s32.totalorder %s23, 0
    %p301 = por %p299, %p300
    %p302 = scmp.ne.s32.totalorder %s288, %s289
    %p303 = scmp.eq.s32.totalorder %s24, 1
    %p304 = por %p302, %p303
    %p306 = scmp.ne.s32.totalorder %s289, %s305
    %p307 = scmp.eq.s32.totalorder %s24, 0
    %p308 = por %p306, %p307
    %p309 = scmp.le.s32.totalorder 1, %s18
    %p310 = scmp.lt.s32.totalorder %s18, 3
    %p311 = pnand %p309, %p310
    %p312 = pneg %p311
    // Predicated region
    $region9: #{gate_cnn_forward.1} parent=5 // pred_check
      _
    $region10: #{gate_cnn_forward.1} parent=5 // pred_check_branch
      %314 = sbr.rel (%p311) target = $region12
    $region11: #{gate_cnn_forward.1} parent=5 // pred_region
      %s315 = ssub.s32 %s18, 1
      // Predicated region
      $region13: #{gate_cnn_forward.1} parent=11 // pred_check
        %p316 = pneg %p65
      $region14: #{gate_cnn_forward.1} parent=11 // pred_check_branch
        %318 = sbr.rel (%p316) target = $region16
      $region15: #{gate_cnn_forward.1} parent=11 // pred_region
        _
      $region16: #{gate_cnn_forward.1} parent=11 // pred_fallthru
        _
      // Predicated region
      $region17: #{gate_cnn_forward.1} parent=11 // pred_check
        %p319 = pneg %p86
      $region18: #{gate_cnn_forward.1} parent=11 // pred_check_branch
        %321 = sbr.rel (%p319) target = $region20
      $region19: #{gate_cnn_forward.1} parent=11 // pred_region
        _
      $region20: #{gate_cnn_forward.1} parent=11 // pred_fallthru
        _
      // Predicated region
      $region21: #{gate_cnn_forward.1} parent=11 // pred_check
        %p322 = pneg %p107
      $region22: #{gate_cnn_forward.1} parent=11 // pred_check_branch
        %324 = sbr.rel (%p322) target = $region24
      $region23: #{gate_cnn_forward.1} parent=11 // pred_region
        _
      $region24: #{gate_cnn_forward.1} parent=11 // pred_fallthru
        _
      // Predicated region
      $region25: #{gate_cnn_forward.1} parent=11 // pred_check
        %p325 = pneg %p128
      $region26: #{gate_cnn_forward.1} parent=11 // pred_check_branch
        %327 = sbr.rel (%p325) target = $region28
      $region27: #{gate_cnn_forward.1} parent=11 // pred_region
        _
      $region28: #{gate_cnn_forward.1} parent=11 // pred_fallthru
        _
      // Predicated region
      $region29: #{gate_cnn_forward.1} parent=11 // pred_check
        %p328 = pneg %p149
      $region30: #{gate_cnn_forward.1} parent=11 // pred_check_branch
        %330 = sbr.rel (%p328) target = $region32
      $region31: #{gate_cnn_forward.1} parent=11 // pred_region
        _
      $region32: #{gate_cnn_forward.1} parent=11 // pred_fallthru
        _
      // Predicated region
      $region33: #{gate_cnn_forward.1} parent=11 // pred_check
        %p331 = pneg %p170
      $region34: #{gate_cnn_forward.1} parent=11 // pred_check_branch
        %333 = sbr.rel (%p331) target = $region36
      $region35: #{gate_cnn_forward.1} parent=11 // pred_region
        _
      $region36: #{gate_cnn_forward.1} parent=11 // pred_fallthru
        _
      // Predicated region
      $region37: #{gate_cnn_forward.1} parent=11 // pred_check
        %p334 = pneg %p191
      $region38: #{gate_cnn_forward.1} parent=11 // pred_check_branch
        %336 = sbr.rel (%p334) target = $region40
      $region39: #{gate_cnn_forward.1} parent=11 // pred_region
        _
      $region40: #{gate_cnn_forward.1} parent=11 // pred_fallthru
        _
      // Predicated region
      $region41: #{gate_cnn_forward.1} parent=11 // pred_check
        %p337 = pneg %p212
      $region42: #{gate_cnn_forward.1} parent=11 // pred_check_branch
        %339 = sbr.rel (%p337) target = $region44
      $region43: #{gate_cnn_forward.1} parent=11 // pred_region
        _
      $region44: #{gate_cnn_forward.1} parent=11 // pred_fallthru
        _
      // Predicated region
      $region45: #{gate_cnn_forward.1} parent=11 // pred_check
        %p340 = pneg %p233
      $region46: #{gate_cnn_forward.1} parent=11 // pred_check_branch
        %342 = sbr.rel (%p340) target = $region48
      $region47: #{gate_cnn_forward.1} parent=11 // pred_region
        _
      $region48: #{gate_cnn_forward.1} parent=11 // pred_fallthru
        _
      // Predicated region
      $region49: #{gate_cnn_forward.1} parent=11 // pred_check
        %p343 = pneg %p254
      $region50: #{gate_cnn_forward.1} parent=11 // pred_check_branch
        %345 = sbr.rel (%p343) target = $region52
      $region51: #{gate_cnn_forward.1} parent=11 // pred_region
        _
      $region52: #{gate_cnn_forward.1} parent=11 // pred_fallthru
        _
      // Predicated region
      $region53: #{gate_cnn_forward.1} parent=11 // pred_check
        %p346 = pneg %p275
      $region54: #{gate_cnn_forward.1} parent=11 // pred_check_branch
        %348 = sbr.rel (%p346) target = $region56
      $region55: #{gate_cnn_forward.1} parent=11 // pred_region
        _
      $region56: #{gate_cnn_forward.1} parent=11 // pred_fallthru
        _
    $region12: #{gate_cnn_forward.1} parent=5 // pred_fallthru
      _
    %p349 = scmp.lt.s32.totalorder %s18, 2
    // Predicated region
    $region57: #{gate_cnn_forward.1} parent=5 // pred_check
      %p350 = pneg %p349
    $region58: #{gate_cnn_forward.1} parent=5 // pred_check_branch
      %352 = sbr.rel (%p350) target = $region60
    $region59: #{gate_cnn_forward.1} parent=5 // pred_region
      // Predicated region
      $region61: #{gate_cnn_forward.1} parent=59 // pred_check
        %p353 = pneg %p38
      $region62: #{gate_cnn_forward.1} parent=59 // pred_check_branch
        %355 = sbr.rel (%p353) target = $region64
      $region63: #{gate_cnn_forward.1} parent=59 // pred_region
        %p356 = scmp.lt.s32.totalorder %s18, 1
        %s357 = scalar_select %p356, %s18, 1
        %s358 = smul.addr %s357, 72
        %s359 = smul.addr %s358, 8
        %s360 = scalar_lea.vmem %s0, %s359
      $region64: #{gate_cnn_forward.1} parent=59 // pred_fallthru
        _
    $region60: #{gate_cnn_forward.1} parent=5 // pred_fallthru
      _
    %p361 = scmp.le.s32.totalorder 1, %s18
    %p362 = scmp.lt.s32.totalorder %s18, 3
    %p363 = pnand %p361, %p362
    %p364 = pneg %p363
    // Predicated region
    $region65: #{gate_cnn_forward.1} parent=5 // pred_check
      _
    $region66: #{gate_cnn_forward.1} parent=5 // pred_check_branch
      %366 = sbr.rel (%p363) target = $region68
    $region67: #{gate_cnn_forward.1} parent=5 // pred_region
      %s367 = ssub.s32 %s18, 1
      %p368 = scmp.lt.s32.totalorder %s23, 1
      %s369 = scalar_select %p368, %s23, 1
      %s370 = smul.addr %s369, 72
      %s371 = smul.addr %s370, 8
      %s372 = scalar_lea.vmem %s0, %s371
      %p373 = pneg %p44
      %p374 = pneg %p41
      %p375 = pneg %p65
      %p376 = pneg %p62
      %p377 = pneg %p86
      %p378 = pneg %p83
      %p379 = pneg %p107
      %p380 = pneg %p104
      %p381 = pneg %p128
      %p382 = pneg %p125
      %p383 = pneg %p149
      %p384 = pneg %p146
      %p385 = pneg %p170
      %p386 = pneg %p167
      %p387 = pneg %p191
      %p388 = pneg %p188
      %p389 = pneg %p212
      %p390 = pneg %p209
      %p391 = pneg %p233
      %p392 = pneg %p230
      %p393 = pneg %p254
      %p394 = pneg %p251
      %p395 = pneg %p275
      %p396 = pneg %p272
      %p397 = pneg %p301
      %p398 = pneg %p298
      %p399 = scmp.lt.s32.totalorder %s23, 1
      %s400 = scalar_select %p399, %s23, 1
      %s401 = scalar_lea.vmem %s12, %s400
      %p402 = scmp.lt.s32.totalorder %s23, 1
      %s403 = scalar_select %p402, %s23, 1
      %s404 = smul.addr %s403, 72
      %s405 = smul.addr %s404, 8
      %s406 = scalar_lea.vmem %s0, %s405
      %p407 = scmp.lt.s32.totalorder %s23, 1
      %s408 = scalar_select %p407, %s23, 1
      %s409 = scalar_lea.vmem %s12, %s408
      %v410 = vld [vmem:[%s406] sm:$0xff]
      %v411 = vld [vmem:[%s406 + $0x8] sm:$0xff]
      %v412 = vld [vmem:[%s406 + $0x10] sm:$0xff]
      %v413 = vld [vmem:[%s406 + $0x18] sm:$0xff]
      %v414 = vld [vmem:[%s406 + $0x20] sm:$0xff]
      %v415 = vld [vmem:[%s406 + $0x28] sm:$0xff]
      %v416 = vld [vmem:[%s406 + $0x30] sm:$0xff]
      %v417 = vld [vmem:[%s406 + $0x38] sm:$0xff]
      %v418 = vld [vmem:[%s406 + $0x40] sm:$0xff]
      %v419 = vld [vmem:[%s406 + $0x48] sm:$0xff]
      %v420 = vld [vmem:[%s406 + $0x50] sm:$0xff]
      %v421 = vld [vmem:[%s406 + $0x58] sm:$0xff]
      %v422 = vld [vmem:[%s406 + $0x60] sm:$0xff]
      %v423 = vld [vmem:[%s406 + $0x68] sm:$0xff]
      %v424 = vld [vmem:[%s406 + $0x70] sm:$0xff]
      %v425 = vld [vmem:[%s406 + $0x78] sm:$0xff]
      %v426 = vld [vmem:[%s406 + $0x80] sm:$0xff]
      %v427 = vld [vmem:[%s406 + $0x88] sm:$0xff]
      %v428 = vld [vmem:[%s406 + $0x90] sm:$0xff]
      %v429 = vld [vmem:[%s406 + $0x98] sm:$0xff]
      %v430 = vld [vmem:[%s406 + $0xa0] sm:$0xff]
      %v431 = vld [vmem:[%s406 + $0xa8] sm:$0xff]
      %v432 = vld [vmem:[%s406 + $0xb0] sm:$0xff]
      %v433 = vld [vmem:[%s406 + $0xb8] sm:$0xff]
      %v434 = vld [vmem:[%s406 + $0xc0] sm:$0xff]
      %v435 = vld [vmem:[%s406 + $0xc8] sm:$0xff]
      %v436 = vld [vmem:[%s406 + $0xd0] sm:$0xff]
      %v437 = vld [vmem:[%s406 + $0xd8] sm:$0xff]
      %v438 = vld [vmem:[%s406 + $0xe0] sm:$0xff]
      %v439 = vld [vmem:[%s406 + $0xe8] sm:$0xff]
      %v440 = vld [vmem:[%s406 + $0xf0] sm:$0xff]
      %v441 = vld [vmem:[%s406 + $0xf8] sm:$0xff]
      %v442 = vld [vmem:[%s406 + $0x100] sm:$0xff]
      %v443 = vld [vmem:[%s406 + $0x108] sm:$0xff]
      %v444 = vld [vmem:[%s406 + $0x110] sm:$0xff]
      %v445 = vld [vmem:[%s406 + $0x118] sm:$0xff]
      %v446 = vld [vmem:[%s406 + $0x120] sm:$0xff]
      %v447 = vld [vmem:[%s406 + $0x128] sm:$0xff]
      %v448 = vld [vmem:[%s406 + $0x130] sm:$0xff]
      %v449 = vld [vmem:[%s406 + $0x138] sm:$0xff]
      %v450 = vld [vmem:[%s406 + $0x140] sm:$0xff]
      %v451 = vld [vmem:[%s406 + $0x148] sm:$0xff]
      %v452 = vld [vmem:[%s406 + $0x150] sm:$0xff]
      %v453 = vld [vmem:[%s406 + $0x158] sm:$0xff]
      %v454 = vld [vmem:[%s406 + $0x160] sm:$0xff]
      %v455 = vld [vmem:[%s406 + $0x168] sm:$0xff]
      %v456 = vld [vmem:[%s406 + $0x170] sm:$0xff]
      %v457 = vld [vmem:[%s406 + $0x178] sm:$0xff]
      %v458 = vld [vmem:[%s406 + $0x180] sm:$0xff]
      %v459 = vld [vmem:[%s406 + $0x188] sm:$0xff]
      %v460 = vld [vmem:[%s406 + $0x190] sm:$0xff]
      %v461 = vld [vmem:[%s406 + $0x198] sm:$0xff]
      %v462 = vld [vmem:[%s406 + $0x1a0] sm:$0xff]
      %v463 = vld [vmem:[%s406 + $0x1a8] sm:$0xff]
      %v464 = vld [vmem:[%s406 + $0x1b0] sm:$0xff]
      %v465 = vld [vmem:[%s406 + $0x1b8] sm:$0xff]
      %v466 = vld [vmem:[%s406 + $0x1c0] sm:$0xff]
      %v467 = vld [vmem:[%s406 + $0x1c8] sm:$0xff]
      %v468 = vld [vmem:[%s406 + $0x1d0] sm:$0xff]
      %v469 = vld [vmem:[%s406 + $0x1d8] sm:$0xff]
      %v470 = vld [vmem:[%s406 + $0x1e0] sm:$0xff]
      %v471 = vld [vmem:[%s406 + $0x1e8] sm:$0xff]
      %v472 = vld [vmem:[%s406 + $0x1f0] sm:$0xff]
      %v473 = vld [vmem:[%s406 + $0x1f8] sm:$0xff]
      %v474 = vld [vmem:[%s406 + $0x200] sm:$0xff]
      %v475 = vld [vmem:[%s406 + $0x208] sm:$0xff]
      %v476 = vld [vmem:[%s406 + $0x210] sm:$0xff]
      %v477 = vld [vmem:[%s406 + $0x218] sm:$0xff]
      %v478 = vld [vmem:[%s406 + $0x220] sm:$0xff]
      %v479 = vld [vmem:[%s406 + $0x228] sm:$0xff]
      %v480 = vld [vmem:[%s406 + $0x230] sm:$0xff]
      %v481 = vld [vmem:[%s406 + $0x238] sm:$0xff]
      %v482 = vld [vmem:[%s1] sm:$0xff]
      %v483 = vld [vmem:[%s1 + $0x8] sm:$0xff]
      %v484 = vld [vmem:[%s1 + $0x10] sm:$0xff]
      %v485 = vld [vmem:[%s1 + $0x18] sm:$0x1]
      %v486 = vld [vmem:[%s2] sm:$0x1]
      %v488 = vperm.slane %v486, 0
      %vm490 = vcmask 203776
      %v492 = vsel %vm490, %v410, 0
      %v495 = vsel %vm490, %v411, 0
      %v498 = vsel %vm490, %v412, 0
      %v501 = vsel %vm490, %v413, 0
      %v504 = vsel %vm490, %v414, 0
      %v507 = vsel %vm490, %v415, 0
      %v510 = vsel %vm490, %v416, 0
      %v513 = vsel %vm490, %v417, 0
      %v516 = vsel %vm490, %v418, 0
      %v519 = vsel %vm490, %v419, 0
      %v522 = vsel %vm490, %v420, 0
      %v525 = vsel %vm490, %v421, 0
      %v528 = vsel %vm490, %v422, 0
      %v531 = vsel %vm490, %v423, 0
      %v534 = vsel %vm490, %v424, 0
      %v537 = vsel %vm490, %v425, 0
      %v540 = vsel %vm490, %v426, 0
      %v543 = vsel %vm490, %v427, 0
      %v546 = vsel %vm490, %v428, 0
      %v549 = vsel %vm490, %v429, 0
      %v552 = vsel %vm490, %v430, 0
      %v555 = vsel %vm490, %v431, 0
      %v558 = vsel %vm490, %v432, 0
      %v561 = vsel %vm490, %v433, 0
      %v564 = vsel %vm490, %v434, 0
      %v567 = vsel %vm490, %v435, 0
      %v570 = vsel %vm490, %v436, 0
      %v573 = vsel %vm490, %v437, 0
      %v576 = vsel %vm490, %v438, 0
      %v579 = vsel %vm490, %v439, 0
      %v582 = vsel %vm490, %v440, 0
      %v585 = vsel %vm490, %v441, 0
      %v588 = vsel %vm490, %v442, 0
      %v591 = vsel %vm490, %v443, 0
      %v594 = vsel %vm490, %v444, 0
      %v597 = vsel %vm490, %v445, 0
      %v600 = vsel %vm490, %v446, 0
      %v603 = vsel %vm490, %v447, 0
      %v606 = vsel %vm490, %v448, 0
      %v609 = vsel %vm490, %v449, 0
      %v612 = vsel %vm490, %v450, 0
      %v615 = vsel %vm490, %v451, 0
      %v618 = vsel %vm490, %v452, 0
      %v621 = vsel %vm490, %v453, 0
      %v624 = vsel %vm490, %v454, 0
      %v627 = vsel %vm490, %v455, 0
      %v630 = vsel %vm490, %v456, 0
      %v633 = vsel %vm490, %v457, 0
      %v636 = vsel %vm490, %v458, 0
      %v639 = vsel %vm490, %v459, 0
      %v642 = vsel %vm490, %v460, 0
      %v645 = vsel %vm490, %v461, 0
      %v648 = vsel %vm490, %v462, 0
      %v651 = vsel %vm490, %v463, 0
      %v654 = vsel %vm490, %v464, 0
      %v657 = vsel %vm490, %v465, 0
      %v660 = vsel %vm490, %v466, 0
      %v663 = vsel %vm490, %v467, 0
      %v666 = vsel %vm490, %v468, 0
      %v669 = vsel %vm490, %v469, 0
      %v672 = vsel %vm490, %v470, 0
      %v675 = vsel %vm490, %v471, 0
      %v678 = vsel %vm490, %v472, 0
      %v681 = vsel %vm490, %v473, 0
      %v684 = vsel %vm490, %v474, 0
      %v687 = vsel %vm490, %v475, 0
      %v690 = vsel %vm490, %v476, 0
      %v693 = vsel %vm490, %v477, 0
      %v696 = vsel %vm490, %v478, 0
      %v699 = vsel %vm490, %v479, 0
      %v702 = vsel %vm490, %v480, 0
      %v705 = vsel %vm490, %v481, 0
      %vm707 = vcmask 1040384
      %v709 = vsel %vm707, %v485, 0
      %711 = vmatpush.msra.mxu0 0.0
      %712 = vmatpush.msra.mxu0 0.0
      %713 = vmatpush.msra.mxu0 0.0
      %714 = vmatpush.msra.mxu0 0.0
      %715 = vmatpush.msra.mxu0 0.0
      %716 = vmatpush.msra.mxu0 0.0
      %717 = vmatpush.msra.mxu0 0.0
      %718 = vmatpush.msra.mxu0 0.0
      %719 = vmatpush.msra.mxu0 0.0
      %720 = vmatpush.msra.mxu0 0.0
      %721 = vmatpush.msra.mxu0 0.0
      %722 = vmatpush.msra.mxu0 0.0
      %723 = vmatpush.msra.mxu0 %v709
      %724 = vmatpush.msra.mxu0 %v484
      %725 = vmatpush.msra.mxu0 %v483
      %726 = vmatpush.msra.mxu0 %v482
      %727 = vmatmul.f32.gmra.mxu0 %v492
      %v728 = vpop.f32.mrf.mxu0
      %v729 = vadd.f32 %v488, %v728
      %730 = vmatmul.f32.gmra.mxu0 %v495
      %v731 = vpop.f32.mrf.mxu0
      %v732 = vadd.f32 %v488, %v731
      %733 = vmatmul.f32.gmra.mxu0 %v498
      %v734 = vpop.f32.mrf.mxu0
      %v735 = vadd.f32 %v488, %v734
      %736 = vmatmul.f32.gmra.mxu0 %v501
      %v737 = vpop.f32.mrf.mxu0
      %v738 = vadd.f32 %v488, %v737
      %739 = vmatmul.f32.gmra.mxu0 %v504
      %v740 = vpop.f32.mrf.mxu0
      %v741 = vadd.f32 %v488, %v740
      %742 = vmatmul.f32.gmra.mxu0 %v507
      %v743 = vpop.f32.mrf.mxu0
      %v744 = vadd.f32 %v488, %v743
      %745 = vmatmul.f32.gmra.mxu0 %v510
      %v746 = vpop.f32.mrf.mxu0
      %v747 = vadd.f32 %v488, %v746
      %748 = vmatmul.f32.gmra.mxu0 %v513
      %v749 = vpop.f32.mrf.mxu0
      %v750 = vadd.f32 %v488, %v749
      %751 = vmatmul.f32.gmra.mxu0 %v516
      %v752 = vpop.f32.mrf.mxu0
      %v753 = vadd.f32 %v488, %v752
      %754 = vmatmul.f32.gmra.mxu0 %v519
      %v755 = vpop.f32.mrf.mxu0
      %v756 = vadd.f32 %v488, %v755
      %757 = vmatmul.f32.gmra.mxu0 %v522
      %v758 = vpop.f32.mrf.mxu0
      %v759 = vadd.f32 %v488, %v758
      %760 = vmatmul.f32.gmra.mxu0 %v525
      %v761 = vpop.f32.mrf.mxu0
      %v762 = vadd.f32 %v488, %v761
      %763 = vmatmul.f32.gmra.mxu0 %v528
      %v764 = vpop.f32.mrf.mxu0
      %v765 = vadd.f32 %v488, %v764
      %766 = vmatmul.f32.gmra.mxu0 %v531
      %v767 = vpop.f32.mrf.mxu0
      %v768 = vadd.f32 %v488, %v767
      %769 = vmatmul.f32.gmra.mxu0 %v534
      %v770 = vpop.f32.mrf.mxu0
      %v771 = vadd.f32 %v488, %v770
      %772 = vmatmul.f32.gmra.mxu0 %v537
      %v773 = vpop.f32.mrf.mxu0
      %v774 = vadd.f32 %v488, %v773
      %775 = vmatmul.f32.gmra.mxu0 %v540
      %v776 = vpop.f32.mrf.mxu0
      %v777 = vadd.f32 %v488, %v776
      %778 = vmatmul.f32.gmra.mxu0 %v543
      %v779 = vpop.f32.mrf.mxu0
      %v780 = vadd.f32 %v488, %v779
      %781 = vmatmul.f32.gmra.mxu0 %v546
      %v782 = vpop.f32.mrf.mxu0
      %v783 = vadd.f32 %v488, %v782
      %784 = vmatmul.f32.gmra.mxu0 %v549
      %v785 = vpop.f32.mrf.mxu0
      %v786 = vadd.f32 %v488, %v785
      %787 = vmatmul.f32.gmra.mxu0 %v552
      %v788 = vpop.f32.mrf.mxu0
      %v789 = vadd.f32 %v488, %v788
      %790 = vmatmul.f32.gmra.mxu0 %v555
      %v791 = vpop.f32.mrf.mxu0
      %v792 = vadd.f32 %v488, %v791
      %793 = vmatmul.f32.gmra.mxu0 %v558
      %v794 = vpop.f32.mrf.mxu0
      %v795 = vadd.f32 %v488, %v794
      %796 = vmatmul.f32.gmra.mxu0 %v561
      %v797 = vpop.f32.mrf.mxu0
      %v798 = vadd.f32 %v488, %v797
      %799 = vmatmul.f32.gmra.mxu0 %v564
      %v800 = vpop.f32.mrf.mxu0
      %v801 = vadd.f32 %v488, %v800
      %802 = vmatmul.f32.gmra.mxu0 %v567
      %v803 = vpop.f32.mrf.mxu0
      %v804 = vadd.f32 %v488, %v803
      %805 = vmatmul.f32.gmra.mxu0 %v570
      %v806 = vpop.f32.mrf.mxu0
      %v807 = vadd.f32 %v488, %v806
      %808 = vmatmul.f32.gmra.mxu0 %v573
      %v809 = vpop.f32.mrf.mxu0
      %v810 = vadd.f32 %v488, %v809
      %811 = vmatmul.f32.gmra.mxu0 %v576
      %v812 = vpop.f32.mrf.mxu0
      %v813 = vadd.f32 %v488, %v812
      %814 = vmatmul.f32.gmra.mxu0 %v579
      %v815 = vpop.f32.mrf.mxu0
      %v816 = vadd.f32 %v488, %v815
      %817 = vmatmul.f32.gmra.mxu0 %v582
      %v818 = vpop.f32.mrf.mxu0
      %v819 = vadd.f32 %v488, %v818
      %820 = vmatmul.f32.gmra.mxu0 %v585
      %v821 = vpop.f32.mrf.mxu0
      %v822 = vadd.f32 %v488, %v821
      %823 = vmatmul.f32.gmra.mxu0 %v588
      %v824 = vpop.f32.mrf.mxu0
      %v825 = vadd.f32 %v488, %v824
      %826 = vmatmul.f32.gmra.mxu0 %v591
      %v827 = vpop.f32.mrf.mxu0
      %v828 = vadd.f32 %v488, %v827
      %829 = vmatmul.f32.gmra.mxu0 %v594
      %v830 = vpop.f32.mrf.mxu0
      %v831 = vadd.f32 %v488, %v830
      %832 = vmatmul.f32.gmra.mxu0 %v597
      %v833 = vpop.f32.mrf.mxu0
      %v834 = vadd.f32 %v488, %v833
      %835 = vmatmul.f32.gmra.mxu0 %v600
      %v836 = vpop.f32.mrf.mxu0
      %v837 = vadd.f32 %v488, %v836
      %838 = vmatmul.f32.gmra.mxu0 %v603
      %v839 = vpop.f32.mrf.mxu0
      %v840 = vadd.f32 %v488, %v839
      %841 = vmatmul.f32.gmra.mxu0 %v606
      %v842 = vpop.f32.mrf.mxu0
      %v843 = vadd.f32 %v488, %v842
      %844 = vmatmul.f32.gmra.mxu0 %v609
      %v845 = vpop.f32.mrf.mxu0
      %v846 = vadd.f32 %v488, %v845
      %847 = vmatmul.f32.gmra.mxu0 %v612
      %v848 = vpop.f32.mrf.mxu0
      %v849 = vadd.f32 %v488, %v848
      %850 = vmatmul.f32.gmra.mxu0 %v615
      %v851 = vpop.f32.mrf.mxu0
      %v852 = vadd.f32 %v488, %v851
      %853 = vmatmul.f32.gmra.mxu0 %v618
      %v854 = vpop.f32.mrf.mxu0
      %v855 = vadd.f32 %v488, %v854
      %856 = vmatmul.f32.gmra.mxu0 %v621
      %v857 = vpop.f32.mrf.mxu0
      %v858 = vadd.f32 %v488, %v857
      %859 = vmatmul.f32.gmra.mxu0 %v624
      %v860 = vpop.f32.mrf.mxu0
      %v861 = vadd.f32 %v488, %v860
      %862 = vmatmul.f32.gmra.mxu0 %v627
      %v863 = vpop.f32.mrf.mxu0
      %v864 = vadd.f32 %v488, %v863
      %865 = vmatmul.f32.gmra.mxu0 %v630
      %v866 = vpop.f32.mrf.mxu0
      %v867 = vadd.f32 %v488, %v866
      %868 = vmatmul.f32.gmra.mxu0 %v633
      %v869 = vpop.f32.mrf.mxu0
      %v870 = vadd.f32 %v488, %v869
      %871 = vmatmul.f32.gmra.mxu0 %v636
      %v872 = vpop.f32.mrf.mxu0
      %v873 = vadd.f32 %v488, %v872
      %874 = vmatmul.f32.gmra.mxu0 %v639
      %v875 = vpop.f32.mrf.mxu0
      %v876 = vadd.f32 %v488, %v875
      %877 = vmatmul.f32.gmra.mxu0 %v642
      %v878 = vpop.f32.mrf.mxu0
      %v879 = vadd.f32 %v488, %v878
      %880 = vmatmul.f32.gmra.mxu0 %v645
      %v881 = vpop.f32.mrf.mxu0
      %v882 = vadd.f32 %v488, %v881
      %883 = vmatmul.f32.gmra.mxu0 %v648
      %v884 = vpop.f32.mrf.mxu0
      %v885 = vadd.f32 %v488, %v884
      %886 = vmatmul.f32.gmra.mxu0 %v651
      %v887 = vpop.f32.mrf.mxu0
      %v888 = vadd.f32 %v488, %v887
      %889 = vmatmul.f32.gmra.mxu0 %v654
      %v890 = vpop.f32.mrf.mxu0
      %v891 = vadd.f32 %v488, %v890
      %892 = vmatmul.f32.gmra.mxu0 %v657
      %v893 = vpop.f32.mrf.mxu0
      %v894 = vadd.f32 %v488, %v893
      %895 = vmatmul.f32.gmra.mxu0 %v660
      %v896 = vpop.f32.mrf.mxu0
      %v897 = vadd.f32 %v488, %v896
      %898 = vmatmul.f32.gmra.mxu0 %v663
      %v899 = vpop.f32.mrf.mxu0
      %v900 = vadd.f32 %v488, %v899
      %901 = vmatmul.f32.gmra.mxu0 %v666
      %v902 = vpop.f32.mrf.mxu0
      %v903 = vadd.f32 %v488, %v902
      %904 = vmatmul.f32.gmra.mxu0 %v669
      %v905 = vpop.f32.mrf.mxu0
      %v906 = vadd.f32 %v488, %v905
      %907 = vmatmul.f32.gmra.mxu0 %v672
      %v908 = vpop.f32.mrf.mxu0
      %v909 = vadd.f32 %v488, %v908
      %910 = vmatmul.f32.gmra.mxu0 %v675
      %v911 = vpop.f32.mrf.mxu0
      %v912 = vadd.f32 %v488, %v911
      %913 = vmatmul.f32.gmra.mxu0 %v678
      %v914 = vpop.f32.mrf.mxu0
      %v915 = vadd.f32 %v488, %v914
      %916 = vmatmul.f32.gmra.mxu0 %v681
      %v917 = vpop.f32.mrf.mxu0
      %v918 = vadd.f32 %v488, %v917
      %919 = vmatmul.f32.gmra.mxu0 %v684
      %v920 = vpop.f32.mrf.mxu0
      %v921 = vadd.f32 %v488, %v920
      %922 = vmatmul.f32.gmra.mxu0 %v687
      %v923 = vpop.f32.mrf.mxu0
      %v924 = vadd.f32 %v488, %v923
      %925 = vmatmul.f32.gmra.mxu0 %v690
      %v926 = vpop.f32.mrf.mxu0
      %v927 = vadd.f32 %v488, %v926
      %928 = vmatmul.f32.gmra.mxu0 %v693
      %v929 = vpop.f32.mrf.mxu0
      %v930 = vadd.f32 %v488, %v929
      %931 = vmatmul.f32.gmra.mxu0 %v696
      %v932 = vpop.f32.mrf.mxu0
      %v933 = vadd.f32 %v488, %v932
      %934 = vmatmul.f32.gmra.mxu0 %v699
      %v935 = vpop.f32.mrf.mxu0
      %v936 = vadd.f32 %v488, %v935
      %937 = vmatmul.f32.gmra.mxu0 %v702
      %v938 = vpop.f32.mrf.mxu0
      %v939 = vadd.f32 %v488, %v938
      %940 = vmatmul.f32.gmra.mxu0 %v705
      %v941 = vpop.f32.mrf.mxu0
      %v942 = vadd.f32 %v488, %v941
      %943 = vdwg.mxu0
      %v944 = vmax.f32 %v729, 0.0
      %v945 = vmax.f32 %v732, 0.0
      %v946 = vmax.f32 %v735, 0.0
      %v947 = vmax.f32 %v738, 0.0
      %v948 = vmax.f32 %v741, 0.0
      %v949 = vmax.f32 %v744, 0.0
      %v950 = vmax.f32 %v747, 0.0
      %v951 = vmax.f32 %v750, 0.0
      %v952 = vmax.f32 %v753, 0.0
      %v953 = vmax.f32 %v756, 0.0
      %v954 = vmax.f32 %v759, 0.0
      %v955 = vmax.f32 %v762, 0.0
      %v956 = vmax.f32 %v765, 0.0
      %v957 = vmax.f32 %v768, 0.0
      %v958 = vmax.f32 %v771, 0.0
      %v959 = vmax.f32 %v774, 0.0
      %v960 = vmax.f32 %v777, 0.0
      %v961 = vmax.f32 %v780, 0.0
      %v962 = vmax.f32 %v783, 0.0
      %v963 = vmax.f32 %v786, 0.0
      %v964 = vmax.f32 %v789, 0.0
      %v965 = vmax.f32 %v792, 0.0
      %v966 = vmax.f32 %v795, 0.0
      %v967 = vmax.f32 %v798, 0.0
      %v968 = vmax.f32 %v801, 0.0
      %v969 = vmax.f32 %v804, 0.0
      %v970 = vmax.f32 %v807, 0.0
      %v971 = vmax.f32 %v810, 0.0
      %v972 = vmax.f32 %v813, 0.0
      %v973 = vmax.f32 %v816, 0.0
      %v974 = vmax.f32 %v819, 0.0
      %v975 = vmax.f32 %v822, 0.0
      %v976 = vmax.f32 %v825, 0.0
      %v977 = vmax.f32 %v828, 0.0
      %v978 = vmax.f32 %v831, 0.0
      %v979 = vmax.f32 %v834, 0.0
      %v980 = vmax.f32 %v837, 0.0
      %v981 = vmax.f32 %v840, 0.0
      %v982 = vmax.f32 %v843, 0.0
      %v983 = vmax.f32 %v846, 0.0
      %v984 = vmax.f32 %v849, 0.0
      %v985 = vmax.f32 %v852, 0.0
      %v986 = vmax.f32 %v855, 0.0
      %v987 = vmax.f32 %v858, 0.0
      %v988 = vmax.f32 %v861, 0.0
      %v989 = vmax.f32 %v864, 0.0
      %v990 = vmax.f32 %v867, 0.0
      %v991 = vmax.f32 %v870, 0.0
      %v992 = vmax.f32 %v873, 0.0
      %v993 = vmax.f32 %v876, 0.0
      %v994 = vmax.f32 %v879, 0.0
      %v995 = vmax.f32 %v882, 0.0
      %v996 = vmax.f32 %v885, 0.0
      %v997 = vmax.f32 %v888, 0.0
      %v998 = vmax.f32 %v891, 0.0
      %v999 = vmax.f32 %v894, 0.0
      %v1000 = vmax.f32 %v897, 0.0
      %v1001 = vmax.f32 %v900, 0.0
      %v1002 = vmax.f32 %v903, 0.0
      %v1003 = vmax.f32 %v906, 0.0
      %v1004 = vmax.f32 %v909, 0.0
      %v1005 = vmax.f32 %v912, 0.0
      %v1006 = vmax.f32 %v915, 0.0
      %v1007 = vmax.f32 %v918, 0.0
      %v1008 = vmax.f32 %v921, 0.0
      %v1009 = vmax.f32 %v924, 0.0
      %v1010 = vmax.f32 %v927, 0.0
      %v1011 = vmax.f32 %v930, 0.0
      %v1012 = vmax.f32 %v933, 0.0
      %v1013 = vmax.f32 %v936, 0.0
      %v1014 = vmax.f32 %v939, 0.0
      %v1015 = vmax.f32 %v942, 0.0
      %vm1016 = vcmask 48128
      %1017 = vst.msk [vmem:[#allocation2] sm:$0xff] %vm1016, %v944
      %1018 = vst.msk [vmem:[#allocation2 + $0x8] sm:$0xff] %vm1016, %v945
      %1019 = vst.msk [vmem:[#allocation2 + $0x10] sm:$0xff] %vm1016, %v946
      %1020 = vst.msk [vmem:[#allocation2 + $0x18] sm:$0xff] %vm1016, %v947
      %1021 = vst.msk [vmem:[#allocation2 + $0x20] sm:$0xff] %vm1016, %v948
      %1022 = vst.msk [vmem:[#allocation2 + $0x28] sm:$0xff] %vm1016, %v949
      %1023 = vst.msk [vmem:[#allocation2 + $0x30] sm:$0xff] %vm1016, %v950
      %1024 = vst.msk [vmem:[#allocation2 + $0x38] sm:$0xff] %vm1016, %v951
      %1025 = vst.msk [vmem:[#allocation2 + $0x40] sm:$0xff] %vm1016, %v952
      %1026 = vst.msk [vmem:[#allocation2 + $0x48] sm:$0xff] %vm1016, %v953
      %1027 = vst.msk [vmem:[#allocation2 + $0x50] sm:$0xff] %vm1016, %v954
      %1028 = vst.msk [vmem:[#allocation2 + $0x58] sm:$0xff] %vm1016, %v955
      %1029 = vst.msk [vmem:[#allocation2 + $0x60] sm:$0xff] %vm1016, %v956
      %1030 = vst.msk [vmem:[#allocation2 + $0x68] sm:$0xff] %vm1016, %v957
      %1031 = vst.msk [vmem:[#allocation2 + $0x70] sm:$0xff] %vm1016, %v958
      %1032 = vst.msk [vmem:[#allocation2 + $0x78] sm:$0xff] %vm1016, %v959
      %1033 = vst.msk [vmem:[#allocation2 + $0x80] sm:$0xff] %vm1016, %v960
      %1034 = vst.msk [vmem:[#allocation2 + $0x88] sm:$0xff] %vm1016, %v961
      %1035 = vst.msk [vmem:[#allocation2 + $0x90] sm:$0xff] %vm1016, %v962
      %1036 = vst.msk [vmem:[#allocation2 + $0x98] sm:$0xff] %vm1016, %v963
      %1037 = vst.msk [vmem:[#allocation2 + $0xa0] sm:$0xff] %vm1016, %v964
      %1038 = vst.msk [vmem:[#allocation2 + $0xa8] sm:$0xff] %vm1016, %v965
      %1039 = vst.msk [vmem:[#allocation2 + $0xb0] sm:$0xff] %vm1016, %v966
      %1040 = vst.msk [vmem:[#allocation2 + $0xb8] sm:$0xff] %vm1016, %v967
      %1041 = vst.msk [vmem:[#allocation2 + $0xc0] sm:$0xff] %vm1016, %v968
      %1042 = vst.msk [vmem:[#allocation2 + $0xc8] sm:$0xff] %vm1016, %v969
      %1043 = vst.msk [vmem:[#allocation2 + $0xd0] sm:$0xff] %vm1016, %v970
      %1044 = vst.msk [vmem:[#allocation2 + $0xd8] sm:$0xff] %vm1016, %v971
      %1045 = vst.msk [vmem:[#allocation2 + $0xe0] sm:$0xff] %vm1016, %v972
      %1046 = vst.msk [vmem:[#allocation2 + $0xe8] sm:$0xff] %vm1016, %v973
      %1047 = vst.msk [vmem:[#allocation2 + $0xf0] sm:$0xff] %vm1016, %v974
      %1048 = vst.msk [vmem:[#allocation2 + $0xf8] sm:$0xff] %vm1016, %v975
      %1049 = vst.msk [vmem:[#allocation2 + $0x100] sm:$0xff] %vm1016, %v976
      %1050 = vst.msk [vmem:[#allocation2 + $0x108] sm:$0xff] %vm1016, %v977
      %1051 = vst.msk [vmem:[#allocation2 + $0x110] sm:$0xff] %vm1016, %v978
      %1052 = vst.msk [vmem:[#allocation2 + $0x118] sm:$0xff] %vm1016, %v979
      %1053 = vst.msk [vmem:[#allocation2 + $0x120] sm:$0xff] %vm1016, %v980
      %1054 = vst.msk [vmem:[#allocation2 + $0x128] sm:$0xff] %vm1016, %v981
      %1055 = vst.msk [vmem:[#allocation2 + $0x130] sm:$0xff] %vm1016, %v982
      %1056 = vst.msk [vmem:[#allocation2 + $0x138] sm:$0xff] %vm1016, %v983
      %1057 = vst.msk [vmem:[#allocation2 + $0x140] sm:$0xff] %vm1016, %v984
      %1058 = vst.msk [vmem:[#allocation2 + $0x148] sm:$0xff] %vm1016, %v985
      %1059 = vst.msk [vmem:[#allocation2 + $0x150] sm:$0xff] %vm1016, %v986
      %1060 = vst.msk [vmem:[#allocation2 + $0x158] sm:$0xff] %vm1016, %v987
      %1061 = vst.msk [vmem:[#allocation2 + $0x160] sm:$0xff] %vm1016, %v988
      %1062 = vst.msk [vmem:[#allocation2 + $0x168] sm:$0xff] %vm1016, %v989
      %1063 = vst.msk [vmem:[#allocation2 + $0x170] sm:$0xff] %vm1016, %v990
      %1064 = vst.msk [vmem:[#allocation2 + $0x178] sm:$0xff] %vm1016, %v991
      %1065 = vst.msk [vmem:[#allocation2 + $0x180] sm:$0xff] %vm1016, %v992
      %1066 = vst.msk [vmem:[#allocation2 + $0x188] sm:$0xff] %vm1016, %v993
      %1067 = vst.msk [vmem:[#allocation2 + $0x190] sm:$0xff] %vm1016, %v994
      %1068 = vst.msk [vmem:[#allocation2 + $0x198] sm:$0xff] %vm1016, %v995
      %1069 = vst.msk [vmem:[#allocation2 + $0x1a0] sm:$0xff] %vm1016, %v996
      %1070 = vst.msk [vmem:[#allocation2 + $0x1a8] sm:$0xff] %vm1016, %v997
      %1071 = vst.msk [vmem:[#allocation2 + $0x1b0] sm:$0xff] %vm1016, %v998
      %1072 = vst.msk [vmem:[#allocation2 + $0x1b8] sm:$0xff] %vm1016, %v999
      %1073 = vst.msk [vmem:[#allocation2 + $0x1c0] sm:$0xff] %vm1016, %v1000
      %1074 = vst.msk [vmem:[#allocation2 + $0x1c8] sm:$0xff] %vm1016, %v1001
      %1075 = vst.msk [vmem:[#allocation2 + $0x1d0] sm:$0xff] %vm1016, %v1002
      %1076 = vst.msk [vmem:[#allocation2 + $0x1d8] sm:$0xff] %vm1016, %v1003
      %1077 = vst.msk [vmem:[#allocation2 + $0x1e0] sm:$0xff] %vm1016, %v1004
      %1078 = vst.msk [vmem:[#allocation2 + $0x1e8] sm:$0xff] %vm1016, %v1005
      %1079 = vst.msk [vmem:[#allocation2 + $0x1f0] sm:$0xff] %vm1016, %v1006
      %1080 = vst.msk [vmem:[#allocation2 + $0x1f8] sm:$0xff] %vm1016, %v1007
      %1081 = vst.msk [vmem:[#allocation2 + $0x200] sm:$0xff] %vm1016, %v1008
      %1082 = vst.msk [vmem:[#allocation2 + $0x208] sm:$0xff] %vm1016, %v1009
      %1083 = vst.msk [vmem:[#allocation2 + $0x210] sm:$0xff] %vm1016, %v1010
      %1084 = vst.msk [vmem:[#allocation2 + $0x218] sm:$0xff] %vm1016, %v1011
      %1085 = vst.msk [vmem:[#allocation2 + $0x220] sm:$0xff] %vm1016, %v1012
      %1086 = vst.msk [vmem:[#allocation2 + $0x228] sm:$0xff] %vm1016, %v1013
      %1087 = vst.msk [vmem:[#allocation2 + $0x230] sm:$0xff] %vm1016, %v1014
      %1088 = vst.msk [vmem:[#allocation2 + $0x238] sm:$0xff] %vm1016, %v1015
      %v1089 = vld [vmem:[#allocation2] ss:$2 sm:$0xff]
      %s1090 = scalar_lea.vmem [#allocation2], 16
      %v1091 = vld [vmem:[%s1090] ss:$2 sm:$0xff]
      %s1092 = scalar_lea.vmem [#allocation2], 32
      %v1093 = vld [vmem:[%s1092] ss:$2 sm:$0xff]
      %s1094 = scalar_lea.vmem [#allocation2], 48
      %v1095 = vld [vmem:[%s1094] ss:$2 sm:$0xff]
      %s1096 = scalar_lea.vmem [#allocation2], 64
      %v1097 = vld [vmem:[%s1096] ss:$2 sm:$0xff]
      %s1098 = scalar_lea.vmem [#allocation2], 80
      %v1099 = vld [vmem:[%s1098] ss:$2 sm:$0xff]
      %s1100 = scalar_lea.vmem [#allocation2], 96
      %v1101 = vld [vmem:[%s1100] ss:$2 sm:$0xff]
      %s1102 = scalar_lea.vmem [#allocation2], 112
      %v1103 = vld [vmem:[%s1102] ss:$2 sm:$0xff]
      %s1104 = scalar_lea.vmem [#allocation2], 128
      %v1105 = vld [vmem:[%s1104] ss:$2 sm:$0xff]
      %s1106 = scalar_lea.vmem [#allocation2], 144
      %v1107 = vld [vmem:[%s1106] ss:$2 sm:$0xff]
      %s1108 = scalar_lea.vmem [#allocation2], 160
      %v1109 = vld [vmem:[%s1108] ss:$2 sm:$0xff]
      %s1110 = scalar_lea.vmem [#allocation2], 176
      %v1111 = vld [vmem:[%s1110] ss:$2 sm:$0xff]
      %s1112 = scalar_lea.vmem [#allocation2], 192
      %v1113 = vld [vmem:[%s1112] ss:$2 sm:$0xff]
      %s1114 = scalar_lea.vmem [#allocation2], 208
      %v1115 = vld [vmem:[%s1114] ss:$2 sm:$0xff]
      %s1116 = scalar_lea.vmem [#allocation2], 224
      %v1117 = vld [vmem:[%s1116] ss:$2 sm:$0xff]
      %s1118 = scalar_lea.vmem [#allocation2], 240
      %v1119 = vld [vmem:[%s1118] ss:$2 sm:$0xff]
      %s1120 = scalar_lea.vmem [#allocation2], 256
      %v1121 = vld [vmem:[%s1120] ss:$2 sm:$0xff]
      %s1122 = scalar_lea.vmem [#allocation2], 272
      %v1123 = vld [vmem:[%s1122] ss:$2 sm:$0xff]
      %s1124 = scalar_lea.vmem [#allocation2], 288
      %v1125 = vld [vmem:[%s1124] ss:$2 sm:$0xff]
      %s1126 = scalar_lea.vmem [#allocation2], 304
      %v1127 = vld [vmem:[%s1126] ss:$2 sm:$0xff]
      %s1128 = scalar_lea.vmem [#allocation2], 320
      %v1129 = vld [vmem:[%s1128] ss:$2 sm:$0xff]
      %s1130 = scalar_lea.vmem [#allocation2], 336
      %v1131 = vld [vmem:[%s1130] ss:$2 sm:$0xff]
      %s1132 = scalar_lea.vmem [#allocation2], 352
      %v1133 = vld [vmem:[%s1132] ss:$2 sm:$0xff]
      %s1134 = scalar_lea.vmem [#allocation2], 368
      %v1135 = vld [vmem:[%s1134] ss:$2 sm:$0xff]
      %s1136 = scalar_lea.vmem [#allocation2], 384
      %v1137 = vld [vmem:[%s1136] ss:$2 sm:$0xff]
      %s1138 = scalar_lea.vmem [#allocation2], 400
      %v1139 = vld [vmem:[%s1138] ss:$2 sm:$0xff]
      %s1140 = scalar_lea.vmem [#allocation2], 416
      %v1141 = vld [vmem:[%s1140] ss:$2 sm:$0xff]
      %s1142 = scalar_lea.vmem [#allocation2], 432
      %v1143 = vld [vmem:[%s1142] ss:$2 sm:$0xff]
      %s1144 = scalar_lea.vmem [#allocation2], 448
      %v1145 = vld [vmem:[%s1144] ss:$2 sm:$0xff]
      %s1146 = scalar_lea.vmem [#allocation2], 464
      %v1147 = vld [vmem:[%s1146] ss:$2 sm:$0xff]
      %s1148 = scalar_lea.vmem [#allocation2], 480
      %v1149 = vld [vmem:[%s1148] ss:$2 sm:$0xff]
      %s1150 = scalar_lea.vmem [#allocation2], 496
      %v1151 = vld [vmem:[%s1150] ss:$2 sm:$0xff]
      %s1152 = scalar_lea.vmem [#allocation2], 512
      %v1153 = vld [vmem:[%s1152] ss:$2 sm:$0xff]
      %s1154 = scalar_lea.vmem [#allocation2], 528
      %v1155 = vld [vmem:[%s1154] ss:$2 sm:$0xff]
      %s1156 = scalar_lea.vmem [#allocation2], 544
      %v1157 = vld [vmem:[%s1156] ss:$2 sm:$0xff]
      %s1158 = scalar_lea.vmem [#allocation2], 560
      %v1159 = vld [vmem:[%s1158] ss:$2 sm:$0xff]
      %s1160 = scalar_lea.vmem [#allocation2], 1
      %v1161 = vld [vmem:[%s1160] ss:$2 sm:$0xff]
      %s1162 = scalar_lea.vmem [#allocation2], 17
      %v1163 = vld [vmem:[%s1162] ss:$2 sm:$0xff]
      %s1164 = scalar_lea.vmem [#allocation2], 33
      %v1165 = vld [vmem:[%s1164] ss:$2 sm:$0xff]
      %s1166 = scalar_lea.vmem [#allocation2], 49
      %v1167 = vld [vmem:[%s1166] ss:$2 sm:$0xff]
      %s1168 = scalar_lea.vmem [#allocation2], 65
      %v1169 = vld [vmem:[%s1168] ss:$2 sm:$0xff]
      %s1170 = scalar_lea.vmem [#allocation2], 81
      %v1171 = vld [vmem:[%s1170] ss:$2 sm:$0xff]
      %s1172 = scalar_lea.vmem [#allocation2], 97
      %v1173 = vld [vmem:[%s1172] ss:$2 sm:$0xff]
      %s1174 = scalar_lea.vmem [#allocation2], 113
      %v1175 = vld [vmem:[%s1174] ss:$2 sm:$0xff]
      %s1176 = scalar_lea.vmem [#allocation2], 129
      %v1177 = vld [vmem:[%s1176] ss:$2 sm:$0xff]
      %s1178 = scalar_lea.vmem [#allocation2], 145
      %v1179 = vld [vmem:[%s1178] ss:$2 sm:$0xff]
      %s1180 = scalar_lea.vmem [#allocation2], 161
      %v1181 = vld [vmem:[%s1180] ss:$2 sm:$0xff]
      %s1182 = scalar_lea.vmem [#allocation2], 177
      %v1183 = vld [vmem:[%s1182] ss:$2 sm:$0xff]
      %s1184 = scalar_lea.vmem [#allocation2], 193
      %v1185 = vld [vmem:[%s1184] ss:$2 sm:$0xff]
      %s1186 = scalar_lea.vmem [#allocation2], 209
      %v1187 = vld [vmem:[%s1186] ss:$2 sm:$0xff]
      %s1188 = scalar_lea.vmem [#allocation2], 225
      %v1189 = vld [vmem:[%s1188] ss:$2 sm:$0xff]
      %s1190 = scalar_lea.vmem [#allocation2], 241
      %v1191 = vld [vmem:[%s1190] ss:$2 sm:$0xff]
      %s1192 = scalar_lea.vmem [#allocation2], 257
      %v1193 = vld [vmem:[%s1192] ss:$2 sm:$0xff]
      %s1194 = scalar_lea.vmem [#allocation2], 273
      %v1195 = vld [vmem:[%s1194] ss:$2 sm:$0xff]
      %s1196 = scalar_lea.vmem [#allocation2], 289
      %v1197 = vld [vmem:[%s1196] ss:$2 sm:$0xff]
      %s1198 = scalar_lea.vmem [#allocation2], 305
      %v1199 = vld [vmem:[%s1198] ss:$2 sm:$0xff]
      %s1200 = scalar_lea.vmem [#allocation2], 321
      %v1201 = vld [vmem:[%s1200] ss:$2 sm:$0xff]
      %s1202 = scalar_lea.vmem [#allocation2], 337
      %v1203 = vld [vmem:[%s1202] ss:$2 sm:$0xff]
      %s1204 = scalar_lea.vmem [#allocation2], 353
      %v1205 = vld [vmem:[%s1204] ss:$2 sm:$0xff]
      %s1206 = scalar_lea.vmem [#allocation2], 369
      %v1207 = vld [vmem:[%s1206] ss:$2 sm:$0xff]
      %s1208 = scalar_lea.vmem [#allocation2], 385
      %v1209 = vld [vmem:[%s1208] ss:$2 sm:$0xff]
      %s1210 = scalar_lea.vmem [#allocation2], 401
      %v1211 = vld [vmem:[%s1210] ss:$2 sm:$0xff]
      %s1212 = scalar_lea.vmem [#allocation2], 417
      %v1213 = vld [vmem:[%s1212] ss:$2 sm:$0xff]
      %s1214 = scalar_lea.vmem [#allocation2], 433
      %v1215 = vld [vmem:[%s1214] ss:$2 sm:$0xff]
      %s1216 = scalar_lea.vmem [#allocation2], 449
      %v1217 = vld [vmem:[%s1216] ss:$2 sm:$0xff]
      %s1218 = scalar_lea.vmem [#allocation2], 465
      %v1219 = vld [vmem:[%s1218] ss:$2 sm:$0xff]
      %s1220 = scalar_lea.vmem [#allocation2], 481
      %v1221 = vld [vmem:[%s1220] ss:$2 sm:$0xff]
      %s1222 = scalar_lea.vmem [#allocation2], 497
      %v1223 = vld [vmem:[%s1222] ss:$2 sm:$0xff]
      %s1224 = scalar_lea.vmem [#allocation2], 513
      %v1225 = vld [vmem:[%s1224] ss:$2 sm:$0xff]
      %s1226 = scalar_lea.vmem [#allocation2], 529
      %v1227 = vld [vmem:[%s1226] ss:$2 sm:$0xff]
      %s1228 = scalar_lea.vmem [#allocation2], 545
      %v1229 = vld [vmem:[%s1228] ss:$2 sm:$0xff]
      %s1230 = scalar_lea.vmem [#allocation2], 561
      %v1231 = vld [vmem:[%s1230] ss:$2 sm:$0xff]
      %v1232 = vmax.f32 %v1089, %v1161
      %v1233 = vmax.f32 %v1091, %v1163
      %v1234 = vmax.f32 %v1093, %v1165
      %v1235 = vmax.f32 %v1095, %v1167
      %v1236 = vmax.f32 %v1097, %v1169
      %v1237 = vmax.f32 %v1099, %v1171
      %v1238 = vmax.f32 %v1101, %v1173
      %v1239 = vmax.f32 %v1103, %v1175
      %v1240 = vmax.f32 %v1105, %v1177
      %v1241 = vmax.f32 %v1107, %v1179
      %v1242 = vmax.f32 %v1109, %v1181
      %v1243 = vmax.f32 %v1111, %v1183
      %v1244 = vmax.f32 %v1113, %v1185
      %v1245 = vmax.f32 %v1115, %v1187
      %v1246 = vmax.f32 %v1117, %v1189
      %v1247 = vmax.f32 %v1119, %v1191
      %v1248 = vmax.f32 %v1121, %v1193
      %v1249 = vmax.f32 %v1123, %v1195
      %v1250 = vmax.f32 %v1125, %v1197
      %v1251 = vmax.f32 %v1127, %v1199
      %v1252 = vmax.f32 %v1129, %v1201
      %v1253 = vmax.f32 %v1131, %v1203
      %v1254 = vmax.f32 %v1133, %v1205
      %v1255 = vmax.f32 %v1135, %v1207
      %v1256 = vmax.f32 %v1137, %v1209
      %v1257 = vmax.f32 %v1139, %v1211
      %v1258 = vmax.f32 %v1141, %v1213
      %v1259 = vmax.f32 %v1143, %v1215
      %v1260 = vmax.f32 %v1145, %v1217
      %v1261 = vmax.f32 %v1147, %v1219
      %v1262 = vmax.f32 %v1149, %v1221
      %v1263 = vmax.f32 %v1151, %v1223
      %v1264 = vmax.f32 %v1153, %v1225
      %v1265 = vmax.f32 %v1155, %v1227
      %v1266 = vmax.f32 %v1157, %v1229
      %v1267 = vmax.f32 %v1159, %v1231
      %1268 = vst.msk [vmem:[#allocation3] sm:$0xff] %vm1016, %v1232
      %1269 = vst.msk [vmem:[#allocation3 + $0x8] sm:$0xff] %vm1016, %v1233
      %1270 = vst.msk [vmem:[#allocation3 + $0x10] sm:$0xff] %vm1016, %v1234
      %1271 = vst.msk [vmem:[#allocation3 + $0x18] sm:$0xff] %vm1016, %v1235
      %1272 = vst.msk [vmem:[#allocation3 + $0x20] sm:$0xff] %vm1016, %v1236
      %1273 = vst.msk [vmem:[#allocation3 + $0x28] sm:$0xff] %vm1016, %v1237
      %1274 = vst.msk [vmem:[#allocation3 + $0x30] sm:$0xff] %vm1016, %v1238
      %1275 = vst.msk [vmem:[#allocation3 + $0x38] sm:$0xff] %vm1016, %v1239
      %1276 = vst.msk [vmem:[#allocation3 + $0x40] sm:$0xff] %vm1016, %v1240
      %1277 = vst.msk [vmem:[#allocation3 + $0x48] sm:$0xff] %vm1016, %v1241
      %1278 = vst.msk [vmem:[#allocation3 + $0x50] sm:$0xff] %vm1016, %v1242
      %1279 = vst.msk [vmem:[#allocation3 + $0x58] sm:$0xff] %vm1016, %v1243
      %1280 = vst.msk [vmem:[#allocation3 + $0x60] sm:$0xff] %vm1016, %v1244
      %1281 = vst.msk [vmem:[#allocation3 + $0x68] sm:$0xff] %vm1016, %v1245
      %1282 = vst.msk [vmem:[#allocation3 + $0x70] sm:$0xff] %vm1016, %v1246
      %1283 = vst.msk [vmem:[#allocation3 + $0x78] sm:$0xff] %vm1016, %v1247
      %1284 = vst.msk [vmem:[#allocation3 + $0x80] sm:$0xff] %vm1016, %v1248
      %1285 = vst.msk [vmem:[#allocation3 + $0x88] sm:$0xff] %vm1016, %v1249
      %1286 = vst.msk [vmem:[#allocation3 + $0x90] sm:$0xff] %vm1016, %v1250
      %1287 = vst.msk [vmem:[#allocation3 + $0x98] sm:$0xff] %vm1016, %v1251
      %1288 = vst.msk [vmem:[#allocation3 + $0xa0] sm:$0xff] %vm1016, %v1252
      %1289 = vst.msk [vmem:[#allocation3 + $0xa8] sm:$0xff] %vm1016, %v1253
      %1290 = vst.msk [vmem:[#allocation3 + $0xb0] sm:$0xff] %vm1016, %v1254
      %1291 = vst.msk [vmem:[#allocation3 + $0xb8] sm:$0xff] %vm1016, %v1255
      %1292 = vst.msk [vmem:[#allocation3 + $0xc0] sm:$0xff] %vm1016, %v1256
      %1293 = vst.msk [vmem:[#allocation3 + $0xc8] sm:$0xff] %vm1016, %v1257
      %1294 = vst.msk [vmem:[#allocation3 + $0xd0] sm:$0xff] %vm1016, %v1258
      %1295 = vst.msk [vmem:[#allocation3 + $0xd8] sm:$0xff] %vm1016, %v1259
      %1296 = vst.msk [vmem:[#allocation3 + $0xe0] sm:$0xff] %vm1016, %v1260
      %1297 = vst.msk [vmem:[#allocation3 + $0xe8] sm:$0xff] %vm1016, %v1261
      %1298 = vst.msk [vmem:[#allocation3 + $0xf0] sm:$0xff] %vm1016, %v1262
      %1299 = vst.msk [vmem:[#allocation3 + $0xf8] sm:$0xff] %vm1016, %v1263
      %1300 = vst.msk [vmem:[#allocation3 + $0x100] sm:$0xff] %vm1016, %v1264
      %1301 = vst.msk [vmem:[#allocation3 + $0x108] sm:$0xff] %vm1016, %v1265
      %1302 = vst.msk [vmem:[#allocation3 + $0x110] sm:$0xff] %vm1016, %v1266
      %1303 = vst.msk [vmem:[#allocation3 + $0x118] sm:$0xff] %vm1016, %v1267
      %v1304 = vld [vmem:[#allocation3] sm:$0xff]
      %v1305 = vld [vmem:[#allocation3 + $0x8] sm:$0xf]
      %v1306 = vld [vmem:[#allocation3 + $0xc] sm:$0xff]
      %v1307 = vld [vmem:[#allocation3 + $0x14] sm:$0xf]
      %v1308 = vmax.f32 %v1304, %v1306
      %v1309 = vmax.f32 %v1305, %v1307
      %1310 = vst.msk [vmem:[#allocation4] sm:$0xff] %vm1016, %v1308
      %vm1311 = vcmask 44032
      %1312 = vst.msk [vmem:[#allocation4 + $0x8] sm:$0xf] %vm1311, %v1309
      %v1313 = vld [vmem:[#allocation3 + $0x18] sm:$0xff]
      %v1314 = vld [vmem:[#allocation3 + $0x20] sm:$0xf]
      %v1315 = vld [vmem:[#allocation3 + $0x24] sm:$0xff]
      %v1316 = vld [vmem:[#allocation3 + $0x2c] sm:$0xf]
      %v1317 = vmax.f32 %v1313, %v1315
      %v1318 = vmax.f32 %v1314, %v1316
      %1319 = vst.msk [vmem:[#allocation4 + $0xc] sm:$0xff] %vm1016, %v1317
      %1320 = vst.msk [vmem:[#allocation4 + $0x14] sm:$0xf] %vm1311, %v1318
      %v1321 = vld [vmem:[#allocation3 + $0x30] sm:$0xff]
      %v1322 = vld [vmem:[#allocation3 + $0x38] sm:$0xf]
      %v1323 = vld [vmem:[#allocation3 + $0x3c] sm:$0xff]
      %v1324 = vld [vmem:[#allocation3 + $0x44] sm:$0xf]
      %v1325 = vmax.f32 %v1321, %v1323
      %v1326 = vmax.f32 %v1322, %v1324
      %1327 = vst.msk [vmem:[#allocation4 + $0x18] sm:$0xff] %vm1016, %v1325
      %1328 = vst.msk [vmem:[#allocation4 + $0x20] sm:$0xf] %vm1311, %v1326
      %v1329 = vld [vmem:[#allocation3 + $0x48] sm:$0xff]
      %v1330 = vld [vmem:[#allocation3 + $0x50] sm:$0xf]
      %v1331 = vld [vmem:[#allocation3 + $0x54] sm:$0xff]
      %v1332 = vld [vmem:[#allocation3 + $0x5c] sm:$0xf]
      %v1333 = vmax.f32 %v1329, %v1331
      %v1334 = vmax.f32 %v1330, %v1332
      %1335 = vst.msk [vmem:[#allocation4 + $0x24] sm:$0xff] %vm1016, %v1333
      %1336 = vst.msk [vmem:[#allocation4 + $0x2c] sm:$0xf] %vm1311, %v1334
      %v1337 = vld [vmem:[#allocation3 + $0x60] sm:$0xff]
      %v1338 = vld [vmem:[#allocation3 + $0x68] sm:$0xf]
      %v1339 = vld [vmem:[#allocation3 + $0x6c] sm:$0xff]
      %v1340 = vld [vmem:[#allocation3 + $0x74] sm:$0xf]
      %v1341 = vmax.f32 %v1337, %v1339
      %v1342 = vmax.f32 %v1338, %v1340
      %1343 = vst.msk [vmem:[#allocation4 + $0x30] sm:$0xff] %vm1016, %v1341
      %1344 = vst.msk [vmem:[#allocation4 + $0x38] sm:$0xf] %vm1311, %v1342
      %v1345 = vld [vmem:[#allocation3 + $0x78] sm:$0xff]
      %v1346 = vld [vmem:[#allocation3 + $0x80] sm:$0xf]
      %v1347 = vld [vmem:[#allocation3 + $0x84] sm:$0xff]
      %v1348 = vld [vmem:[#allocation3 + $0x8c] sm:$0xf]
      %v1349 = vmax.f32 %v1345, %v1347
      %v1350 = vmax.f32 %v1346, %v1348
      %1351 = vst.msk [vmem:[#allocation4 + $0x3c] sm:$0xff] %vm1016, %v1349
      %1352 = vst.msk [vmem:[#allocation4 + $0x44] sm:$0xf] %vm1311, %v1350
      %v1353 = vld [vmem:[#allocation3 + $0x90] sm:$0xff]
      %v1354 = vld [vmem:[#allocation3 + $0x98] sm:$0xf]
      %v1355 = vld [vmem:[#allocation3 + $0x9c] sm:$0xff]
      %v1356 = vld [vmem:[#allocation3 + $0xa4] sm:$0xf]
      %v1357 = vmax.f32 %v1353, %v1355
      %v1358 = vmax.f32 %v1354, %v1356
      %1359 = vst.msk [vmem:[#allocation4 + $0x48] sm:$0xff] %vm1016, %v1357
      %1360 = vst.msk [vmem:[#allocation4 + $0x50] sm:$0xf] %vm1311, %v1358
      %v1361 = vld [vmem:[#allocation3 + $0xa8] sm:$0xff]
      %v1362 = vld [vmem:[#allocation3 + $0xb0] sm:$0xf]
      %v1363 = vld [vmem:[#allocation3 + $0xb4] sm:$0xff]
      %v1364 = vld [vmem:[#allocation3 + $0xbc] sm:$0xf]
      %v1365 = vmax.f32 %v1361, %v1363
      %v1366 = vmax.f32 %v1362, %v1364
      %1367 = vst.msk [vmem:[#allocation4 + $0x54] sm:$0xff] %vm1016, %v1365
      %1368 = vst.msk [vmem:[#allocation4 + $0x5c] sm:$0xf] %vm1311, %v1366
      %v1369 = vld [vmem:[#allocation3 + $0xc0] sm:$0xff]
      %v1370 = vld [vmem:[#allocation3 + $0xc8] sm:$0xf]
      %v1371 = vld [vmem:[#allocation3 + $0xcc] sm:$0xff]
      %v1372 = vld [vmem:[#allocation3 + $0xd4] sm:$0xf]
      %v1373 = vmax.f32 %v1369, %v1371
      %v1374 = vmax.f32 %v1370, %v1372
      %1375 = vst.msk [vmem:[#allocation4 + $0x60] sm:$0xff] %vm1016, %v1373
      %1376 = vst.msk [vmem:[#allocation4 + $0x68] sm:$0xf] %vm1311, %v1374
      %v1377 = vld [vmem:[#allocation3 + $0xd8] sm:$0xff]
      %v1378 = vld [vmem:[#allocation3 + $0xe0] sm:$0xf]
      %v1379 = vld [vmem:[#allocation3 + $0xe4] sm:$0xff]
      %v1380 = vld [vmem:[#allocation3 + $0xec] sm:$0xf]
      %v1381 = vmax.f32 %v1377, %v1379
      %v1382 = vmax.f32 %v1378, %v1380
      %1383 = vst.msk [vmem:[#allocation4 + $0x6c] sm:$0xff] %vm1016, %v1381
      %1384 = vst.msk [vmem:[#allocation4 + $0x74] sm:$0xf] %vm1311, %v1382
      %v1385 = vld [vmem:[#allocation3 + $0xf0] sm:$0xff]
      %v1386 = vld [vmem:[#allocation3 + $0xf8] sm:$0xf]
      %v1387 = vld [vmem:[#allocation3 + $0xfc] sm:$0xff]
      %v1388 = vld [vmem:[#allocation3 + $0x104] sm:$0xf]
      %v1389 = vmax.f32 %v1385, %v1387
      %v1390 = vmax.f32 %v1386, %v1388
      %1391 = vst.msk [vmem:[#allocation4 + $0x78] sm:$0xff] %vm1016, %v1389
      %1392 = vst.msk [vmem:[#allocation4 + $0x80] sm:$0xf] %vm1311, %v1390
      %v1393 = vld [vmem:[#allocation3 + $0x108] sm:$0xff]
      %v1394 = vld [vmem:[#allocation3 + $0x110] sm:$0xf]
      %v1395 = vld [vmem:[#allocation3 + $0x114] sm:$0xff]
      %v1396 = vld [vmem:[#allocation3 + $0x11c] sm:$0xf]
      %v1397 = vmax.f32 %v1393, %v1395
      %v1398 = vmax.f32 %v1394, %v1396
      %1399 = vst.msk [vmem:[#allocation4 + $0x84] sm:$0xff] %vm1016, %v1397
      %1400 = vst.msk [vmem:[#allocation4 + $0x8c] sm:$0xf] %vm1311, %v1398
      %1401 = vst.msk [vmem:[#allocation4 + $0x90] sm:$0xff] %vm1016, 0.0
      %1402 = vst.msk [vmem:[#allocation4 + $0x98] sm:$0xff] %vm1016, 0.0
      %v1403 = vld [vmem:[#allocation4] sm:$0xff]
      %v1404 = vld [vmem:[#allocation4 + $0x8] sm:$0xff]
      %v1405 = vld [vmem:[#allocation4 + $0x10] sm:$0xff]
      %v1406 = vld [vmem:[#allocation4 + $0x18] sm:$0xff]
      %v1407 = vld [vmem:[#allocation4 + $0x20] sm:$0xff]
      %v1408 = vld [vmem:[#allocation4 + $0x28] sm:$0xff]
      %v1409 = vld [vmem:[#allocation4 + $0x30] sm:$0xff]
      %v1410 = vld [vmem:[#allocation4 + $0x38] sm:$0xff]
      %v1411 = vld [vmem:[#allocation4 + $0x40] sm:$0xff]
      %v1412 = vld [vmem:[#allocation4 + $0x48] sm:$0xff]
      %v1413 = vld [vmem:[#allocation4 + $0x50] sm:$0xff]
      %v1414 = vld [vmem:[#allocation4 + $0x58] sm:$0xff]
      %v1415 = vld [vmem:[%s3] sm:$0x3f]
      %v1416 = vld [vmem:[#allocation4 + $0x1] sm:$0xff]
      %v1417 = vld [vmem:[#allocation4 + $0x9] sm:$0xff]
      %v1418 = vld [vmem:[#allocation4 + $0x11] sm:$0xff]
      %v1419 = vld [vmem:[#allocation4 + $0x19] sm:$0xff]
      %v1420 = vld [vmem:[#allocation4 + $0x21] sm:$0xff]
      %v1421 = vld [vmem:[#allocation4 + $0x29] sm:$0xff]
      %v1422 = vld [vmem:[#allocation4 + $0x31] sm:$0xff]
      %v1423 = vld [vmem:[#allocation4 + $0x39] sm:$0xff]
      %v1424 = vld [vmem:[#allocation4 + $0x41] sm:$0xff]
      %v1425 = vld [vmem:[#allocation4 + $0x49] sm:$0xff]
      %v1426 = vld [vmem:[#allocation4 + $0x51] sm:$0xff]
      %v1427 = vld [vmem:[#allocation4 + $0x59] sm:$0xff]
      %s1428 = scalar_lea.vmem %s3, 8
      %v1429 = vld [vmem:[%s1428] sm:$0x3f]
      %v1431 = vsel %vm1016, %v1416, 0
      %v1434 = vsel %vm1016, %v1417, 0
      %v1437 = vsel %vm1016, %v1418, 0
      %v1440 = vsel %vm1016, %v1419, 0
      %v1443 = vsel %vm1016, %v1420, 0
      %v1446 = vsel %vm1016, %v1421, 0
      %v1449 = vsel %vm1016, %v1422, 0
      %v1452 = vsel %vm1016, %v1423, 0
      %v1455 = vsel %vm1016, %v1424, 0
      %v1458 = vsel %vm1016, %v1425, 0
      %v1461 = vsel %vm1016, %v1426, 0
      %v1464 = vsel %vm1016, %v1427, 0
      %vm1466 = vcmask 1045504
      %v1468 = vsel %vm1466, %v1429, 0
      %1470 = vmatpush.msra.mxu0 0.0
      %1471 = vmatpush.msra.mxu0 0.0
      %1472 = vmatpush.msra.mxu0 0.0
      %1473 = vmatpush.msra.mxu0 0.0
      %1474 = vmatpush.msra.mxu0 0.0
      %1475 = vmatpush.msra.mxu0 0.0
      %1476 = vmatpush.msra.mxu0 0.0
      %1477 = vmatpush.msra.mxu0 0.0
      %1478 = vmatpush.msra.mxu0 0.0
      %1479 = vmatpush.msra.mxu0 0.0
      %1480 = vmatpush.msra.mxu0 0.0
      %1481 = vmatpush.msra.mxu0 0.0
      %1482 = vmatpush.msra.mxu0 0.0
      %1483 = vmatpush.msra.mxu0 0.0
      %1484 = vmatpush.msra.mxu0 0.0
      %1485 = vmatpush.msra.mxu0 %v1468
      %1486 = vmatmul.f32.gmra.mxu0 %v1431
      %v1487 = vpop.f32.mrf.mxu0
      %v1488 = vadd.f32 0.0, %v1487
      %1489 = vmatmul.f32.gmra.mxu0 %v1434
      %v1490 = vpop.f32.mrf.mxu0
      %v1491 = vadd.f32 0.0, %v1490
      %1492 = vmatmul.f32.gmra.mxu0 %v1437
      %v1493 = vpop.f32.mrf.mxu0
      %v1494 = vadd.f32 0.0, %v1493
      %1495 = vmatmul.f32.gmra.mxu0 %v1440
      %v1496 = vpop.f32.mrf.mxu0
      %v1497 = vadd.f32 0.0, %v1496
      %1498 = vmatmul.f32.gmra.mxu0 %v1443
      %v1499 = vpop.f32.mrf.mxu0
      %v1500 = vadd.f32 0.0, %v1499
      %1501 = vmatmul.f32.gmra.mxu0 %v1446
      %v1502 = vpop.f32.mrf.mxu0
      %v1503 = vadd.f32 0.0, %v1502
      %1504 = vmatmul.f32.gmra.mxu0 %v1449
      %v1505 = vpop.f32.mrf.mxu0
      %v1506 = vadd.f32 0.0, %v1505
      %1507 = vmatmul.f32.gmra.mxu0 %v1452
      %v1508 = vpop.f32.mrf.mxu0
      %v1509 = vadd.f32 0.0, %v1508
      %1510 = vmatmul.f32.gmra.mxu0 %v1455
      %v1511 = vpop.f32.mrf.mxu0
      %v1512 = vadd.f32 0.0, %v1511
      %1513 = vmatmul.f32.gmra.mxu0 %v1458
      %v1514 = vpop.f32.mrf.mxu0
      %v1515 = vadd.f32 0.0, %v1514
      %1516 = vmatmul.f32.gmra.mxu0 %v1461
      %v1517 = vpop.f32.mrf.mxu0
      %v1518 = vadd.f32 0.0, %v1517
      %1519 = vmatmul.f32.gmra.mxu0 %v1464
      %v1520 = vpop.f32.mrf.mxu0
      %v1521 = vadd.f32 0.0, %v1520
      %1522 = vdwg.mxu0
      %v1524 = vsel %vm1016, %v1403, 0
      %v1527 = vsel %vm1016, %v1404, 0
      %v1530 = vsel %vm1016, %v1405, 0
      %v1533 = vsel %vm1016, %v1406, 0
      %v1536 = vsel %vm1016, %v1407, 0
      %v1539 = vsel %vm1016, %v1408, 0
      %v1542 = vsel %vm1016, %v1409, 0
      %v1545 = vsel %vm1016, %v1410, 0
      %v1548 = vsel %vm1016, %v1411, 0
      %v1551 = vsel %vm1016, %v1412, 0
      %v1554 = vsel %vm1016, %v1413, 0
      %v1557 = vsel %vm1016, %v1414, 0
      %v1560 = vsel %vm1466, %v1415, 0
      %1562 = vmatpush.msra.mxu0 0.0
      %1563 = vmatpush.msra.mxu0 0.0
      %1564 = vmatpush.msra.mxu0 0.0
      %1565 = vmatpush.msra.mxu0 0.0
      %1566 = vmatpush.msra.mxu0 0.0
      %1567 = vmatpush.msra.mxu0 0.0
      %1568 = vmatpush.msra.mxu0 0.0
      %1569 = vmatpush.msra.mxu0 0.0
      %1570 = vmatpush.msra.mxu0 0.0
      %1571 = vmatpush.msra.mxu0 0.0
      %1572 = vmatpush.msra.mxu0 0.0
      %1573 = vmatpush.msra.mxu0 0.0
      %1574 = vmatpush.msra.mxu0 0.0
      %1575 = vmatpush.msra.mxu0 0.0
      %1576 = vmatpush.msra.mxu0 0.0
      %1577 = vmatpush.msra.mxu0 %v1560
      %1578 = vmatmul.f32.gmra.mxu0 %v1524
      %v1579 = vpop.f32.mrf.mxu0
      %v1580 = vadd.f32 %v1488, %v1579
      %1581 = vmatmul.f32.gmra.mxu0 %v1527
      %v1582 = vpop.f32.mrf.mxu0
      %v1583 = vadd.f32 %v1491, %v1582
      %1584 = vmatmul.f32.gmra.mxu0 %v1530
      %v1585 = vpop.f32.mrf.mxu0
      %v1586 = vadd.f32 %v1494, %v1585
      %1587 = vmatmul.f32.gmra.mxu0 %v1533
      %v1588 = vpop.f32.mrf.mxu0
      %v1589 = vadd.f32 %v1497, %v1588
      %1590 = vmatmul.f32.gmra.mxu0 %v1536
      %v1591 = vpop.f32.mrf.mxu0
      %v1592 = vadd.f32 %v1500, %v1591
      %1593 = vmatmul.f32.gmra.mxu0 %v1539
      %v1594 = vpop.f32.mrf.mxu0
      %v1595 = vadd.f32 %v1503, %v1594
      %1596 = vmatmul.f32.gmra.mxu0 %v1542
      %v1597 = vpop.f32.mrf.mxu0
      %v1598 = vadd.f32 %v1506, %v1597
      %1599 = vmatmul.f32.gmra.mxu0 %v1545
      %v1600 = vpop.f32.mrf.mxu0
      %v1601 = vadd.f32 %v1509, %v1600
      %1602 = vmatmul.f32.gmra.mxu0 %v1548
      %v1603 = vpop.f32.mrf.mxu0
      %v1604 = vadd.f32 %v1512, %v1603
      %1605 = vmatmul.f32.gmra.mxu0 %v1551
      %v1606 = vpop.f32.mrf.mxu0
      %v1607 = vadd.f32 %v1515, %v1606
      %1608 = vmatmul.f32.gmra.mxu0 %v1554
      %v1609 = vpop.f32.mrf.mxu0
      %v1610 = vadd.f32 %v1518, %v1609
      %1611 = vmatmul.f32.gmra.mxu0 %v1557
      %v1612 = vpop.f32.mrf.mxu0
      %v1613 = vadd.f32 %v1521, %v1612
      %1614 = vdwg.mxu0
      %v1615 = vld [vmem:[#allocation4 + $0x2] sm:$0xff]
      %v1616 = vld [vmem:[#allocation4 + $0xa] sm:$0xff]
      %v1617 = vld [vmem:[#allocation4 + $0x12] sm:$0xff]
      %v1618 = vld [vmem:[#allocation4 + $0x1a] sm:$0xff]
      %v1619 = vld [vmem:[#allocation4 + $0x22] sm:$0xff]
      %v1620 = vld [vmem:[#allocation4 + $0x2a] sm:$0xff]
      %v1621 = vld [vmem:[#allocation4 + $0x32] sm:$0xff]
      %v1622 = vld [vmem:[#allocation4 + $0x3a] sm:$0xff]
      %v1623 = vld [vmem:[#allocation4 + $0x42] sm:$0xff]
      %v1624 = vld [vmem:[#allocation4 + $0x4a] sm:$0xff]
      %v1625 = vld [vmem:[#allocation4 + $0x52] sm:$0xff]
      %v1626 = vld [vmem:[#allocation4 + $0x5a] sm:$0xff]
      %s1627 = scalar_lea.vmem %s3, 16
      %v1628 = vld [vmem:[%s1627] sm:$0x3f]
      %v1630 = vsel %vm1016, %v1615, 0
      %v1633 = vsel %vm1016, %v1616, 0
      %v1636 = vsel %vm1016, %v1617, 0
      %v1639 = vsel %vm1016, %v1618, 0
      %v1642 = vsel %vm1016, %v1619, 0
      %v1645 = vsel %vm1016, %v1620, 0
      %v1648 = vsel %vm1016, %v1621, 0
      %v1651 = vsel %vm1016, %v1622, 0
      %v1654 = vsel %vm1016, %v1623, 0
      %v1657 = vsel %vm1016, %v1624, 0
      %v1660 = vsel %vm1016, %v1625, 0
      %v1663 = vsel %vm1016, %v1626, 0
      %v1666 = vsel %vm1466, %v1628, 0
      %1668 = vmatpush.msra.mxu0 0.0
      %1669 = vmatpush.msra.mxu0 0.0
      %1670 = vmatpush.msra.mxu0 0.0
      %1671 = vmatpush.msra.mxu0 0.0
      %1672 = vmatpush.msra.mxu0 0.0
      %1673 = vmatpush.msra.mxu0 0.0
      %1674 = vmatpush.msra.mxu0 0.0
      %1675 = vmatpush.msra.mxu0 0.0
      %1676 = vmatpush.msra.mxu0 0.0
      %1677 = vmatpush.msra.mxu0 0.0
      %1678 = vmatpush.msra.mxu0 0.0
      %1679 = vmatpush.msra.mxu0 0.0
      %1680 = vmatpush.msra.mxu0 0.0
      %1681 = vmatpush.msra.mxu0 0.0
      %1682 = vmatpush.msra.mxu0 0.0
      %1683 = vmatpush.msra.mxu0 %v1666
      %1684 = vmatmul.f32.gmra.mxu0 %v1630
      %v1685 = vpop.f32.mrf.mxu0
      %v1686 = vadd.f32 0.0, %v1685
      %1687 = vmatmul.f32.gmra.mxu0 %v1633
      %v1688 = vpop.f32.mrf.mxu0
      %v1689 = vadd.f32 0.0, %v1688
      %1690 = vmatmul.f32.gmra.mxu0 %v1636
      %v1691 = vpop.f32.mrf.mxu0
      %v1692 = vadd.f32 0.0, %v1691
      %1693 = vmatmul.f32.gmra.mxu0 %v1639
      %v1694 = vpop.f32.mrf.mxu0
      %v1695 = vadd.f32 0.0, %v1694
      %1696 = vmatmul.f32.gmra.mxu0 %v1642
      %v1697 = vpop.f32.mrf.mxu0
      %v1698 = vadd.f32 0.0, %v1697
      %1699 = vmatmul.f32.gmra.mxu0 %v1645
      %v1700 = vpop.f32.mrf.mxu0
      %v1701 = vadd.f32 0.0, %v1700
      %1702 = vmatmul.f32.gmra.mxu0 %v1648
      %v1703 = vpop.f32.mrf.mxu0
      %v1704 = vadd.f32 0.0, %v1703
      %1705 = vmatmul.f32.gmra.mxu0 %v1651
      %v1706 = vpop.f32.mrf.mxu0
      %v1707 = vadd.f32 0.0, %v1706
      %1708 = vmatmul.f32.gmra.mxu0 %v1654
      %v1709 = vpop.f32.mrf.mxu0
      %v1710 = vadd.f32 0.0, %v1709
      %1711 = vmatmul.f32.gmra.mxu0 %v1657
      %v1712 = vpop.f32.mrf.mxu0
      %v1713 = vadd.f32 0.0, %v1712
      %1714 = vmatmul.f32.gmra.mxu0 %v1660
      %v1715 = vpop.f32.mrf.mxu0
      %v1716 = vadd.f32 0.0, %v1715
      %1717 = vmatmul.f32.gmra.mxu0 %v1663
      %v1718 = vpop.f32.mrf.mxu0
      %v1719 = vadd.f32 0.0, %v1718
      %1720 = vdwg.mxu0
      %v1721 = vadd.f32 %v1580, %v1686
      %v1722 = vadd.f32 %v1583, %v1689
      %v1723 = vadd.f32 %v1586, %v1692
      %v1724 = vadd.f32 %v1589, %v1695
      %v1725 = vadd.f32 %v1592, %v1698
      %v1726 = vadd.f32 %v1595, %v1701
      %v1727 = vadd.f32 %v1598, %v1704
      %v1728 = vadd.f32 %v1601, %v1707
      %v1729 = vadd.f32 %v1604, %v1710
      %v1730 = vadd.f32 %v1607, %v1713
      %v1731 = vadd.f32 %v1610, %v1716
      %v1732 = vadd.f32 %v1613, %v1719
      %v1733 = vld [vmem:[#allocation4 + $0x3] sm:$0xff]
      %v1734 = vld [vmem:[#allocation4 + $0xb] sm:$0xff]
      %v1735 = vld [vmem:[#allocation4 + $0x13] sm:$0xff]
      %v1736 = vld [vmem:[#allocation4 + $0x1b] sm:$0xff]
      %v1737 = vld [vmem:[#allocation4 + $0x23] sm:$0xff]
      %v1738 = vld [vmem:[#allocation4 + $0x2b] sm:$0xff]
      %v1739 = vld [vmem:[#allocation4 + $0x33] sm:$0xff]
      %v1740 = vld [vmem:[#allocation4 + $0x3b] sm:$0xff]
      %v1741 = vld [vmem:[#allocation4 + $0x43] sm:$0xff]
      %v1742 = vld [vmem:[#allocation4 + $0x4b] sm:$0xff]
      %v1743 = vld [vmem:[#allocation4 + $0x53] sm:$0xff]
      %v1744 = vld [vmem:[#allocation4 + $0x5b] sm:$0xff]
      %s1745 = scalar_lea.vmem %s3, 24
      %v1746 = vld [vmem:[%s1745] sm:$0x3f]
      %v1748 = vsel %vm1016, %v1733, 0
      %v1751 = vsel %vm1016, %v1734, 0
      %v1754 = vsel %vm1016, %v1735, 0
      %v1757 = vsel %vm1016, %v1736, 0
      %v1760 = vsel %vm1016, %v1737, 0
      %v1763 = vsel %vm1016, %v1738, 0
      %v1766 = vsel %vm1016, %v1739, 0
      %v1769 = vsel %vm1016, %v1740, 0
      %v1772 = vsel %vm1016, %v1741, 0
      %v1775 = vsel %vm1016, %v1742, 0
      %v1778 = vsel %vm1016, %v1743, 0
      %v1781 = vsel %vm1016, %v1744, 0
      %v1784 = vsel %vm1466, %v1746, 0
      %1786 = vmatpush.msra.mxu0 0.0
      %1787 = vmatpush.msra.mxu0 0.0
      %1788 = vmatpush.msra.mxu0 0.0
      %1789 = vmatpush.msra.mxu0 0.0
      %1790 = vmatpush.msra.mxu0 0.0
      %1791 = vmatpush.msra.mxu0 0.0
      %1792 = vmatpush.msra.mxu0 0.0
      %1793 = vmatpush.msra.mxu0 0.0
      %1794 = vmatpush.msra.mxu0 0.0
      %1795 = vmatpush.msra.mxu0 0.0
      %1796 = vmatpush.msra.mxu0 0.0
      %1797 = vmatpush.msra.mxu0 0.0
      %1798 = vmatpush.msra.mxu0 0.0
      %1799 = vmatpush.msra.mxu0 0.0
      %1800 = vmatpush.msra.mxu0 0.0
      %1801 = vmatpush.msra.mxu0 %v1784
      %1802 = vmatmul.f32.gmra.mxu0 %v1748
      %v1803 = vpop.f32.mrf.mxu0
      %v1804 = vadd.f32 0.0, %v1803
      %1805 = vmatmul.f32.gmra.mxu0 %v1751
      %v1806 = vpop.f32.mrf.mxu0
      %v1807 = vadd.f32 0.0, %v1806
      %1808 = vmatmul.f32.gmra.mxu0 %v1754
      %v1809 = vpop.f32.mrf.mxu0
      %v1810 = vadd.f32 0.0, %v1809
      %1811 = vmatmul.f32.gmra.mxu0 %v1757
      %v1812 = vpop.f32.mrf.mxu0
      %v1813 = vadd.f32 0.0, %v1812
      %1814 = vmatmul.f32.gmra.mxu0 %v1760
      %v1815 = vpop.f32.mrf.mxu0
      %v1816 = vadd.f32 0.0, %v1815
      %1817 = vmatmul.f32.gmra.mxu0 %v1763
      %v1818 = vpop.f32.mrf.mxu0
      %v1819 = vadd.f32 0.0, %v1818
      %1820 = vmatmul.f32.gmra.mxu0 %v1766
      %v1821 = vpop.f32.mrf.mxu0
      %v1822 = vadd.f32 0.0, %v1821
      %1823 = vmatmul.f32.gmra.mxu0 %v1769
      %v1824 = vpop.f32.mrf.mxu0
      %v1825 = vadd.f32 0.0, %v1824
      %1826 = vmatmul.f32.gmra.mxu0 %v1772
      %v1827 = vpop.f32.mrf.mxu0
      %v1828 = vadd.f32 0.0, %v1827
      %1829 = vmatmul.f32.gmra.mxu0 %v1775
      %v1830 = vpop.f32.mrf.mxu0
      %v1831 = vadd.f32 0.0, %v1830
      %1832 = vmatmul.f32.gmra.mxu0 %v1778
      %v1833 = vpop.f32.mrf.mxu0
      %v1834 = vadd.f32 0.0, %v1833
      %1835 = vmatmul.f32.gmra.mxu0 %v1781
      %v1836 = vpop.f32.mrf.mxu0
      %v1837 = vadd.f32 0.0, %v1836
      %1838 = vdwg.mxu0
      %v1839 = vadd.f32 %v1721, %v1804
      %v1840 = vadd.f32 %v1722, %v1807
      %v1841 = vadd.f32 %v1723, %v1810
      %v1842 = vadd.f32 %v1724, %v1813
      %v1843 = vadd.f32 %v1725, %v1816
      %v1844 = vadd.f32 %v1726, %v1819
      %v1845 = vadd.f32 %v1727, %v1822
      %v1846 = vadd.f32 %v1728, %v1825
      %v1847 = vadd.f32 %v1729, %v1828
      %v1848 = vadd.f32 %v1730, %v1831
      %v1849 = vadd.f32 %v1731, %v1834
      %v1850 = vadd.f32 %v1732, %v1837
      %v1851 = vld [vmem:[#allocation4 + $0x4] sm:$0xff]
      %v1852 = vld [vmem:[#allocation4 + $0xc] sm:$0xff]
      %v1853 = vld [vmem:[#allocation4 + $0x14] sm:$0xff]
      %v1854 = vld [vmem:[#allocation4 + $0x1c] sm:$0xff]
      %v1855 = vld [vmem:[#allocation4 + $0x24] sm:$0xff]
      %v1856 = vld [vmem:[#allocation4 + $0x2c] sm:$0xff]
      %v1857 = vld [vmem:[#allocation4 + $0x34] sm:$0xff]
      %v1858 = vld [vmem:[#allocation4 + $0x3c] sm:$0xff]
      %v1859 = vld [vmem:[#allocation4 + $0x44] sm:$0xff]
      %v1860 = vld [vmem:[#allocation4 + $0x4c] sm:$0xff]
      %v1861 = vld [vmem:[#allocation4 + $0x54] sm:$0xff]
      %v1862 = vld [vmem:[#allocation4 + $0x5c] sm:$0xff]
      %s1863 = scalar_lea.vmem %s3, 32
      %v1864 = vld [vmem:[%s1863] sm:$0x3f]
      %v1866 = vsel %vm1016, %v1851, 0
      %v1869 = vsel %vm1016, %v1852, 0
      %v1872 = vsel %vm1016, %v1853, 0
      %v1875 = vsel %vm1016, %v1854, 0
      %v1878 = vsel %vm1016, %v1855, 0
      %v1881 = vsel %vm1016, %v1856, 0
      %v1884 = vsel %vm1016, %v1857, 0
      %v1887 = vsel %vm1016, %v1858, 0
      %v1890 = vsel %vm1016, %v1859, 0
      %v1893 = vsel %vm1016, %v1860, 0
      %v1896 = vsel %vm1016, %v1861, 0
      %v1899 = vsel %vm1016, %v1862, 0
      %v1902 = vsel %vm1466, %v1864, 0
      %1904 = vmatpush.msra.mxu0 0.0
      %1905 = vmatpush.msra.mxu0 0.0
      %1906 = vmatpush.msra.mxu0 0.0
      %1907 = vmatpush.msra.mxu0 0.0
      %1908 = vmatpush.msra.mxu0 0.0
      %1909 = vmatpush.msra.mxu0 0.0
      %1910 = vmatpush.msra.mxu0 0.0
      %1911 = vmatpush.msra.mxu0 0.0
      %1912 = vmatpush.msra.mxu0 0.0
      %1913 = vmatpush.msra.mxu0 0.0
      %1914 = vmatpush.msra.mxu0 0.0
      %1915 = vmatpush.msra.mxu0 0.0
      %1916 = vmatpush.msra.mxu0 0.0
      %1917 = vmatpush.msra.mxu0 0.0
      %1918 = vmatpush.msra.mxu0 0.0
      %1919 = vmatpush.msra.mxu0 %v1902
      %1920 = vmatmul.f32.gmra.mxu0 %v1866
      %v1921 = vpop.f32.mrf.mxu0
      %v1922 = vadd.f32 0.0, %v1921
      %1923 = vmatmul.f32.gmra.mxu0 %v1869
      %v1924 = vpop.f32.mrf.mxu0
      %v1925 = vadd.f32 0.0, %v1924
      %1926 = vmatmul.f32.gmra.mxu0 %v1872
      %v1927 = vpop.f32.mrf.mxu0
      %v1928 = vadd.f32 0.0, %v1927
      %1929 = vmatmul.f32.gmra.mxu0 %v1875
      %v1930 = vpop.f32.mrf.mxu0
      %v1931 = vadd.f32 0.0, %v1930
      %1932 = vmatmul.f32.gmra.mxu0 %v1878
      %v1933 = vpop.f32.mrf.mxu0
      %v1934 = vadd.f32 0.0, %v1933
      %1935 = vmatmul.f32.gmra.mxu0 %v1881
      %v1936 = vpop.f32.mrf.mxu0
      %v1937 = vadd.f32 0.0, %v1936
      %1938 = vmatmul.f32.gmra.mxu0 %v1884
      %v1939 = vpop.f32.mrf.mxu0
      %v1940 = vadd.f32 0.0, %v1939
      %1941 = vmatmul.f32.gmra.mxu0 %v1887
      %v1942 = vpop.f32.mrf.mxu0
      %v1943 = vadd.f32 0.0, %v1942
      %1944 = vmatmul.f32.gmra.mxu0 %v1890
      %v1945 = vpop.f32.mrf.mxu0
      %v1946 = vadd.f32 0.0, %v1945
      %1947 = vmatmul.f32.gmra.mxu0 %v1893
      %v1948 = vpop.f32.mrf.mxu0
      %v1949 = vadd.f32 0.0, %v1948
      %1950 = vmatmul.f32.gmra.mxu0 %v1896
      %v1951 = vpop.f32.mrf.mxu0
      %v1952 = vadd.f32 0.0, %v1951
      %1953 = vmatmul.f32.gmra.mxu0 %v1899
      %v1954 = vpop.f32.mrf.mxu0
      %v1955 = vadd.f32 0.0, %v1954
      %1956 = vdwg.mxu0
      %v1957 = vadd.f32 %v1839, %v1922
      %v1958 = vadd.f32 %v1840, %v1925
      %v1959 = vadd.f32 %v1841, %v1928
      %v1960 = vadd.f32 %v1842, %v1931
      %v1961 = vadd.f32 %v1843, %v1934
      %v1962 = vadd.f32 %v1844, %v1937
      %v1963 = vadd.f32 %v1845, %v1940
      %v1964 = vadd.f32 %v1846, %v1943
      %v1965 = vadd.f32 %v1847, %v1946
      %v1966 = vadd.f32 %v1848, %v1949
      %v1967 = vadd.f32 %v1849, %v1952
      %v1968 = vadd.f32 %v1850, %v1955
      %v1969 = vld [vmem:[#allocation4 + $0xc] sm:$0xff]
      %v1970 = vld [vmem:[#allocation4 + $0x14] sm:$0xff]
      %v1971 = vld [vmem:[#allocation4 + $0x1c] sm:$0xff]
      %v1972 = vld [vmem:[#allocation4 + $0x24] sm:$0xff]
      %v1973 = vld [vmem:[#allocation4 + $0x2c] sm:$0xff]
      %v1974 = vld [vmem:[#allocation4 + $0x34] sm:$0xff]
      %v1975 = vld [vmem:[#allocation4 + $0x3c] sm:$0xff]
      %v1976 = vld [vmem:[#allocation4 + $0x44] sm:$0xff]
      %v1977 = vld [vmem:[#allocation4 + $0x4c] sm:$0xff]
      %v1978 = vld [vmem:[#allocation4 + $0x54] sm:$0xff]
      %v1979 = vld [vmem:[#allocation4 + $0x5c] sm:$0xff]
      %v1980 = vld [vmem:[#allocation4 + $0x64] sm:$0xff]
      %s1981 = scalar_lea.vmem %s3, 40
      %v1982 = vld [vmem:[%s1981] sm:$0x3f]
      %v1984 = vsel %vm1016, %v1969, 0
      %v1987 = vsel %vm1016, %v1970, 0
      %v1990 = vsel %vm1016, %v1971, 0
      %v1993 = vsel %vm1016, %v1972, 0
      %v1996 = vsel %vm1016, %v1973, 0
      %v1999 = vsel %vm1016, %v1974, 0
      %v2002 = vsel %vm1016, %v1975, 0
      %v2005 = vsel %vm1016, %v1976, 0
      %v2008 = vsel %vm1016, %v1977, 0
      %v2011 = vsel %vm1016, %v1978, 0
      %v2014 = vsel %vm1016, %v1979, 0
      %v2017 = vsel %vm1016, %v1980, 0
      %v2020 = vsel %vm1466, %v1982, 0
      %2022 = vmatpush.msra.mxu0 0.0
      %2023 = vmatpush.msra.mxu0 0.0
      %2024 = vmatpush.msra.mxu0 0.0
      %2025 = vmatpush.msra.mxu0 0.0
      %2026 = vmatpush.msra.mxu0 0.0
      %2027 = vmatpush.msra.mxu0 0.0
      %2028 = vmatpush.msra.mxu0 0.0
      %2029 = vmatpush.msra.mxu0 0.0
      %2030 = vmatpush.msra.mxu0 0.0
      %2031 = vmatpush.msra.mxu0 0.0
      %2032 = vmatpush.msra.mxu0 0.0
      %2033 = vmatpush.msra.mxu0 0.0
      %2034 = vmatpush.msra.mxu0 0.0
      %2035 = vmatpush.msra.mxu0 0.0
      %2036 = vmatpush.msra.mxu0 0.0
      %2037 = vmatpush.msra.mxu0 %v2020
      %2038 = vmatmul.f32.gmra.mxu0 %v1984
      %v2039 = vpop.f32.mrf.mxu0
      %v2040 = vadd.f32 0.0, %v2039
      %2041 = vmatmul.f32.gmra.mxu0 %v1987
      %v2042 = vpop.f32.mrf.mxu0
      %v2043 = vadd.f32 0.0, %v2042
      %2044 = vmatmul.f32.gmra.mxu0 %v1990
      %v2045 = vpop.f32.mrf.mxu0
      %v2046 = vadd.f32 0.0, %v2045
      %2047 = vmatmul.f32.gmra.mxu0 %v1993
      %v2048 = vpop.f32.mrf.mxu0
      %v2049 = vadd.f32 0.0, %v2048
      %2050 = vmatmul.f32.gmra.mxu0 %v1996
      %v2051 = vpop.f32.mrf.mxu0
      %v2052 = vadd.f32 0.0, %v2051
      %2053 = vmatmul.f32.gmra.mxu0 %v1999
      %v2054 = vpop.f32.mrf.mxu0
      %v2055 = vadd.f32 0.0, %v2054
      %2056 = vmatmul.f32.gmra.mxu0 %v2002
      %v2057 = vpop.f32.mrf.mxu0
      %v2058 = vadd.f32 0.0, %v2057
      %2059 = vmatmul.f32.gmra.mxu0 %v2005
      %v2060 = vpop.f32.mrf.mxu0
      %v2061 = vadd.f32 0.0, %v2060
      %2062 = vmatmul.f32.gmra.mxu0 %v2008
      %v2063 = vpop.f32.mrf.mxu0
      %v2064 = vadd.f32 0.0, %v2063
      %2065 = vmatmul.f32.gmra.mxu0 %v2011
      %v2066 = vpop.f32.mrf.mxu0
      %v2067 = vadd.f32 0.0, %v2066
      %2068 = vmatmul.f32.gmra.mxu0 %v2014
      %v2069 = vpop.f32.mrf.mxu0
      %v2070 = vadd.f32 0.0, %v2069
      %2071 = vmatmul.f32.gmra.mxu0 %v2017
      %v2072 = vpop.f32.mrf.mxu0
      %v2073 = vadd.f32 0.0, %v2072
      %2074 = vdwg.mxu0
      %v2075 = vadd.f32 %v1957, %v2040
      %v2076 = vadd.f32 %v1958, %v2043
      %v2077 = vadd.f32 %v1959, %v2046
      %v2078 = vadd.f32 %v1960, %v2049
      %v2079 = vadd.f32 %v1961, %v2052
      %v2080 = vadd.f32 %v1962, %v2055
      %v2081 = vadd.f32 %v1963, %v2058
      %v2082 = vadd.f32 %v1964, %v2061
      %v2083 = vadd.f32 %v1965, %v2064
      %v2084 = vadd.f32 %v1966, %v2067
      %v2085 = vadd.f32 %v1967, %v2070
      %v2086 = vadd.f32 %v1968, %v2073
      %v2087 = vld [vmem:[#allocation4 + $0xd] sm:$0xff]
      %v2088 = vld [vmem:[#allocation4 + $0x15] sm:$0xff]
      %v2089 = vld [vmem:[#allocation4 + $0x1d] sm:$0xff]
      %v2090 = vld [vmem:[#allocation4 + $0x25] sm:$0xff]
      %v2091 = vld [vmem:[#allocation4 + $0x2d] sm:$0xff]
      %v2092 = vld [vmem:[#allocation4 + $0x35] sm:$0xff]
      %v2093 = vld [vmem:[#allocation4 + $0x3d] sm:$0xff]
      %v2094 = vld [vmem:[#allocation4 + $0x45] sm:$0xff]
      %v2095 = vld [vmem:[#allocation4 + $0x4d] sm:$0xff]
      %v2096 = vld [vmem:[#allocation4 + $0x55] sm:$0xff]
      %v2097 = vld [vmem:[#allocation4 + $0x5d] sm:$0xff]
      %v2098 = vld [vmem:[#allocation4 + $0x65] sm:$0xff]
      %s2099 = scalar_lea.vmem %s3, 48
      %v2100 = vld [vmem:[%s2099] sm:$0x3f]
      %v2102 = vsel %vm1016, %v2087, 0
      %v2105 = vsel %vm1016, %v2088, 0
      %v2108 = vsel %vm1016, %v2089, 0
      %v2111 = vsel %vm1016, %v2090, 0
      %v2114 = vsel %vm1016, %v2091, 0
      %v2117 = vsel %vm1016, %v2092, 0
      %v2120 = vsel %vm1016, %v2093, 0
      %v2123 = vsel %vm1016, %v2094, 0
      %v2126 = vsel %vm1016, %v2095, 0
      %v2129 = vsel %vm1016, %v2096, 0
      %v2132 = vsel %vm1016, %v2097, 0
      %v2135 = vsel %vm1016, %v2098, 0
      %v2138 = vsel %vm1466, %v2100, 0
      %2140 = vmatpush.msra.mxu0 0.0
      %2141 = vmatpush.msra.mxu0 0.0
      %2142 = vmatpush.msra.mxu0 0.0
      %2143 = vmatpush.msra.mxu0 0.0
      %2144 = vmatpush.msra.mxu0 0.0
      %2145 = vmatpush.msra.mxu0 0.0
      %2146 = vmatpush.msra.mxu0 0.0
      %2147 = vmatpush.msra.mxu0 0.0
      %2148 = vmatpush.msra.mxu0 0.0
      %2149 = vmatpush.msra.mxu0 0.0
      %2150 = vmatpush.msra.mxu0 0.0
      %2151 = vmatpush.msra.mxu0 0.0
      %2152 = vmatpush.msra.mxu0 0.0
      %2153 = vmatpush.msra.mxu0 0.0
      %2154 = vmatpush.msra.mxu0 0.0
      %2155 = vmatpush.msra.mxu0 %v2138
      %2156 = vmatmul.f32.gmra.mxu0 %v2102
      %v2157 = vpop.f32.mrf.mxu0
      %v2158 = vadd.f32 0.0, %v2157
      %2159 = vmatmul.f32.gmra.mxu0 %v2105
      %v2160 = vpop.f32.mrf.mxu0
      %v2161 = vadd.f32 0.0, %v2160
      %2162 = vmatmul.f32.gmra.mxu0 %v2108
      %v2163 = vpop.f32.mrf.mxu0
      %v2164 = vadd.f32 0.0, %v2163
      %2165 = vmatmul.f32.gmra.mxu0 %v2111
      %v2166 = vpop.f32.mrf.mxu0
      %v2167 = vadd.f32 0.0, %v2166
      %2168 = vmatmul.f32.gmra.mxu0 %v2114
      %v2169 = vpop.f32.mrf.mxu0
      %v2170 = vadd.f32 0.0, %v2169
      %2171 = vmatmul.f32.gmra.mxu0 %v2117
      %v2172 = vpop.f32.mrf.mxu0
      %v2173 = vadd.f32 0.0, %v2172
      %2174 = vmatmul.f32.gmra.mxu0 %v2120
      %v2175 = vpop.f32.mrf.mxu0
      %v2176 = vadd.f32 0.0, %v2175
      %2177 = vmatmul.f32.gmra.mxu0 %v2123
      %v2178 = vpop.f32.mrf.mxu0
      %v2179 = vadd.f32 0.0, %v2178
      %2180 = vmatmul.f32.gmra.mxu0 %v2126
      %v2181 = vpop.f32.mrf.mxu0
      %v2182 = vadd.f32 0.0, %v2181
      %2183 = vmatmul.f32.gmra.mxu0 %v2129
      %v2184 = vpop.f32.mrf.mxu0
      %v2185 = vadd.f32 0.0, %v2184
      %2186 = vmatmul.f32.gmra.mxu0 %v2132
      %v2187 = vpop.f32.mrf.mxu0
      %v2188 = vadd.f32 0.0, %v2187
      %2189 = vmatmul.f32.gmra.mxu0 %v2135
      %v2190 = vpop.f32.mrf.mxu0
      %v2191 = vadd.f32 0.0, %v2190
      %2192 = vdwg.mxu0
      %v2193 = vadd.f32 %v2075, %v2158
      %v2194 = vadd.f32 %v2076, %v2161
      %v2195 = vadd.f32 %v2077, %v2164
      %v2196 = vadd.f32 %v2078, %v2167
      %v2197 = vadd.f32 %v2079, %v2170
      %v2198 = vadd.f32 %v2080, %v2173
      %v2199 = vadd.f32 %v2081, %v2176
      %v2200 = vadd.f32 %v2082, %v2179
      %v2201 = vadd.f32 %v2083, %v2182
      %v2202 = vadd.f32 %v2084, %v2185
      %v2203 = vadd.f32 %v2085, %v2188
      %v2204 = vadd.f32 %v2086, %v2191
      %v2205 = vld [vmem:[#allocation4 + $0xe] sm:$0xff]
      %v2206 = vld [vmem:[#allocation4 + $0x16] sm:$0xff]
      %v2207 = vld [vmem:[#allocation4 + $0x1e] sm:$0xff]
      %v2208 = vld [vmem:[#allocation4 + $0x26] sm:$0xff]
      %v2209 = vld [vmem:[#allocation4 + $0x2e] sm:$0xff]
      %v2210 = vld [vmem:[#allocation4 + $0x36] sm:$0xff]
      %v2211 = vld [vmem:[#allocation4 + $0x3e] sm:$0xff]
      %v2212 = vld [vmem:[#allocation4 + $0x46] sm:$0xff]
      %v2213 = vld [vmem:[#allocation4 + $0x4e] sm:$0xff]
      %v2214 = vld [vmem:[#allocation4 + $0x56] sm:$0xff]
      %v2215 = vld [vmem:[#allocation4 + $0x5e] sm:$0xff]
      %v2216 = vld [vmem:[#allocation4 + $0x66] sm:$0xff]
      %s2217 = scalar_lea.vmem %s3, 56
      %v2218 = vld [vmem:[%s2217] sm:$0x3f]
      %v2220 = vsel %vm1016, %v2205, 0
      %v2223 = vsel %vm1016, %v2206, 0
      %v2226 = vsel %vm1016, %v2207, 0
      %v2229 = vsel %vm1016, %v2208, 0
      %v2232 = vsel %vm1016, %v2209, 0
      %v2235 = vsel %vm1016, %v2210, 0
      %v2238 = vsel %vm1016, %v2211, 0
      %v2241 = vsel %vm1016, %v2212, 0
      %v2244 = vsel %vm1016, %v2213, 0
      %v2247 = vsel %vm1016, %v2214, 0
      %v2250 = vsel %vm1016, %v2215, 0
      %v2253 = vsel %vm1016, %v2216, 0
      %v2256 = vsel %vm1466, %v2218, 0
      %2258 = vmatpush.msra.mxu0 0.0
      %2259 = vmatpush.msra.mxu0 0.0
      %2260 = vmatpush.msra.mxu0 0.0
      %2261 = vmatpush.msra.mxu0 0.0
      %2262 = vmatpush.msra.mxu0 0.0
      %2263 = vmatpush.msra.mxu0 0.0
      %2264 = vmatpush.msra.mxu0 0.0
      %2265 = vmatpush.msra.mxu0 0.0
      %2266 = vmatpush.msra.mxu0 0.0
      %2267 = vmatpush.msra.mxu0 0.0
      %2268 = vmatpush.msra.mxu0 0.0
      %2269 = vmatpush.msra.mxu0 0.0
      %2270 = vmatpush.msra.mxu0 0.0
      %2271 = vmatpush.msra.mxu0 0.0
      %2272 = vmatpush.msra.mxu0 0.0
      %2273 = vmatpush.msra.mxu0 %v2256
      %2274 = vmatmul.f32.gmra.mxu0 %v2220
      %v2275 = vpop.f32.mrf.mxu0
      %v2276 = vadd.f32 0.0, %v2275
      %2277 = vmatmul.f32.gmra.mxu0 %v2223
      %v2278 = vpop.f32.mrf.mxu0
      %v2279 = vadd.f32 0.0, %v2278
      %2280 = vmatmul.f32.gmra.mxu0 %v2226
      %v2281 = vpop.f32.mrf.mxu0
      %v2282 = vadd.f32 0.0, %v2281
      %2283 = vmatmul.f32.gmra.mxu0 %v2229
      %v2284 = vpop.f32.mrf.mxu0
      %v2285 = vadd.f32 0.0, %v2284
      %2286 = vmatmul.f32.gmra.mxu0 %v2232
      %v2287 = vpop.f32.mrf.mxu0
      %v2288 = vadd.f32 0.0, %v2287
      %2289 = vmatmul.f32.gmra.mxu0 %v2235
      %v2290 = vpop.f32.mrf.mxu0
      %v2291 = vadd.f32 0.0, %v2290
      %2292 = vmatmul.f32.gmra.mxu0 %v2238
      %v2293 = vpop.f32.mrf.mxu0
      %v2294 = vadd.f32 0.0, %v2293
      %2295 = vmatmul.f32.gmra.mxu0 %v2241
      %v2296 = vpop.f32.mrf.mxu0
      %v2297 = vadd.f32 0.0, %v2296
      %2298 = vmatmul.f32.gmra.mxu0 %v2244
      %v2299 = vpop.f32.mrf.mxu0
      %v2300 = vadd.f32 0.0, %v2299
      %2301 = vmatmul.f32.gmra.mxu0 %v2247
      %v2302 = vpop.f32.mrf.mxu0
      %v2303 = vadd.f32 0.0, %v2302
      %2304 = vmatmul.f32.gmra.mxu0 %v2250
      %v2305 = vpop.f32.mrf.mxu0
      %v2306 = vadd.f32 0.0, %v2305
      %2307 = vmatmul.f32.gmra.mxu0 %v2253
      %v2308 = vpop.f32.mrf.mxu0
      %v2309 = vadd.f32 0.0, %v2308
      %2310 = vdwg.mxu0
      %v2311 = vadd.f32 %v2193, %v2276
      %v2312 = vadd.f32 %v2194, %v2279
      %v2313 = vadd.f32 %v2195, %v2282
      %v2314 = vadd.f32 %v2196, %v2285
      %v2315 = vadd.f32 %v2197, %v2288
      %v2316 = vadd.f32 %v2198, %v2291
      %v2317 = vadd.f32 %v2199, %v2294
      %v2318 = vadd.f32 %v2200, %v2297
      %v2319 = vadd.f32 %v2201, %v2300
      %v2320 = vadd.f32 %v2202, %v2303
      %v2321 = vadd.f32 %v2203, %v2306
      %v2322 = vadd.f32 %v2204, %v2309
      %v2323 = vld [vmem:[#allocation4 + $0xf] sm:$0xff]
      %v2324 = vld [vmem:[#allocation4 + $0x17] sm:$0xff]
      %v2325 = vld [vmem:[#allocation4 + $0x1f] sm:$0xff]
      %v2326 = vld [vmem:[#allocation4 + $0x27] sm:$0xff]
      %v2327 = vld [vmem:[#allocation4 + $0x2f] sm:$0xff]
      %v2328 = vld [vmem:[#allocation4 + $0x37] sm:$0xff]
      %v2329 = vld [vmem:[#allocation4 + $0x3f] sm:$0xff]
      %v2330 = vld [vmem:[#allocation4 + $0x47] sm:$0xff]
      %v2331 = vld [vmem:[#allocation4 + $0x4f] sm:$0xff]
      %v2332 = vld [vmem:[#allocation4 + $0x57] sm:$0xff]
      %v2333 = vld [vmem:[#allocation4 + $0x5f] sm:$0xff]
      %v2334 = vld [vmem:[#allocation4 + $0x67] sm:$0xff]
      %s2335 = scalar_lea.vmem %s3, 64
      %v2336 = vld [vmem:[%s2335] sm:$0x3f]
      %v2338 = vsel %vm1016, %v2323, 0
      %v2341 = vsel %vm1016, %v2324, 0
      %v2344 = vsel %vm1016, %v2325, 0
      %v2347 = vsel %vm1016, %v2326, 0
      %v2350 = vsel %vm1016, %v2327, 0
      %v2353 = vsel %vm1016, %v2328, 0
      %v2356 = vsel %vm1016, %v2329, 0
      %v2359 = vsel %vm1016, %v2330, 0
      %v2362 = vsel %vm1016, %v2331, 0
      %v2365 = vsel %vm1016, %v2332, 0
      %v2368 = vsel %vm1016, %v2333, 0
      %v2371 = vsel %vm1016, %v2334, 0
      %v2374 = vsel %vm1466, %v2336, 0
      %2376 = vmatpush.msra.mxu0 0.0
      %2377 = vmatpush.msra.mxu0 0.0
      %2378 = vmatpush.msra.mxu0 0.0
      %2379 = vmatpush.msra.mxu0 0.0
      %2380 = vmatpush.msra.mxu0 0.0
      %2381 = vmatpush.msra.mxu0 0.0
      %2382 = vmatpush.msra.mxu0 0.0
      %2383 = vmatpush.msra.mxu0 0.0
      %2384 = vmatpush.msra.mxu0 0.0
      %2385 = vmatpush.msra.mxu0 0.0
      %2386 = vmatpush.msra.mxu0 0.0
      %2387 = vmatpush.msra.mxu0 0.0
      %2388 = vmatpush.msra.mxu0 0.0
      %2389 = vmatpush.msra.mxu0 0.0
      %2390 = vmatpush.msra.mxu0 0.0
      %2391 = vmatpush.msra.mxu0 %v2374
      %2392 = vmatmul.f32.gmra.mxu0 %v2338
      %v2393 = vpop.f32.mrf.mxu0
      %v2394 = vadd.f32 0.0, %v2393
      %2395 = vmatmul.f32.gmra.mxu0 %v2341
      %v2396 = vpop.f32.mrf.mxu0
      %v2397 = vadd.f32 0.0, %v2396
      %2398 = vmatmul.f32.gmra.mxu0 %v2344
      %v2399 = vpop.f32.mrf.mxu0
      %v2400 = vadd.f32 0.0, %v2399
      %2401 = vmatmul.f32.gmra.mxu0 %v2347
      %v2402 = vpop.f32.mrf.mxu0
      %v2403 = vadd.f32 0.0, %v2402
      %2404 = vmatmul.f32.gmra.mxu0 %v2350
      %v2405 = vpop.f32.mrf.mxu0
      %v2406 = vadd.f32 0.0, %v2405
      %2407 = vmatmul.f32.gmra.mxu0 %v2353
      %v2408 = vpop.f32.mrf.mxu0
      %v2409 = vadd.f32 0.0, %v2408
      %2410 = vmatmul.f32.gmra.mxu0 %v2356
      %v2411 = vpop.f32.mrf.mxu0
      %v2412 = vadd.f32 0.0, %v2411
      %2413 = vmatmul.f32.gmra.mxu0 %v2359
      %v2414 = vpop.f32.mrf.mxu0
      %v2415 = vadd.f32 0.0, %v2414
      %2416 = vmatmul.f32.gmra.mxu0 %v2362
      %v2417 = vpop.f32.mrf.mxu0
      %v2418 = vadd.f32 0.0, %v2417
      %2419 = vmatmul.f32.gmra.mxu0 %v2365
      %v2420 = vpop.f32.mrf.mxu0
      %v2421 = vadd.f32 0.0, %v2420
      %2422 = vmatmul.f32.gmra.mxu0 %v2368
      %v2423 = vpop.f32.mrf.mxu0
      %v2424 = vadd.f32 0.0, %v2423
      %2425 = vmatmul.f32.gmra.mxu0 %v2371
      %v2426 = vpop.f32.mrf.mxu0
      %v2427 = vadd.f32 0.0, %v2426
      %2428 = vdwg.mxu0
      %v2429 = vadd.f32 %v2311, %v2394
      %v2430 = vadd.f32 %v2312, %v2397
      %v2431 = vadd.f32 %v2313, %v2400
      %v2432 = vadd.f32 %v2314, %v2403
      %v2433 = vadd.f32 %v2315, %v2406
      %v2434 = vadd.f32 %v2316, %v2409
      %v2435 = vadd.f32 %v2317, %v2412
      %v2436 = vadd.f32 %v2318, %v2415
      %v2437 = vadd.f32 %v2319, %v2418
      %v2438 = vadd.f32 %v2320, %v2421
      %v2439 = vadd.f32 %v2321, %v2424
      %v2440 = vadd.f32 %v2322, %v2427
      %v2441 = vld [vmem:[#allocation4 + $0x10] sm:$0xff]
      %v2442 = vld [vmem:[#allocation4 + $0x18] sm:$0xff]
      %v2443 = vld [vmem:[#allocation4 + $0x20] sm:$0xff]
      %v2444 = vld [vmem:[#allocation4 + $0x28] sm:$0xff]
      %v2445 = vld [vmem:[#allocation4 + $0x30] sm:$0xff]
      %v2446 = vld [vmem:[#allocation4 + $0x38] sm:$0xff]
      %v2447 = vld [vmem:[#allocation4 + $0x40] sm:$0xff]
      %v2448 = vld [vmem:[#allocation4 + $0x48] sm:$0xff]
      %v2449 = vld [vmem:[#allocation4 + $0x50] sm:$0xff]
      %v2450 = vld [vmem:[#allocation4 + $0x58] sm:$0xff]
      %v2451 = vld [vmem:[#allocation4 + $0x60] sm:$0xff]
      %v2452 = vld [vmem:[#allocation4 + $0x68] sm:$0xff]
      %s2453 = scalar_lea.vmem %s3, 72
      %v2454 = vld [vmem:[%s2453] sm:$0x3f]
      %v2456 = vsel %vm1016, %v2441, 0
      %v2459 = vsel %vm1016, %v2442, 0
      %v2462 = vsel %vm1016, %v2443, 0
      %v2465 = vsel %vm1016, %v2444, 0
      %v2468 = vsel %vm1016, %v2445, 0
      %v2471 = vsel %vm1016, %v2446, 0
      %v2474 = vsel %vm1016, %v2447, 0
      %v2477 = vsel %vm1016, %v2448, 0
      %v2480 = vsel %vm1016, %v2449, 0
      %v2483 = vsel %vm1016, %v2450, 0
      %v2486 = vsel %vm1016, %v2451, 0
      %v2489 = vsel %vm1016, %v2452, 0
      %v2492 = vsel %vm1466, %v2454, 0
      %2494 = vmatpush.msra.mxu0 0.0
      %2495 = vmatpush.msra.mxu0 0.0
      %2496 = vmatpush.msra.mxu0 0.0
      %2497 = vmatpush.msra.mxu0 0.0
      %2498 = vmatpush.msra.mxu0 0.0
      %2499 = vmatpush.msra.mxu0 0.0
      %2500 = vmatpush.msra.mxu0 0.0
      %2501 = vmatpush.msra.mxu0 0.0
      %2502 = vmatpush.msra.mxu0 0.0
      %2503 = vmatpush.msra.mxu0 0.0
      %2504 = vmatpush.msra.mxu0 0.0
      %2505 = vmatpush.msra.mxu0 0.0
      %2506 = vmatpush.msra.mxu0 0.0
      %2507 = vmatpush.msra.mxu0 0.0
      %2508 = vmatpush.msra.mxu0 0.0
      %2509 = vmatpush.msra.mxu0 %v2492
      %2510 = vmatmul.f32.gmra.mxu0 %v2456
      %v2511 = vpop.f32.mrf.mxu0
      %v2512 = vadd.f32 0.0, %v2511
      %2513 = vmatmul.f32.gmra.mxu0 %v2459
      %v2514 = vpop.f32.mrf.mxu0
      %v2515 = vadd.f32 0.0, %v2514
      %2516 = vmatmul.f32.gmra.mxu0 %v2462
      %v2517 = vpop.f32.mrf.mxu0
      %v2518 = vadd.f32 0.0, %v2517
      %2519 = vmatmul.f32.gmra.mxu0 %v2465
      %v2520 = vpop.f32.mrf.mxu0
      %v2521 = vadd.f32 0.0, %v2520
      %2522 = vmatmul.f32.gmra.mxu0 %v2468
      %v2523 = vpop.f32.mrf.mxu0
      %v2524 = vadd.f32 0.0, %v2523
      %2525 = vmatmul.f32.gmra.mxu0 %v2471
      %v2526 = vpop.f32.mrf.mxu0
      %v2527 = vadd.f32 0.0, %v2526
      %2528 = vmatmul.f32.gmra.mxu0 %v2474
      %v2529 = vpop.f32.mrf.mxu0
      %v2530 = vadd.f32 0.0, %v2529
      %2531 = vmatmul.f32.gmra.mxu0 %v2477
      %v2532 = vpop.f32.mrf.mxu0
      %v2533 = vadd.f32 0.0, %v2532
      %2534 = vmatmul.f32.gmra.mxu0 %v2480
      %v2535 = vpop.f32.mrf.mxu0
      %v2536 = vadd.f32 0.0, %v2535
      %2537 = vmatmul.f32.gmra.mxu0 %v2483
      %v2538 = vpop.f32.mrf.mxu0
      %v2539 = vadd.f32 0.0, %v2538
      %2540 = vmatmul.f32.gmra.mxu0 %v2486
      %v2541 = vpop.f32.mrf.mxu0
      %v2542 = vadd.f32 0.0, %v2541
      %2543 = vmatmul.f32.gmra.mxu0 %v2489
      %v2544 = vpop.f32.mrf.mxu0
      %v2545 = vadd.f32 0.0, %v2544
      %2546 = vdwg.mxu0
      %v2547 = vadd.f32 %v2429, %v2512
      %v2548 = vadd.f32 %v2430, %v2515
      %v2549 = vadd.f32 %v2431, %v2518
      %v2550 = vadd.f32 %v2432, %v2521
      %v2551 = vadd.f32 %v2433, %v2524
      %v2552 = vadd.f32 %v2434, %v2527
      %v2553 = vadd.f32 %v2435, %v2530
      %v2554 = vadd.f32 %v2436, %v2533
      %v2555 = vadd.f32 %v2437, %v2536
      %v2556 = vadd.f32 %v2438, %v2539
      %v2557 = vadd.f32 %v2439, %v2542
      %v2558 = vadd.f32 %v2440, %v2545
      %v2559 = vld [vmem:[#allocation4 + $0x18] sm:$0xff]
      %v2560 = vld [vmem:[#allocation4 + $0x20] sm:$0xff]
      %v2561 = vld [vmem:[#allocation4 + $0x28] sm:$0xff]
      %v2562 = vld [vmem:[#allocation4 + $0x30] sm:$0xff]
      %v2563 = vld [vmem:[#allocation4 + $0x38] sm:$0xff]
      %v2564 = vld [vmem:[#allocation4 + $0x40] sm:$0xff]
      %v2565 = vld [vmem:[#allocation4 + $0x48] sm:$0xff]
      %v2566 = vld [vmem:[#allocation4 + $0x50] sm:$0xff]
      %v2567 = vld [vmem:[#allocation4 + $0x58] sm:$0xff]
      %v2568 = vld [vmem:[#allocation4 + $0x60] sm:$0xff]
      %v2569 = vld [vmem:[#allocation4 + $0x68] sm:$0xff]
      %v2570 = vld [vmem:[#allocation4 + $0x70] sm:$0xff]
      %s2571 = scalar_lea.vmem %s3, 80
      %v2572 = vld [vmem:[%s2571] sm:$0x3f]
      %v2574 = vsel %vm1016, %v2559, 0
      %v2577 = vsel %vm1016, %v2560, 0
      %v2580 = vsel %vm1016, %v2561, 0
      %v2583 = vsel %vm1016, %v2562, 0
      %v2586 = vsel %vm1016, %v2563, 0
      %v2589 = vsel %vm1016, %v2564, 0
      %v2592 = vsel %vm1016, %v2565, 0
      %v2595 = vsel %vm1016, %v2566, 0
      %v2598 = vsel %vm1016, %v2567, 0
      %v2601 = vsel %vm1016, %v2568, 0
      %v2604 = vsel %vm1016, %v2569, 0
      %v2607 = vsel %vm1016, %v2570, 0
      %v2610 = vsel %vm1466, %v2572, 0
      %2612 = vmatpush.msra.mxu0 0.0
      %2613 = vmatpush.msra.mxu0 0.0
      %2614 = vmatpush.msra.mxu0 0.0
      %2615 = vmatpush.msra.mxu0 0.0
      %2616 = vmatpush.msra.mxu0 0.0
      %2617 = vmatpush.msra.mxu0 0.0
      %2618 = vmatpush.msra.mxu0 0.0
      %2619 = vmatpush.msra.mxu0 0.0
      %2620 = vmatpush.msra.mxu0 0.0
      %2621 = vmatpush.msra.mxu0 0.0
      %2622 = vmatpush.msra.mxu0 0.0
      %2623 = vmatpush.msra.mxu0 0.0
      %2624 = vmatpush.msra.mxu0 0.0
      %2625 = vmatpush.msra.mxu0 0.0
      %2626 = vmatpush.msra.mxu0 0.0
      %2627 = vmatpush.msra.mxu0 %v2610
      %2628 = vmatmul.f32.gmra.mxu0 %v2574
      %v2629 = vpop.f32.mrf.mxu0
      %v2630 = vadd.f32 0.0, %v2629
      %2631 = vmatmul.f32.gmra.mxu0 %v2577
      %v2632 = vpop.f32.mrf.mxu0
      %v2633 = vadd.f32 0.0, %v2632
      %2634 = vmatmul.f32.gmra.mxu0 %v2580
      %v2635 = vpop.f32.mrf.mxu0
      %v2636 = vadd.f32 0.0, %v2635
      %2637 = vmatmul.f32.gmra.mxu0 %v2583
      %v2638 = vpop.f32.mrf.mxu0
      %v2639 = vadd.f32 0.0, %v2638
      %2640 = vmatmul.f32.gmra.mxu0 %v2586
      %v2641 = vpop.f32.mrf.mxu0
      %v2642 = vadd.f32 0.0, %v2641
      %2643 = vmatmul.f32.gmra.mxu0 %v2589
      %v2644 = vpop.f32.mrf.mxu0
      %v2645 = vadd.f32 0.0, %v2644
      %2646 = vmatmul.f32.gmra.mxu0 %v2592
      %v2647 = vpop.f32.mrf.mxu0
      %v2648 = vadd.f32 0.0, %v2647
      %2649 = vmatmul.f32.gmra.mxu0 %v2595
      %v2650 = vpop.f32.mrf.mxu0
      %v2651 = vadd.f32 0.0, %v2650
      %2652 = vmatmul.f32.gmra.mxu0 %v2598
      %v2653 = vpop.f32.mrf.mxu0
      %v2654 = vadd.f32 0.0, %v2653
      %2655 = vmatmul.f32.gmra.mxu0 %v2601
      %v2656 = vpop.f32.mrf.mxu0
      %v2657 = vadd.f32 0.0, %v2656
      %2658 = vmatmul.f32.gmra.mxu0 %v2604
      %v2659 = vpop.f32.mrf.mxu0
      %v2660 = vadd.f32 0.0, %v2659
      %2661 = vmatmul.f32.gmra.mxu0 %v2607
      %v2662 = vpop.f32.mrf.mxu0
      %v2663 = vadd.f32 0.0, %v2662
      %2664 = vdwg.mxu0
      %v2665 = vadd.f32 %v2547, %v2630
      %v2666 = vadd.f32 %v2548, %v2633
      %v2667 = vadd.f32 %v2549, %v2636
      %v2668 = vadd.f32 %v2550, %v2639
      %v2669 = vadd.f32 %v2551, %v2642
      %v2670 = vadd.f32 %v2552, %v2645
      %v2671 = vadd.f32 %v2553, %v2648
      %v2672 = vadd.f32 %v2554, %v2651
      %v2673 = vadd.f32 %v2555, %v2654
      %v2674 = vadd.f32 %v2556, %v2657
      %v2675 = vadd.f32 %v2557, %v2660
      %v2676 = vadd.f32 %v2558, %v2663
      %v2677 = vld [vmem:[#allocation4 + $0x19] sm:$0xff]
      %v2678 = vld [vmem:[#allocation4 + $0x21] sm:$0xff]
      %v2679 = vld [vmem:[#allocation4 + $0x29] sm:$0xff]
      %v2680 = vld [vmem:[#allocation4 + $0x31] sm:$0xff]
      %v2681 = vld [vmem:[#allocation4 + $0x39] sm:$0xff]
      %v2682 = vld [vmem:[#allocation4 + $0x41] sm:$0xff]
      %v2683 = vld [vmem:[#allocation4 + $0x49] sm:$0xff]
      %v2684 = vld [vmem:[#allocation4 + $0x51] sm:$0xff]
      %v2685 = vld [vmem:[#allocation4 + $0x59] sm:$0xff]
      %v2686 = vld [vmem:[#allocation4 + $0x61] sm:$0xff]
      %v2687 = vld [vmem:[#allocation4 + $0x69] sm:$0xff]
      %v2688 = vld [vmem:[#allocation4 + $0x71] sm:$0xff]
      %s2689 = scalar_lea.vmem %s3, 88
      %v2690 = vld [vmem:[%s2689] sm:$0x3f]
      %v2692 = vsel %vm1016, %v2677, 0
      %v2695 = vsel %vm1016, %v2678, 0
      %v2698 = vsel %vm1016, %v2679, 0
      %v2701 = vsel %vm1016, %v2680, 0
      %v2704 = vsel %vm1016, %v2681, 0
      %v2707 = vsel %vm1016, %v2682, 0
      %v2710 = vsel %vm1016, %v2683, 0
      %v2713 = vsel %vm1016, %v2684, 0
      %v2716 = vsel %vm1016, %v2685, 0
      %v2719 = vsel %vm1016, %v2686, 0
      %v2722 = vsel %vm1016, %v2687, 0
      %v2725 = vsel %vm1016, %v2688, 0
      %v2728 = vsel %vm1466, %v2690, 0
      %2730 = vmatpush.msra.mxu0 0.0
      %2731 = vmatpush.msra.mxu0 0.0
      %2732 = vmatpush.msra.mxu0 0.0
      %2733 = vmatpush.msra.mxu0 0.0
      %2734 = vmatpush.msra.mxu0 0.0
      %2735 = vmatpush.msra.mxu0 0.0
      %2736 = vmatpush.msra.mxu0 0.0
      %2737 = vmatpush.msra.mxu0 0.0
      %2738 = vmatpush.msra.mxu0 0.0
      %2739 = vmatpush.msra.mxu0 0.0
      %2740 = vmatpush.msra.mxu0 0.0
      %2741 = vmatpush.msra.mxu0 0.0
      %2742 = vmatpush.msra.mxu0 0.0
      %2743 = vmatpush.msra.mxu0 0.0
      %2744 = vmatpush.msra.mxu0 0.0
      %2745 = vmatpush.msra.mxu0 %v2728
      %2746 = vmatmul.f32.gmra.mxu0 %v2692
      %v2747 = vpop.f32.mrf.mxu0
      %v2748 = vadd.f32 0.0, %v2747
      %2749 = vmatmul.f32.gmra.mxu0 %v2695
      %v2750 = vpop.f32.mrf.mxu0
      %v2751 = vadd.f32 0.0, %v2750
      %2752 = vmatmul.f32.gmra.mxu0 %v2698
      %v2753 = vpop.f32.mrf.mxu0
      %v2754 = vadd.f32 0.0, %v2753
      %2755 = vmatmul.f32.gmra.mxu0 %v2701
      %v2756 = vpop.f32.mrf.mxu0
      %v2757 = vadd.f32 0.0, %v2756
      %2758 = vmatmul.f32.gmra.mxu0 %v2704
      %v2759 = vpop.f32.mrf.mxu0
      %v2760 = vadd.f32 0.0, %v2759
      %2761 = vmatmul.f32.gmra.mxu0 %v2707
      %v2762 = vpop.f32.mrf.mxu0
      %v2763 = vadd.f32 0.0, %v2762
      %2764 = vmatmul.f32.gmra.mxu0 %v2710
      %v2765 = vpop.f32.mrf.mxu0
      %v2766 = vadd.f32 0.0, %v2765
      %2767 = vmatmul.f32.gmra.mxu0 %v2713
      %v2768 = vpop.f32.mrf.mxu0
      %v2769 = vadd.f32 0.0, %v2768
      %2770 = vmatmul.f32.gmra.mxu0 %v2716
      %v2771 = vpop.f32.mrf.mxu0
      %v2772 = vadd.f32 0.0, %v2771
      %2773 = vmatmul.f32.gmra.mxu0 %v2719
      %v2774 = vpop.f32.mrf.mxu0
      %v2775 = vadd.f32 0.0, %v2774
      %2776 = vmatmul.f32.gmra.mxu0 %v2722
      %v2777 = vpop.f32.mrf.mxu0
      %v2778 = vadd.f32 0.0, %v2777
      %2779 = vmatmul.f32.gmra.mxu0 %v2725
      %v2780 = vpop.f32.mrf.mxu0
      %v2781 = vadd.f32 0.0, %v2780
      %2782 = vdwg.mxu0
      %v2783 = vadd.f32 %v2665, %v2748
      %v2784 = vadd.f32 %v2666, %v2751
      %v2785 = vadd.f32 %v2667, %v2754
      %v2786 = vadd.f32 %v2668, %v2757
      %v2787 = vadd.f32 %v2669, %v2760
      %v2788 = vadd.f32 %v2670, %v2763
      %v2789 = vadd.f32 %v2671, %v2766
      %v2790 = vadd.f32 %v2672, %v2769
      %v2791 = vadd.f32 %v2673, %v2772
      %v2792 = vadd.f32 %v2674, %v2775
      %v2793 = vadd.f32 %v2675, %v2778
      %v2794 = vadd.f32 %v2676, %v2781
      %v2795 = vld [vmem:[#allocation4 + $0x1a] sm:$0xff]
      %v2796 = vld [vmem:[#allocation4 + $0x22] sm:$0xff]
      %v2797 = vld [vmem:[#allocation4 + $0x2a] sm:$0xff]
      %v2798 = vld [vmem:[#allocation4 + $0x32] sm:$0xff]
      %v2799 = vld [vmem:[#allocation4 + $0x3a] sm:$0xff]
      %v2800 = vld [vmem:[#allocation4 + $0x42] sm:$0xff]
      %v2801 = vld [vmem:[#allocation4 + $0x4a] sm:$0xff]
      %v2802 = vld [vmem:[#allocation4 + $0x52] sm:$0xff]
      %v2803 = vld [vmem:[#allocation4 + $0x5a] sm:$0xff]
      %v2804 = vld [vmem:[#allocation4 + $0x62] sm:$0xff]
      %v2805 = vld [vmem:[#allocation4 + $0x6a] sm:$0xff]
      %v2806 = vld [vmem:[#allocation4 + $0x72] sm:$0xff]
      %s2807 = scalar_lea.vmem %s3, 96
      %v2808 = vld [vmem:[%s2807] sm:$0x3f]
      %v2810 = vsel %vm1016, %v2795, 0
      %v2813 = vsel %vm1016, %v2796, 0
      %v2816 = vsel %vm1016, %v2797, 0
      %v2819 = vsel %vm1016, %v2798, 0
      %v2822 = vsel %vm1016, %v2799, 0
      %v2825 = vsel %vm1016, %v2800, 0
      %v2828 = vsel %vm1016, %v2801, 0
      %v2831 = vsel %vm1016, %v2802, 0
      %v2834 = vsel %vm1016, %v2803, 0
      %v2837 = vsel %vm1016, %v2804, 0
      %v2840 = vsel %vm1016, %v2805, 0
      %v2843 = vsel %vm1016, %v2806, 0
      %v2846 = vsel %vm1466, %v2808, 0
      %2848 = vmatpush.msra.mxu0 0.0
      %2849 = vmatpush.msra.mxu0 0.0
      %2850 = vmatpush.msra.mxu0 0.0
      %2851 = vmatpush.msra.mxu0 0.0
      %2852 = vmatpush.msra.mxu0 0.0
      %2853 = vmatpush.msra.mxu0 0.0
      %2854 = vmatpush.msra.mxu0 0.0
      %2855 = vmatpush.msra.mxu0 0.0
      %2856 = vmatpush.msra.mxu0 0.0
      %2857 = vmatpush.msra.mxu0 0.0
      %2858 = vmatpush.msra.mxu0 0.0
      %2859 = vmatpush.msra.mxu0 0.0
      %2860 = vmatpush.msra.mxu0 0.0
      %2861 = vmatpush.msra.mxu0 0.0
      %2862 = vmatpush.msra.mxu0 0.0
      %2863 = vmatpush.msra.mxu0 %v2846
      %2864 = vmatmul.f32.gmra.mxu0 %v2810
      %v2865 = vpop.f32.mrf.mxu0
      %v2866 = vadd.f32 0.0, %v2865
      %2867 = vmatmul.f32.gmra.mxu0 %v2813
      %v2868 = vpop.f32.mrf.mxu0
      %v2869 = vadd.f32 0.0, %v2868
      %2870 = vmatmul.f32.gmra.mxu0 %v2816
      %v2871 = vpop.f32.mrf.mxu0
      %v2872 = vadd.f32 0.0, %v2871
      %2873 = vmatmul.f32.gmra.mxu0 %v2819
      %v2874 = vpop.f32.mrf.mxu0
      %v2875 = vadd.f32 0.0, %v2874
      %2876 = vmatmul.f32.gmra.mxu0 %v2822
      %v2877 = vpop.f32.mrf.mxu0
      %v2878 = vadd.f32 0.0, %v2877
      %2879 = vmatmul.f32.gmra.mxu0 %v2825
      %v2880 = vpop.f32.mrf.mxu0
      %v2881 = vadd.f32 0.0, %v2880
      %2882 = vmatmul.f32.gmra.mxu0 %v2828
      %v2883 = vpop.f32.mrf.mxu0
      %v2884 = vadd.f32 0.0, %v2883
      %2885 = vmatmul.f32.gmra.mxu0 %v2831
      %v2886 = vpop.f32.mrf.mxu0
      %v2887 = vadd.f32 0.0, %v2886
      %2888 = vmatmul.f32.gmra.mxu0 %v2834
      %v2889 = vpop.f32.mrf.mxu0
      %v2890 = vadd.f32 0.0, %v2889
      %2891 = vmatmul.f32.gmra.mxu0 %v2837
      %v2892 = vpop.f32.mrf.mxu0
      %v2893 = vadd.f32 0.0, %v2892
      %2894 = vmatmul.f32.gmra.mxu0 %v2840
      %v2895 = vpop.f32.mrf.mxu0
      %v2896 = vadd.f32 0.0, %v2895
      %2897 = vmatmul.f32.gmra.mxu0 %v2843
      %v2898 = vpop.f32.mrf.mxu0
      %v2899 = vadd.f32 0.0, %v2898
      %2900 = vdwg.mxu0
      %v2901 = vadd.f32 %v2783, %v2866
      %v2902 = vadd.f32 %v2784, %v2869
      %v2903 = vadd.f32 %v2785, %v2872
      %v2904 = vadd.f32 %v2786, %v2875
      %v2905 = vadd.f32 %v2787, %v2878
      %v2906 = vadd.f32 %v2788, %v2881
      %v2907 = vadd.f32 %v2789, %v2884
      %v2908 = vadd.f32 %v2790, %v2887
      %v2909 = vadd.f32 %v2791, %v2890
      %v2910 = vadd.f32 %v2792, %v2893
      %v2911 = vadd.f32 %v2793, %v2896
      %v2912 = vadd.f32 %v2794, %v2899
      %v2913 = vld [vmem:[#allocation4 + $0x1b] sm:$0xff]
      %v2914 = vld [vmem:[#allocation4 + $0x23] sm:$0xff]
      %v2915 = vld [vmem:[#allocation4 + $0x2b] sm:$0xff]
      %v2916 = vld [vmem:[#allocation4 + $0x33] sm:$0xff]
      %v2917 = vld [vmem:[#allocation4 + $0x3b] sm:$0xff]
      %v2918 = vld [vmem:[#allocation4 + $0x43] sm:$0xff]
      %v2919 = vld [vmem:[#allocation4 + $0x4b] sm:$0xff]
      %v2920 = vld [vmem:[#allocation4 + $0x53] sm:$0xff]
      %v2921 = vld [vmem:[#allocation4 + $0x5b] sm:$0xff]
      %v2922 = vld [vmem:[#allocation4 + $0x63] sm:$0xff]
      %v2923 = vld [vmem:[#allocation4 + $0x6b] sm:$0xff]
      %v2924 = vld [vmem:[#allocation4 + $0x73] sm:$0xff]
      %s2925 = scalar_lea.vmem %s3, 104
      %v2926 = vld [vmem:[%s2925] sm:$0x3f]
      %v2928 = vsel %vm1016, %v2913, 0
      %v2931 = vsel %vm1016, %v2914, 0
      %v2934 = vsel %vm1016, %v2915, 0
      %v2937 = vsel %vm1016, %v2916, 0
      %v2940 = vsel %vm1016, %v2917, 0
      %v2943 = vsel %vm1016, %v2918, 0
      %v2946 = vsel %vm1016, %v2919, 0
      %v2949 = vsel %vm1016, %v2920, 0
      %v2952 = vsel %vm1016, %v2921, 0
      %v2955 = vsel %vm1016, %v2922, 0
      %v2958 = vsel %vm1016, %v2923, 0
      %v2961 = vsel %vm1016, %v2924, 0
      %v2964 = vsel %vm1466, %v2926, 0
      %2966 = vmatpush.msra.mxu0 0.0
      %2967 = vmatpush.msra.mxu0 0.0
      %2968 = vmatpush.msra.mxu0 0.0
      %2969 = vmatpush.msra.mxu0 0.0
      %2970 = vmatpush.msra.mxu0 0.0
      %2971 = vmatpush.msra.mxu0 0.0
      %2972 = vmatpush.msra.mxu0 0.0
      %2973 = vmatpush.msra.mxu0 0.0
      %2974 = vmatpush.msra.mxu0 0.0
      %2975 = vmatpush.msra.mxu0 0.0
      %2976 = vmatpush.msra.mxu0 0.0
      %2977 = vmatpush.msra.mxu0 0.0
      %2978 = vmatpush.msra.mxu0 0.0
      %2979 = vmatpush.msra.mxu0 0.0
      %2980 = vmatpush.msra.mxu0 0.0
      %2981 = vmatpush.msra.mxu0 %v2964
      %2982 = vmatmul.f32.gmra.mxu0 %v2928
      %v2983 = vpop.f32.mrf.mxu0
      %v2984 = vadd.f32 0.0, %v2983
      %2985 = vmatmul.f32.gmra.mxu0 %v2931
      %v2986 = vpop.f32.mrf.mxu0
      %v2987 = vadd.f32 0.0, %v2986
      %2988 = vmatmul.f32.gmra.mxu0 %v2934
      %v2989 = vpop.f32.mrf.mxu0
      %v2990 = vadd.f32 0.0, %v2989
      %2991 = vmatmul.f32.gmra.mxu0 %v2937
      %v2992 = vpop.f32.mrf.mxu0
      %v2993 = vadd.f32 0.0, %v2992
      %2994 = vmatmul.f32.gmra.mxu0 %v2940
      %v2995 = vpop.f32.mrf.mxu0
      %v2996 = vadd.f32 0.0, %v2995
      %2997 = vmatmul.f32.gmra.mxu0 %v2943
      %v2998 = vpop.f32.mrf.mxu0
      %v2999 = vadd.f32 0.0, %v2998
      %3000 = vmatmul.f32.gmra.mxu0 %v2946
      %v3001 = vpop.f32.mrf.mxu0
      %v3002 = vadd.f32 0.0, %v3001
      %3003 = vmatmul.f32.gmra.mxu0 %v2949
      %v3004 = vpop.f32.mrf.mxu0
      %v3005 = vadd.f32 0.0, %v3004
      %3006 = vmatmul.f32.gmra.mxu0 %v2952
      %v3007 = vpop.f32.mrf.mxu0
      %v3008 = vadd.f32 0.0, %v3007
      %3009 = vmatmul.f32.gmra.mxu0 %v2955
      %v3010 = vpop.f32.mrf.mxu0
      %v3011 = vadd.f32 0.0, %v3010
      %3012 = vmatmul.f32.gmra.mxu0 %v2958
      %v3013 = vpop.f32.mrf.mxu0
      %v3014 = vadd.f32 0.0, %v3013
      %3015 = vmatmul.f32.gmra.mxu0 %v2961
      %v3016 = vpop.f32.mrf.mxu0
      %v3017 = vadd.f32 0.0, %v3016
      %3018 = vdwg.mxu0
      %v3019 = vadd.f32 %v2901, %v2984
      %v3020 = vadd.f32 %v2902, %v2987
      %v3021 = vadd.f32 %v2903, %v2990
      %v3022 = vadd.f32 %v2904, %v2993
      %v3023 = vadd.f32 %v2905, %v2996
      %v3024 = vadd.f32 %v2906, %v2999
      %v3025 = vadd.f32 %v2907, %v3002
      %v3026 = vadd.f32 %v2908, %v3005
      %v3027 = vadd.f32 %v2909, %v3008
      %v3028 = vadd.f32 %v2910, %v3011
      %v3029 = vadd.f32 %v2911, %v3014
      %v3030 = vadd.f32 %v2912, %v3017
      %v3031 = vld [vmem:[#allocation4 + $0x1c] sm:$0xff]
      %v3032 = vld [vmem:[#allocation4 + $0x24] sm:$0xff]
      %v3033 = vld [vmem:[#allocation4 + $0x2c] sm:$0xff]
      %v3034 = vld [vmem:[#allocation4 + $0x34] sm:$0xff]
      %v3035 = vld [vmem:[#allocation4 + $0x3c] sm:$0xff]
      %v3036 = vld [vmem:[#allocation4 + $0x44] sm:$0xff]
      %v3037 = vld [vmem:[#allocation4 + $0x4c] sm:$0xff]
      %v3038 = vld [vmem:[#allocation4 + $0x54] sm:$0xff]
      %v3039 = vld [vmem:[#allocation4 + $0x5c] sm:$0xff]
      %v3040 = vld [vmem:[#allocation4 + $0x64] sm:$0xff]
      %v3041 = vld [vmem:[#allocation4 + $0x6c] sm:$0xff]
      %v3042 = vld [vmem:[#allocation4 + $0x74] sm:$0xff]
      %s3043 = scalar_lea.vmem %s3, 112
      %v3044 = vld [vmem:[%s3043] sm:$0x3f]
      %v3046 = vsel %vm1016, %v3031, 0
      %v3049 = vsel %vm1016, %v3032, 0
      %v3052 = vsel %vm1016, %v3033, 0
      %v3055 = vsel %vm1016, %v3034, 0
      %v3058 = vsel %vm1016, %v3035, 0
      %v3061 = vsel %vm1016, %v3036, 0
      %v3064 = vsel %vm1016, %v3037, 0
      %v3067 = vsel %vm1016, %v3038, 0
      %v3070 = vsel %vm1016, %v3039, 0
      %v3073 = vsel %vm1016, %v3040, 0
      %v3076 = vsel %vm1016, %v3041, 0
      %v3079 = vsel %vm1016, %v3042, 0
      %v3082 = vsel %vm1466, %v3044, 0
      %3084 = vmatpush.msra.mxu0 0.0
      %3085 = vmatpush.msra.mxu0 0.0
      %3086 = vmatpush.msra.mxu0 0.0
      %3087 = vmatpush.msra.mxu0 0.0
      %3088 = vmatpush.msra.mxu0 0.0
      %3089 = vmatpush.msra.mxu0 0.0
      %3090 = vmatpush.msra.mxu0 0.0
      %3091 = vmatpush.msra.mxu0 0.0
      %3092 = vmatpush.msra.mxu0 0.0
      %3093 = vmatpush.msra.mxu0 0.0
      %3094 = vmatpush.msra.mxu0 0.0
      %3095 = vmatpush.msra.mxu0 0.0
      %3096 = vmatpush.msra.mxu0 0.0
      %3097 = vmatpush.msra.mxu0 0.0
      %3098 = vmatpush.msra.mxu0 0.0
      %3099 = vmatpush.msra.mxu0 %v3082
      %3100 = vmatmul.f32.gmra.mxu0 %v3046
      %v3101 = vpop.f32.mrf.mxu0
      %v3102 = vadd.f32 0.0, %v3101
      %3103 = vmatmul.f32.gmra.mxu0 %v3049
      %v3104 = vpop.f32.mrf.mxu0
      %v3105 = vadd.f32 0.0, %v3104
      %3106 = vmatmul.f32.gmra.mxu0 %v3052
      %v3107 = vpop.f32.mrf.mxu0
      %v3108 = vadd.f32 0.0, %v3107
      %3109 = vmatmul.f32.gmra.mxu0 %v3055
      %v3110 = vpop.f32.mrf.mxu0
      %v3111 = vadd.f32 0.0, %v3110
      %3112 = vmatmul.f32.gmra.mxu0 %v3058
      %v3113 = vpop.f32.mrf.mxu0
      %v3114 = vadd.f32 0.0, %v3113
      %3115 = vmatmul.f32.gmra.mxu0 %v3061
      %v3116 = vpop.f32.mrf.mxu0
      %v3117 = vadd.f32 0.0, %v3116
      %3118 = vmatmul.f32.gmra.mxu0 %v3064
      %v3119 = vpop.f32.mrf.mxu0
      %v3120 = vadd.f32 0.0, %v3119
      %3121 = vmatmul.f32.gmra.mxu0 %v3067
      %v3122 = vpop.f32.mrf.mxu0
      %v3123 = vadd.f32 0.0, %v3122
      %3124 = vmatmul.f32.gmra.mxu0 %v3070
      %v3125 = vpop.f32.mrf.mxu0
      %v3126 = vadd.f32 0.0, %v3125
      %3127 = vmatmul.f32.gmra.mxu0 %v3073
      %v3128 = vpop.f32.mrf.mxu0
      %v3129 = vadd.f32 0.0, %v3128
      %3130 = vmatmul.f32.gmra.mxu0 %v3076
      %v3131 = vpop.f32.mrf.mxu0
      %v3132 = vadd.f32 0.0, %v3131
      %3133 = vmatmul.f32.gmra.mxu0 %v3079
      %v3134 = vpop.f32.mrf.mxu0
      %v3135 = vadd.f32 0.0, %v3134
      %3136 = vdwg.mxu0
      %v3137 = vadd.f32 %v3019, %v3102
      %v3138 = vadd.f32 %v3020, %v3105
      %v3139 = vadd.f32 %v3021, %v3108
      %v3140 = vadd.f32 %v3022, %v3111
      %v3141 = vadd.f32 %v3023, %v3114
      %v3142 = vadd.f32 %v3024, %v3117
      %v3143 = vadd.f32 %v3025, %v3120
      %v3144 = vadd.f32 %v3026, %v3123
      %v3145 = vadd.f32 %v3027, %v3126
      %v3146 = vadd.f32 %v3028, %v3129
      %v3147 = vadd.f32 %v3029, %v3132
      %v3148 = vadd.f32 %v3030, %v3135
      %v3149 = vld [vmem:[#allocation4 + $0x24] sm:$0xff]
      %v3150 = vld [vmem:[#allocation4 + $0x2c] sm:$0xff]
      %v3151 = vld [vmem:[#allocation4 + $0x34] sm:$0xff]
      %v3152 = vld [vmem:[#allocation4 + $0x3c] sm:$0xff]
      %v3153 = vld [vmem:[#allocation4 + $0x44] sm:$0xff]
      %v3154 = vld [vmem:[#allocation4 + $0x4c] sm:$0xff]
      %v3155 = vld [vmem:[#allocation4 + $0x54] sm:$0xff]
      %v3156 = vld [vmem:[#allocation4 + $0x5c] sm:$0xff]
      %v3157 = vld [vmem:[#allocation4 + $0x64] sm:$0xff]
      %v3158 = vld [vmem:[#allocation4 + $0x6c] sm:$0xff]
      %v3159 = vld [vmem:[#allocation4 + $0x74] sm:$0xff]
      %v3160 = vld [vmem:[#allocation4 + $0x7c] sm:$0xff]
      %s3161 = scalar_lea.vmem %s3, 120
      %v3162 = vld [vmem:[%s3161] sm:$0x3f]
      %v3164 = vsel %vm1016, %v3149, 0
      %v3167 = vsel %vm1016, %v3150, 0
      %v3170 = vsel %vm1016, %v3151, 0
      %v3173 = vsel %vm1016, %v3152, 0
      %v3176 = vsel %vm1016, %v3153, 0
      %v3179 = vsel %vm1016, %v3154, 0
      %v3182 = vsel %vm1016, %v3155, 0
      %v3185 = vsel %vm1016, %v3156, 0
      %v3188 = vsel %vm1016, %v3157, 0
      %v3191 = vsel %vm1016, %v3158, 0
      %v3194 = vsel %vm1016, %v3159, 0
      %v3197 = vsel %vm1016, %v3160, 0
      %v3200 = vsel %vm1466, %v3162, 0
      %3202 = vmatpush.msra.mxu0 0.0
      %3203 = vmatpush.msra.mxu0 0.0
      %3204 = vmatpush.msra.mxu0 0.0
      %3205 = vmatpush.msra.mxu0 0.0
      %3206 = vmatpush.msra.mxu0 0.0
      %3207 = vmatpush.msra.mxu0 0.0
      %3208 = vmatpush.msra.mxu0 0.0
      %3209 = vmatpush.msra.mxu0 0.0
      %3210 = vmatpush.msra.mxu0 0.0
      %3211 = vmatpush.msra.mxu0 0.0
      %3212 = vmatpush.msra.mxu0 0.0
      %3213 = vmatpush.msra.mxu0 0.0
      %3214 = vmatpush.msra.mxu0 0.0
      %3215 = vmatpush.msra.mxu0 0.0
      %3216 = vmatpush.msra.mxu0 0.0
      %3217 = vmatpush.msra.mxu0 %v3200
      %3218 = vmatmul.f32.gmra.mxu0 %v3164
      %v3219 = vpop.f32.mrf.mxu0
      %v3220 = vadd.f32 0.0, %v3219
      %3221 = vmatmul.f32.gmra.mxu0 %v3167
      %v3222 = vpop.f32.mrf.mxu0
      %v3223 = vadd.f32 0.0, %v3222
      %3224 = vmatmul.f32.gmra.mxu0 %v3170
      %v3225 = vpop.f32.mrf.mxu0
      %v3226 = vadd.f32 0.0, %v3225
      %3227 = vmatmul.f32.gmra.mxu0 %v3173
      %v3228 = vpop.f32.mrf.mxu0
      %v3229 = vadd.f32 0.0, %v3228
      %3230 = vmatmul.f32.gmra.mxu0 %v3176
      %v3231 = vpop.f32.mrf.mxu0
      %v3232 = vadd.f32 0.0, %v3231
      %3233 = vmatmul.f32.gmra.mxu0 %v3179
      %v3234 = vpop.f32.mrf.mxu0
      %v3235 = vadd.f32 0.0, %v3234
      %3236 = vmatmul.f32.gmra.mxu0 %v3182
      %v3237 = vpop.f32.mrf.mxu0
      %v3238 = vadd.f32 0.0, %v3237
      %3239 = vmatmul.f32.gmra.mxu0 %v3185
      %v3240 = vpop.f32.mrf.mxu0
      %v3241 = vadd.f32 0.0, %v3240
      %3242 = vmatmul.f32.gmra.mxu0 %v3188
      %v3243 = vpop.f32.mrf.mxu0
      %v3244 = vadd.f32 0.0, %v3243
      %3245 = vmatmul.f32.gmra.mxu0 %v3191
      %v3246 = vpop.f32.mrf.mxu0
      %v3247 = vadd.f32 0.0, %v3246
      %3248 = vmatmul.f32.gmra.mxu0 %v3194
      %v3249 = vpop.f32.mrf.mxu0
      %v3250 = vadd.f32 0.0, %v3249
      %3251 = vmatmul.f32.gmra.mxu0 %v3197
      %v3252 = vpop.f32.mrf.mxu0
      %v3253 = vadd.f32 0.0, %v3252
      %3254 = vdwg.mxu0
      %v3255 = vadd.f32 %v3137, %v3220
      %v3256 = vadd.f32 %v3138, %v3223
      %v3257 = vadd.f32 %v3139, %v3226
      %v3258 = vadd.f32 %v3140, %v3229
      %v3259 = vadd.f32 %v3141, %v3232
      %v3260 = vadd.f32 %v3142, %v3235
      %v3261 = vadd.f32 %v3143, %v3238
      %v3262 = vadd.f32 %v3144, %v3241
      %v3263 = vadd.f32 %v3145, %v3244
      %v3264 = vadd.f32 %v3146, %v3247
      %v3265 = vadd.f32 %v3147, %v3250
      %v3266 = vadd.f32 %v3148, %v3253
      %v3267 = vld [vmem:[#allocation4 + $0x25] sm:$0xff]
      %v3268 = vld [vmem:[#allocation4 + $0x2d] sm:$0xff]
      %v3269 = vld [vmem:[#allocation4 + $0x35] sm:$0xff]
      %v3270 = vld [vmem:[#allocation4 + $0x3d] sm:$0xff]
      %v3271 = vld [vmem:[#allocation4 + $0x45] sm:$0xff]
      %v3272 = vld [vmem:[#allocation4 + $0x4d] sm:$0xff]
      %v3273 = vld [vmem:[#allocation4 + $0x55] sm:$0xff]
      %v3274 = vld [vmem:[#allocation4 + $0x5d] sm:$0xff]
      %v3275 = vld [vmem:[#allocation4 + $0x65] sm:$0xff]
      %v3276 = vld [vmem:[#allocation4 + $0x6d] sm:$0xff]
      %v3277 = vld [vmem:[#allocation4 + $0x75] sm:$0xff]
      %v3278 = vld [vmem:[#allocation4 + $0x7d] sm:$0xff]
      %s3279 = scalar_lea.vmem %s3, 128
      %v3280 = vld [vmem:[%s3279] sm:$0x3f]
      %v3282 = vsel %vm1016, %v3267, 0
      %v3285 = vsel %vm1016, %v3268, 0
      %v3288 = vsel %vm1016, %v3269, 0
      %v3291 = vsel %vm1016, %v3270, 0
      %v3294 = vsel %vm1016, %v3271, 0
      %v3297 = vsel %vm1016, %v3272, 0
      %v3300 = vsel %vm1016, %v3273, 0
      %v3303 = vsel %vm1016, %v3274, 0
      %v3306 = vsel %vm1016, %v3275, 0
      %v3309 = vsel %vm1016, %v3276, 0
      %v3312 = vsel %vm1016, %v3277, 0
      %v3315 = vsel %vm1016, %v3278, 0
      %v3318 = vsel %vm1466, %v3280, 0
      %3320 = vmatpush.msra.mxu0 0.0
      %3321 = vmatpush.msra.mxu0 0.0
      %3322 = vmatpush.msra.mxu0 0.0
      %3323 = vmatpush.msra.mxu0 0.0
      %3324 = vmatpush.msra.mxu0 0.0
      %3325 = vmatpush.msra.mxu0 0.0
      %3326 = vmatpush.msra.mxu0 0.0
      %3327 = vmatpush.msra.mxu0 0.0
      %3328 = vmatpush.msra.mxu0 0.0
      %3329 = vmatpush.msra.mxu0 0.0
      %3330 = vmatpush.msra.mxu0 0.0
      %3331 = vmatpush.msra.mxu0 0.0
      %3332 = vmatpush.msra.mxu0 0.0
      %3333 = vmatpush.msra.mxu0 0.0
      %3334 = vmatpush.msra.mxu0 0.0
      %3335 = vmatpush.msra.mxu0 %v3318
      %3336 = vmatmul.f32.gmra.mxu0 %v3282
      %v3337 = vpop.f32.mrf.mxu0
      %v3338 = vadd.f32 0.0, %v3337
      %3339 = vmatmul.f32.gmra.mxu0 %v3285
      %v3340 = vpop.f32.mrf.mxu0
      %v3341 = vadd.f32 0.0, %v3340
      %3342 = vmatmul.f32.gmra.mxu0 %v3288
      %v3343 = vpop.f32.mrf.mxu0
      %v3344 = vadd.f32 0.0, %v3343
      %3345 = vmatmul.f32.gmra.mxu0 %v3291
      %v3346 = vpop.f32.mrf.mxu0
      %v3347 = vadd.f32 0.0, %v3346
      %3348 = vmatmul.f32.gmra.mxu0 %v3294
      %v3349 = vpop.f32.mrf.mxu0
      %v3350 = vadd.f32 0.0, %v3349
      %3351 = vmatmul.f32.gmra.mxu0 %v3297
      %v3352 = vpop.f32.mrf.mxu0
      %v3353 = vadd.f32 0.0, %v3352
      %3354 = vmatmul.f32.gmra.mxu0 %v3300
      %v3355 = vpop.f32.mrf.mxu0
      %v3356 = vadd.f32 0.0, %v3355
      %3357 = vmatmul.f32.gmra.mxu0 %v3303
      %v3358 = vpop.f32.mrf.mxu0
      %v3359 = vadd.f32 0.0, %v3358
      %3360 = vmatmul.f32.gmra.mxu0 %v3306
      %v3361 = vpop.f32.mrf.mxu0
      %v3362 = vadd.f32 0.0, %v3361
      %3363 = vmatmul.f32.gmra.mxu0 %v3309
      %v3364 = vpop.f32.mrf.mxu0
      %v3365 = vadd.f32 0.0, %v3364
      %3366 = vmatmul.f32.gmra.mxu0 %v3312
      %v3367 = vpop.f32.mrf.mxu0
      %v3368 = vadd.f32 0.0, %v3367
      %3369 = vmatmul.f32.gmra.mxu0 %v3315
      %v3370 = vpop.f32.mrf.mxu0
      %v3371 = vadd.f32 0.0, %v3370
      %3372 = vdwg.mxu0
      %v3373 = vadd.f32 %v3255, %v3338
      %v3374 = vadd.f32 %v3256, %v3341
      %v3375 = vadd.f32 %v3257, %v3344
      %v3376 = vadd.f32 %v3258, %v3347
      %v3377 = vadd.f32 %v3259, %v3350
      %v3378 = vadd.f32 %v3260, %v3353
      %v3379 = vadd.f32 %v3261, %v3356
      %v3380 = vadd.f32 %v3262, %v3359
      %v3381 = vadd.f32 %v3263, %v3362
      %v3382 = vadd.f32 %v3264, %v3365
      %v3383 = vadd.f32 %v3265, %v3368
      %v3384 = vadd.f32 %v3266, %v3371
      %v3385 = vld [vmem:[#allocation4 + $0x26] sm:$0xff]
      %v3386 = vld [vmem:[#allocation4 + $0x2e] sm:$0xff]
      %v3387 = vld [vmem:[#allocation4 + $0x36] sm:$0xff]
      %v3388 = vld [vmem:[#allocation4 + $0x3e] sm:$0xff]
      %v3389 = vld [vmem:[#allocation4 + $0x46] sm:$0xff]
      %v3390 = vld [vmem:[#allocation4 + $0x4e] sm:$0xff]
      %v3391 = vld [vmem:[#allocation4 + $0x56] sm:$0xff]
      %v3392 = vld [vmem:[#allocation4 + $0x5e] sm:$0xff]
      %v3393 = vld [vmem:[#allocation4 + $0x66] sm:$0xff]
      %v3394 = vld [vmem:[#allocation4 + $0x6e] sm:$0xff]
      %v3395 = vld [vmem:[#allocation4 + $0x76] sm:$0xff]
      %v3396 = vld [vmem:[#allocation4 + $0x7e] sm:$0xff]
      %s3397 = scalar_lea.vmem %s3, 136
      %v3398 = vld [vmem:[%s3397] sm:$0x3f]
      %v3400 = vsel %vm1016, %v3385, 0
      %v3403 = vsel %vm1016, %v3386, 0
      %v3406 = vsel %vm1016, %v3387, 0
      %v3409 = vsel %vm1016, %v3388, 0
      %v3412 = vsel %vm1016, %v3389, 0
      %v3415 = vsel %vm1016, %v3390, 0
      %v3418 = vsel %vm1016, %v3391, 0
      %v3421 = vsel %vm1016, %v3392, 0
      %v3424 = vsel %vm1016, %v3393, 0
      %v3427 = vsel %vm1016, %v3394, 0
      %v3430 = vsel %vm1016, %v3395, 0
      %v3433 = vsel %vm1016, %v3396, 0
      %v3436 = vsel %vm1466, %v3398, 0
      %3438 = vmatpush.msra.mxu0 0.0
      %3439 = vmatpush.msra.mxu0 0.0
      %3440 = vmatpush.msra.mxu0 0.0
      %3441 = vmatpush.msra.mxu0 0.0
      %3442 = vmatpush.msra.mxu0 0.0
      %3443 = vmatpush.msra.mxu0 0.0
      %3444 = vmatpush.msra.mxu0 0.0
      %3445 = vmatpush.msra.mxu0 0.0
      %3446 = vmatpush.msra.mxu0 0.0
      %3447 = vmatpush.msra.mxu0 0.0
      %3448 = vmatpush.msra.mxu0 0.0
      %3449 = vmatpush.msra.mxu0 0.0
      %3450 = vmatpush.msra.mxu0 0.0
      %3451 = vmatpush.msra.mxu0 0.0
      %3452 = vmatpush.msra.mxu0 0.0
      %3453 = vmatpush.msra.mxu0 %v3436
      %3454 = vmatmul.f32.gmra.mxu0 %v3400
      %v3455 = vpop.f32.mrf.mxu0
      %v3456 = vadd.f32 0.0, %v3455
      %3457 = vmatmul.f32.gmra.mxu0 %v3403
      %v3458 = vpop.f32.mrf.mxu0
      %v3459 = vadd.f32 0.0, %v3458
      %3460 = vmatmul.f32.gmra.mxu0 %v3406
      %v3461 = vpop.f32.mrf.mxu0
      %v3462 = vadd.f32 0.0, %v3461
      %3463 = vmatmul.f32.gmra.mxu0 %v3409
      %v3464 = vpop.f32.mrf.mxu0
      %v3465 = vadd.f32 0.0, %v3464
      %3466 = vmatmul.f32.gmra.mxu0 %v3412
      %v3467 = vpop.f32.mrf.mxu0
      %v3468 = vadd.f32 0.0, %v3467
      %3469 = vmatmul.f32.gmra.mxu0 %v3415
      %v3470 = vpop.f32.mrf.mxu0
      %v3471 = vadd.f32 0.0, %v3470
      %3472 = vmatmul.f32.gmra.mxu0 %v3418
      %v3473 = vpop.f32.mrf.mxu0
      %v3474 = vadd.f32 0.0, %v3473
      %3475 = vmatmul.f32.gmra.mxu0 %v3421
      %v3476 = vpop.f32.mrf.mxu0
      %v3477 = vadd.f32 0.0, %v3476
      %3478 = vmatmul.f32.gmra.mxu0 %v3424
      %v3479 = vpop.f32.mrf.mxu0
      %v3480 = vadd.f32 0.0, %v3479
      %3481 = vmatmul.f32.gmra.mxu0 %v3427
      %v3482 = vpop.f32.mrf.mxu0
      %v3483 = vadd.f32 0.0, %v3482
      %3484 = vmatmul.f32.gmra.mxu0 %v3430
      %v3485 = vpop.f32.mrf.mxu0
      %v3486 = vadd.f32 0.0, %v3485
      %3487 = vmatmul.f32.gmra.mxu0 %v3433
      %v3488 = vpop.f32.mrf.mxu0
      %v3489 = vadd.f32 0.0, %v3488
      %3490 = vdwg.mxu0
      %v3491 = vadd.f32 %v3373, %v3456
      %v3492 = vadd.f32 %v3374, %v3459
      %v3493 = vadd.f32 %v3375, %v3462
      %v3494 = vadd.f32 %v3376, %v3465
      %v3495 = vadd.f32 %v3377, %v3468
      %v3496 = vadd.f32 %v3378, %v3471
      %v3497 = vadd.f32 %v3379, %v3474
      %v3498 = vadd.f32 %v3380, %v3477
      %v3499 = vadd.f32 %v3381, %v3480
      %v3500 = vadd.f32 %v3382, %v3483
      %v3501 = vadd.f32 %v3383, %v3486
      %v3502 = vadd.f32 %v3384, %v3489
      %v3503 = vld [vmem:[#allocation4 + $0x27] sm:$0xff]
      %v3504 = vld [vmem:[#allocation4 + $0x2f] sm:$0xff]
      %v3505 = vld [vmem:[#allocation4 + $0x37] sm:$0xff]
      %v3506 = vld [vmem:[#allocation4 + $0x3f] sm:$0xff]
      %v3507 = vld [vmem:[#allocation4 + $0x47] sm:$0xff]
      %v3508 = vld [vmem:[#allocation4 + $0x4f] sm:$0xff]
      %v3509 = vld [vmem:[#allocation4 + $0x57] sm:$0xff]
      %v3510 = vld [vmem:[#allocation4 + $0x5f] sm:$0xff]
      %v3511 = vld [vmem:[#allocation4 + $0x67] sm:$0xff]
      %v3512 = vld [vmem:[#allocation4 + $0x6f] sm:$0xff]
      %v3513 = vld [vmem:[#allocation4 + $0x77] sm:$0xff]
      %v3514 = vld [vmem:[#allocation4 + $0x7f] sm:$0xff]
      %s3515 = scalar_lea.vmem %s3, 144
      %v3516 = vld [vmem:[%s3515] sm:$0x3f]
      %v3518 = vsel %vm1016, %v3503, 0
      %v3521 = vsel %vm1016, %v3504, 0
      %v3524 = vsel %vm1016, %v3505, 0
      %v3527 = vsel %vm1016, %v3506, 0
      %v3530 = vsel %vm1016, %v3507, 0
      %v3533 = vsel %vm1016, %v3508, 0
      %v3536 = vsel %vm1016, %v3509, 0
      %v3539 = vsel %vm1016, %v3510, 0
      %v3542 = vsel %vm1016, %v3511, 0
      %v3545 = vsel %vm1016, %v3512, 0
      %v3548 = vsel %vm1016, %v3513, 0
      %v3551 = vsel %vm1016, %v3514, 0
      %v3554 = vsel %vm1466, %v3516, 0
      %3556 = vmatpush.msra.mxu0 0.0
      %3557 = vmatpush.msra.mxu0 0.0
      %3558 = vmatpush.msra.mxu0 0.0
      %3559 = vmatpush.msra.mxu0 0.0
      %3560 = vmatpush.msra.mxu0 0.0
      %3561 = vmatpush.msra.mxu0 0.0
      %3562 = vmatpush.msra.mxu0 0.0
      %3563 = vmatpush.msra.mxu0 0.0
      %3564 = vmatpush.msra.mxu0 0.0
      %3565 = vmatpush.msra.mxu0 0.0
      %3566 = vmatpush.msra.mxu0 0.0
      %3567 = vmatpush.msra.mxu0 0.0
      %3568 = vmatpush.msra.mxu0 0.0
      %3569 = vmatpush.msra.mxu0 0.0
      %3570 = vmatpush.msra.mxu0 0.0
      %3571 = vmatpush.msra.mxu0 %v3554
      %3572 = vmatmul.f32.gmra.mxu0 %v3518
      %v3573 = vpop.f32.mrf.mxu0
      %v3574 = vadd.f32 0.0, %v3573
      %3575 = vmatmul.f32.gmra.mxu0 %v3521
      %v3576 = vpop.f32.mrf.mxu0
      %v3577 = vadd.f32 0.0, %v3576
      %3578 = vmatmul.f32.gmra.mxu0 %v3524
      %v3579 = vpop.f32.mrf.mxu0
      %v3580 = vadd.f32 0.0, %v3579
      %3581 = vmatmul.f32.gmra.mxu0 %v3527
      %v3582 = vpop.f32.mrf.mxu0
      %v3583 = vadd.f32 0.0, %v3582
      %3584 = vmatmul.f32.gmra.mxu0 %v3530
      %v3585 = vpop.f32.mrf.mxu0
      %v3586 = vadd.f32 0.0, %v3585
      %3587 = vmatmul.f32.gmra.mxu0 %v3533
      %v3588 = vpop.f32.mrf.mxu0
      %v3589 = vadd.f32 0.0, %v3588
      %3590 = vmatmul.f32.gmra.mxu0 %v3536
      %v3591 = vpop.f32.mrf.mxu0
      %v3592 = vadd.f32 0.0, %v3591
      %3593 = vmatmul.f32.gmra.mxu0 %v3539
      %v3594 = vpop.f32.mrf.mxu0
      %v3595 = vadd.f32 0.0, %v3594
      %3596 = vmatmul.f32.gmra.mxu0 %v3542
      %v3597 = vpop.f32.mrf.mxu0
      %v3598 = vadd.f32 0.0, %v3597
      %3599 = vmatmul.f32.gmra.mxu0 %v3545
      %v3600 = vpop.f32.mrf.mxu0
      %v3601 = vadd.f32 0.0, %v3600
      %3602 = vmatmul.f32.gmra.mxu0 %v3548
      %v3603 = vpop.f32.mrf.mxu0
      %v3604 = vadd.f32 0.0, %v3603
      %3605 = vmatmul.f32.gmra.mxu0 %v3551
      %v3606 = vpop.f32.mrf.mxu0
      %v3607 = vadd.f32 0.0, %v3606
      %3608 = vdwg.mxu0
      %v3609 = vadd.f32 %v3491, %v3574
      %v3610 = vadd.f32 %v3492, %v3577
      %v3611 = vadd.f32 %v3493, %v3580
      %v3612 = vadd.f32 %v3494, %v3583
      %v3613 = vadd.f32 %v3495, %v3586
      %v3614 = vadd.f32 %v3496, %v3589
      %v3615 = vadd.f32 %v3497, %v3592
      %v3616 = vadd.f32 %v3498, %v3595
      %v3617 = vadd.f32 %v3499, %v3598
      %v3618 = vadd.f32 %v3500, %v3601
      %v3619 = vadd.f32 %v3501, %v3604
      %v3620 = vadd.f32 %v3502, %v3607
      %v3621 = vld [vmem:[#allocation4 + $0x28] sm:$0xff]
      %v3622 = vld [vmem:[#allocation4 + $0x30] sm:$0xff]
      %v3623 = vld [vmem:[#allocation4 + $0x38] sm:$0xff]
      %v3624 = vld [vmem:[#allocation4 + $0x40] sm:$0xff]
      %v3625 = vld [vmem:[#allocation4 + $0x48] sm:$0xff]
      %v3626 = vld [vmem:[#allocation4 + $0x50] sm:$0xff]
      %v3627 = vld [vmem:[#allocation4 + $0x58] sm:$0xff]
      %v3628 = vld [vmem:[#allocation4 + $0x60] sm:$0xff]
      %v3629 = vld [vmem:[#allocation4 + $0x68] sm:$0xff]
      %v3630 = vld [vmem:[#allocation4 + $0x70] sm:$0xff]
      %v3631 = vld [vmem:[#allocation4 + $0x78] sm:$0xff]
      %v3632 = vld [vmem:[#allocation4 + $0x80] sm:$0xff]
      %s3633 = scalar_lea.vmem %s3, 152
      %v3634 = vld [vmem:[%s3633] sm:$0x3f]
      %v3636 = vsel %vm1016, %v3621, 0
      %v3639 = vsel %vm1016, %v3622, 0
      %v3642 = vsel %vm1016, %v3623, 0
      %v3645 = vsel %vm1016, %v3624, 0
      %v3648 = vsel %vm1016, %v3625, 0
      %v3651 = vsel %vm1016, %v3626, 0
      %v3654 = vsel %vm1016, %v3627, 0
      %v3657 = vsel %vm1016, %v3628, 0
      %v3660 = vsel %vm1016, %v3629, 0
      %v3663 = vsel %vm1016, %v3630, 0
      %v3666 = vsel %vm1016, %v3631, 0
      %v3669 = vsel %vm1016, %v3632, 0
      %v3672 = vsel %vm1466, %v3634, 0
      %3674 = vmatpush.msra.mxu0 0.0
      %3675 = vmatpush.msra.mxu0 0.0
      %3676 = vmatpush.msra.mxu0 0.0
      %3677 = vmatpush.msra.mxu0 0.0
      %3678 = vmatpush.msra.mxu0 0.0
      %3679 = vmatpush.msra.mxu0 0.0
      %3680 = vmatpush.msra.mxu0 0.0
      %3681 = vmatpush.msra.mxu0 0.0
      %3682 = vmatpush.msra.mxu0 0.0
      %3683 = vmatpush.msra.mxu0 0.0
      %3684 = vmatpush.msra.mxu0 0.0
      %3685 = vmatpush.msra.mxu0 0.0
      %3686 = vmatpush.msra.mxu0 0.0
      %3687 = vmatpush.msra.mxu0 0.0
      %3688 = vmatpush.msra.mxu0 0.0
      %3689 = vmatpush.msra.mxu0 %v3672
      %3690 = vmatmul.f32.gmra.mxu0 %v3636
      %v3691 = vpop.f32.mrf.mxu0
      %v3692 = vadd.f32 0.0, %v3691
      %3693 = vmatmul.f32.gmra.mxu0 %v3639
      %v3694 = vpop.f32.mrf.mxu0
      %v3695 = vadd.f32 0.0, %v3694
      %3696 = vmatmul.f32.gmra.mxu0 %v3642
      %v3697 = vpop.f32.mrf.mxu0
      %v3698 = vadd.f32 0.0, %v3697
      %3699 = vmatmul.f32.gmra.mxu0 %v3645
      %v3700 = vpop.f32.mrf.mxu0
      %v3701 = vadd.f32 0.0, %v3700
      %3702 = vmatmul.f32.gmra.mxu0 %v3648
      %v3703 = vpop.f32.mrf.mxu0
      %v3704 = vadd.f32 0.0, %v3703
      %3705 = vmatmul.f32.gmra.mxu0 %v3651
      %v3706 = vpop.f32.mrf.mxu0
      %v3707 = vadd.f32 0.0, %v3706
      %3708 = vmatmul.f32.gmra.mxu0 %v3654
      %v3709 = vpop.f32.mrf.mxu0
      %v3710 = vadd.f32 0.0, %v3709
      %3711 = vmatmul.f32.gmra.mxu0 %v3657
      %v3712 = vpop.f32.mrf.mxu0
      %v3713 = vadd.f32 0.0, %v3712
      %3714 = vmatmul.f32.gmra.mxu0 %v3660
      %v3715 = vpop.f32.mrf.mxu0
      %v3716 = vadd.f32 0.0, %v3715
      %3717 = vmatmul.f32.gmra.mxu0 %v3663
      %v3718 = vpop.f32.mrf.mxu0
      %v3719 = vadd.f32 0.0, %v3718
      %3720 = vmatmul.f32.gmra.mxu0 %v3666
      %v3721 = vpop.f32.mrf.mxu0
      %v3722 = vadd.f32 0.0, %v3721
      %3723 = vmatmul.f32.gmra.mxu0 %v3669
      %v3724 = vpop.f32.mrf.mxu0
      %v3725 = vadd.f32 0.0, %v3724
      %3726 = vdwg.mxu0
      %v3727 = vadd.f32 %v3609, %v3692
      %v3728 = vadd.f32 %v3610, %v3695
      %v3729 = vadd.f32 %v3611, %v3698
      %v3730 = vadd.f32 %v3612, %v3701
      %v3731 = vadd.f32 %v3613, %v3704
      %v3732 = vadd.f32 %v3614, %v3707
      %v3733 = vadd.f32 %v3615, %v3710
      %v3734 = vadd.f32 %v3616, %v3713
      %v3735 = vadd.f32 %v3617, %v3716
      %v3736 = vadd.f32 %v3618, %v3719
      %v3737 = vadd.f32 %v3619, %v3722
      %v3738 = vadd.f32 %v3620, %v3725
      %v3739 = vld [vmem:[#allocation4 + $0x30] sm:$0xff]
      %v3740 = vld [vmem:[#allocation4 + $0x38] sm:$0xff]
      %v3741 = vld [vmem:[#allocation4 + $0x40] sm:$0xff]
      %v3742 = vld [vmem:[#allocation4 + $0x48] sm:$0xff]
      %v3743 = vld [vmem:[#allocation4 + $0x50] sm:$0xff]
      %v3744 = vld [vmem:[#allocation4 + $0x58] sm:$0xff]
      %v3745 = vld [vmem:[#allocation4 + $0x60] sm:$0xff]
      %v3746 = vld [vmem:[#allocation4 + $0x68] sm:$0xff]
      %v3747 = vld [vmem:[#allocation4 + $0x70] sm:$0xff]
      %v3748 = vld [vmem:[#allocation4 + $0x78] sm:$0xff]
      %v3749 = vld [vmem:[#allocation4 + $0x80] sm:$0xff]
      %v3750 = vld [vmem:[#allocation4 + $0x88] sm:$0xff]
      %s3751 = scalar_lea.vmem %s3, 160
      %v3752 = vld [vmem:[%s3751] sm:$0x3f]
      %v3754 = vsel %vm1016, %v3739, 0
      %v3757 = vsel %vm1016, %v3740, 0
      %v3760 = vsel %vm1016, %v3741, 0
      %v3763 = vsel %vm1016, %v3742, 0
      %v3766 = vsel %vm1016, %v3743, 0
      %v3769 = vsel %vm1016, %v3744, 0
      %v3772 = vsel %vm1016, %v3745, 0
      %v3775 = vsel %vm1016, %v3746, 0
      %v3778 = vsel %vm1016, %v3747, 0
      %v3781 = vsel %vm1016, %v3748, 0
      %v3784 = vsel %vm1016, %v3749, 0
      %v3787 = vsel %vm1016, %v3750, 0
      %v3790 = vsel %vm1466, %v3752, 0
      %3792 = vmatpush.msra.mxu0 0.0
      %3793 = vmatpush.msra.mxu0 0.0
      %3794 = vmatpush.msra.mxu0 0.0
      %3795 = vmatpush.msra.mxu0 0.0
      %3796 = vmatpush.msra.mxu0 0.0
      %3797 = vmatpush.msra.mxu0 0.0
      %3798 = vmatpush.msra.mxu0 0.0
      %3799 = vmatpush.msra.mxu0 0.0
      %3800 = vmatpush.msra.mxu0 0.0
      %3801 = vmatpush.msra.mxu0 0.0
      %3802 = vmatpush.msra.mxu0 0.0
      %3803 = vmatpush.msra.mxu0 0.0
      %3804 = vmatpush.msra.mxu0 0.0
      %3805 = vmatpush.msra.mxu0 0.0
      %3806 = vmatpush.msra.mxu0 0.0
      %3807 = vmatpush.msra.mxu0 %v3790
      %3808 = vmatmul.f32.gmra.mxu0 %v3754
      %v3809 = vpop.f32.mrf.mxu0
      %v3810 = vadd.f32 0.0, %v3809
      %3811 = vmatmul.f32.gmra.mxu0 %v3757
      %v3812 = vpop.f32.mrf.mxu0
      %v3813 = vadd.f32 0.0, %v3812
      %3814 = vmatmul.f32.gmra.mxu0 %v3760
      %v3815 = vpop.f32.mrf.mxu0
      %v3816 = vadd.f32 0.0, %v3815
      %3817 = vmatmul.f32.gmra.mxu0 %v3763
      %v3818 = vpop.f32.mrf.mxu0
      %v3819 = vadd.f32 0.0, %v3818
      %3820 = vmatmul.f32.gmra.mxu0 %v3766
      %v3821 = vpop.f32.mrf.mxu0
      %v3822 = vadd.f32 0.0, %v3821
      %3823 = vmatmul.f32.gmra.mxu0 %v3769
      %v3824 = vpop.f32.mrf.mxu0
      %v3825 = vadd.f32 0.0, %v3824
      %3826 = vmatmul.f32.gmra.mxu0 %v3772
      %v3827 = vpop.f32.mrf.mxu0
      %v3828 = vadd.f32 0.0, %v3827
      %3829 = vmatmul.f32.gmra.mxu0 %v3775
      %v3830 = vpop.f32.mrf.mxu0
      %v3831 = vadd.f32 0.0, %v3830
      %3832 = vmatmul.f32.gmra.mxu0 %v3778
      %v3833 = vpop.f32.mrf.mxu0
      %v3834 = vadd.f32 0.0, %v3833
      %3835 = vmatmul.f32.gmra.mxu0 %v3781
      %v3836 = vpop.f32.mrf.mxu0
      %v3837 = vadd.f32 0.0, %v3836
      %3838 = vmatmul.f32.gmra.mxu0 %v3784
      %v3839 = vpop.f32.mrf.mxu0
      %v3840 = vadd.f32 0.0, %v3839
      %3841 = vmatmul.f32.gmra.mxu0 %v3787
      %v3842 = vpop.f32.mrf.mxu0
      %v3843 = vadd.f32 0.0, %v3842
      %3844 = vdwg.mxu0
      %v3845 = vadd.f32 %v3727, %v3810
      %v3846 = vadd.f32 %v3728, %v3813
      %v3847 = vadd.f32 %v3729, %v3816
      %v3848 = vadd.f32 %v3730, %v3819
      %v3849 = vadd.f32 %v3731, %v3822
      %v3850 = vadd.f32 %v3732, %v3825
      %v3851 = vadd.f32 %v3733, %v3828
      %v3852 = vadd.f32 %v3734, %v3831
      %v3853 = vadd.f32 %v3735, %v3834
      %v3854 = vadd.f32 %v3736, %v3837
      %v3855 = vadd.f32 %v3737, %v3840
      %v3856 = vadd.f32 %v3738, %v3843
      %v3857 = vld [vmem:[#allocation4 + $0x31] sm:$0xff]
      %v3858 = vld [vmem:[#allocation4 + $0x39] sm:$0xff]
      %v3859 = vld [vmem:[#allocation4 + $0x41] sm:$0xff]
      %v3860 = vld [vmem:[#allocation4 + $0x49] sm:$0xff]
      %v3861 = vld [vmem:[#allocation4 + $0x51] sm:$0xff]
      %v3862 = vld [vmem:[#allocation4 + $0x59] sm:$0xff]
      %v3863 = vld [vmem:[#allocation4 + $0x61] sm:$0xff]
      %v3864 = vld [vmem:[#allocation4 + $0x69] sm:$0xff]
      %v3865 = vld [vmem:[#allocation4 + $0x71] sm:$0xff]
      %v3866 = vld [vmem:[#allocation4 + $0x79] sm:$0xff]
      %v3867 = vld [vmem:[#allocation4 + $0x81] sm:$0xff]
      %v3868 = vld [vmem:[#allocation4 + $0x89] sm:$0xff]
      %s3869 = scalar_lea.vmem %s3, 168
      %v3870 = vld [vmem:[%s3869] sm:$0x3f]
      %v3872 = vsel %vm1016, %v3857, 0
      %v3875 = vsel %vm1016, %v3858, 0
      %v3878 = vsel %vm1016, %v3859, 0
      %v3881 = vsel %vm1016, %v3860, 0
      %v3884 = vsel %vm1016, %v3861, 0
      %v3887 = vsel %vm1016, %v3862, 0
      %v3890 = vsel %vm1016, %v3863, 0
      %v3893 = vsel %vm1016, %v3864, 0
      %v3896 = vsel %vm1016, %v3865, 0
      %v3899 = vsel %vm1016, %v3866, 0
      %v3902 = vsel %vm1016, %v3867, 0
      %v3905 = vsel %vm1016, %v3868, 0
      %v3908 = vsel %vm1466, %v3870, 0
      %3910 = vmatpush.msra.mxu0 0.0
      %3911 = vmatpush.msra.mxu0 0.0
      %3912 = vmatpush.msra.mxu0 0.0
      %3913 = vmatpush.msra.mxu0 0.0
      %3914 = vmatpush.msra.mxu0 0.0
      %3915 = vmatpush.msra.mxu0 0.0
      %3916 = vmatpush.msra.mxu0 0.0
      %3917 = vmatpush.msra.mxu0 0.0
      %3918 = vmatpush.msra.mxu0 0.0
      %3919 = vmatpush.msra.mxu0 0.0
      %3920 = vmatpush.msra.mxu0 0.0
      %3921 = vmatpush.msra.mxu0 0.0
      %3922 = vmatpush.msra.mxu0 0.0
      %3923 = vmatpush.msra.mxu0 0.0
      %3924 = vmatpush.msra.mxu0 0.0
      %3925 = vmatpush.msra.mxu0 %v3908
      %3926 = vmatmul.f32.gmra.mxu0 %v3872
      %v3927 = vpop.f32.mrf.mxu0
      %v3928 = vadd.f32 0.0, %v3927
      %3929 = vmatmul.f32.gmra.mxu0 %v3875
      %v3930 = vpop.f32.mrf.mxu0
      %v3931 = vadd.f32 0.0, %v3930
      %3932 = vmatmul.f32.gmra.mxu0 %v3878
      %v3933 = vpop.f32.mrf.mxu0
      %v3934 = vadd.f32 0.0, %v3933
      %3935 = vmatmul.f32.gmra.mxu0 %v3881
      %v3936 = vpop.f32.mrf.mxu0
      %v3937 = vadd.f32 0.0, %v3936
      %3938 = vmatmul.f32.gmra.mxu0 %v3884
      %v3939 = vpop.f32.mrf.mxu0
      %v3940 = vadd.f32 0.0, %v3939
      %3941 = vmatmul.f32.gmra.mxu0 %v3887
      %v3942 = vpop.f32.mrf.mxu0
      %v3943 = vadd.f32 0.0, %v3942
      %3944 = vmatmul.f32.gmra.mxu0 %v3890
      %v3945 = vpop.f32.mrf.mxu0
      %v3946 = vadd.f32 0.0, %v3945
      %3947 = vmatmul.f32.gmra.mxu0 %v3893
      %v3948 = vpop.f32.mrf.mxu0
      %v3949 = vadd.f32 0.0, %v3948
      %3950 = vmatmul.f32.gmra.mxu0 %v3896
      %v3951 = vpop.f32.mrf.mxu0
      %v3952 = vadd.f32 0.0, %v3951
      %3953 = vmatmul.f32.gmra.mxu0 %v3899
      %v3954 = vpop.f32.mrf.mxu0
      %v3955 = vadd.f32 0.0, %v3954
      %3956 = vmatmul.f32.gmra.mxu0 %v3902
      %v3957 = vpop.f32.mrf.mxu0
      %v3958 = vadd.f32 0.0, %v3957
      %3959 = vmatmul.f32.gmra.mxu0 %v3905
      %v3960 = vpop.f32.mrf.mxu0
      %v3961 = vadd.f32 0.0, %v3960
      %3962 = vdwg.mxu0
      %v3963 = vadd.f32 %v3845, %v3928
      %v3964 = vadd.f32 %v3846, %v3931
      %v3965 = vadd.f32 %v3847, %v3934
      %v3966 = vadd.f32 %v3848, %v3937
      %v3967 = vadd.f32 %v3849, %v3940
      %v3968 = vadd.f32 %v3850, %v3943
      %v3969 = vadd.f32 %v3851, %v3946
      %v3970 = vadd.f32 %v3852, %v3949
      %v3971 = vadd.f32 %v3853, %v3952
      %v3972 = vadd.f32 %v3854, %v3955
      %v3973 = vadd.f32 %v3855, %v3958
      %v3974 = vadd.f32 %v3856, %v3961
      %v3975 = vld [vmem:[#allocation4 + $0x32] sm:$0xff]
      %v3976 = vld [vmem:[#allocation4 + $0x3a] sm:$0xff]
      %v3977 = vld [vmem:[#allocation4 + $0x42] sm:$0xff]
      %v3978 = vld [vmem:[#allocation4 + $0x4a] sm:$0xff]
      %v3979 = vld [vmem:[#allocation4 + $0x52] sm:$0xff]
      %v3980 = vld [vmem:[#allocation4 + $0x5a] sm:$0xff]
      %v3981 = vld [vmem:[#allocation4 + $0x62] sm:$0xff]
      %v3982 = vld [vmem:[#allocation4 + $0x6a] sm:$0xff]
      %v3983 = vld [vmem:[#allocation4 + $0x72] sm:$0xff]
      %v3984 = vld [vmem:[#allocation4 + $0x7a] sm:$0xff]
      %v3985 = vld [vmem:[#allocation4 + $0x82] sm:$0xff]
      %v3986 = vld [vmem:[#allocation4 + $0x8a] sm:$0xff]
      %s3987 = scalar_lea.vmem %s3, 176
      %v3988 = vld [vmem:[%s3987] sm:$0x3f]
      %v3990 = vsel %vm1016, %v3975, 0
      %v3993 = vsel %vm1016, %v3976, 0
      %v3996 = vsel %vm1016, %v3977, 0
      %v3999 = vsel %vm1016, %v3978, 0
      %v4002 = vsel %vm1016, %v3979, 0
      %v4005 = vsel %vm1016, %v3980, 0
      %v4008 = vsel %vm1016, %v3981, 0
      %v4011 = vsel %vm1016, %v3982, 0
      %v4014 = vsel %vm1016, %v3983, 0
      %v4017 = vsel %vm1016, %v3984, 0
      %v4020 = vsel %vm1016, %v3985, 0
      %v4023 = vsel %vm1016, %v3986, 0
      %v4026 = vsel %vm1466, %v3988, 0
      %4028 = vmatpush.msra.mxu0 0.0
      %4029 = vmatpush.msra.mxu0 0.0
      %4030 = vmatpush.msra.mxu0 0.0
      %4031 = vmatpush.msra.mxu0 0.0
      %4032 = vmatpush.msra.mxu0 0.0
      %4033 = vmatpush.msra.mxu0 0.0
      %4034 = vmatpush.msra.mxu0 0.0
      %4035 = vmatpush.msra.mxu0 0.0
      %4036 = vmatpush.msra.mxu0 0.0
      %4037 = vmatpush.msra.mxu0 0.0
      %4038 = vmatpush.msra.mxu0 0.0
      %4039 = vmatpush.msra.mxu0 0.0
      %4040 = vmatpush.msra.mxu0 0.0
      %4041 = vmatpush.msra.mxu0 0.0
      %4042 = vmatpush.msra.mxu0 0.0
      %4043 = vmatpush.msra.mxu0 %v4026
      %4044 = vmatmul.f32.gmra.mxu0 %v3990
      %v4045 = vpop.f32.mrf.mxu0
      %v4046 = vadd.f32 0.0, %v4045
      %4047 = vmatmul.f32.gmra.mxu0 %v3993
      %v4048 = vpop.f32.mrf.mxu0
      %v4049 = vadd.f32 0.0, %v4048
      %4050 = vmatmul.f32.gmra.mxu0 %v3996
      %v4051 = vpop.f32.mrf.mxu0
      %v4052 = vadd.f32 0.0, %v4051
      %4053 = vmatmul.f32.gmra.mxu0 %v3999
      %v4054 = vpop.f32.mrf.mxu0
      %v4055 = vadd.f32 0.0, %v4054
      %4056 = vmatmul.f32.gmra.mxu0 %v4002
      %v4057 = vpop.f32.mrf.mxu0
      %v4058 = vadd.f32 0.0, %v4057
      %4059 = vmatmul.f32.gmra.mxu0 %v4005
      %v4060 = vpop.f32.mrf.mxu0
      %v4061 = vadd.f32 0.0, %v4060
      %4062 = vmatmul.f32.gmra.mxu0 %v4008
      %v4063 = vpop.f32.mrf.mxu0
      %v4064 = vadd.f32 0.0, %v4063
      %4065 = vmatmul.f32.gmra.mxu0 %v4011
      %v4066 = vpop.f32.mrf.mxu0
      %v4067 = vadd.f32 0.0, %v4066
      %4068 = vmatmul.f32.gmra.mxu0 %v4014
      %v4069 = vpop.f32.mrf.mxu0
      %v4070 = vadd.f32 0.0, %v4069
      %4071 = vmatmul.f32.gmra.mxu0 %v4017
      %v4072 = vpop.f32.mrf.mxu0
      %v4073 = vadd.f32 0.0, %v4072
      %4074 = vmatmul.f32.gmra.mxu0 %v4020
      %v4075 = vpop.f32.mrf.mxu0
      %v4076 = vadd.f32 0.0, %v4075
      %4077 = vmatmul.f32.gmra.mxu0 %v4023
      %v4078 = vpop.f32.mrf.mxu0
      %v4079 = vadd.f32 0.0, %v4078
      %4080 = vdwg.mxu0
      %v4081 = vadd.f32 %v3963, %v4046
      %v4082 = vadd.f32 %v3964, %v4049
      %v4083 = vadd.f32 %v3965, %v4052
      %v4084 = vadd.f32 %v3966, %v4055
      %v4085 = vadd.f32 %v3967, %v4058
      %v4086 = vadd.f32 %v3968, %v4061
      %v4087 = vadd.f32 %v3969, %v4064
      %v4088 = vadd.f32 %v3970, %v4067
      %v4089 = vadd.f32 %v3971, %v4070
      %v4090 = vadd.f32 %v3972, %v4073
      %v4091 = vadd.f32 %v3973, %v4076
      %v4092 = vadd.f32 %v3974, %v4079
      %v4093 = vld [vmem:[#allocation4 + $0x33] sm:$0xff]
      %v4094 = vld [vmem:[#allocation4 + $0x3b] sm:$0xff]
      %v4095 = vld [vmem:[#allocation4 + $0x43] sm:$0xff]
      %v4096 = vld [vmem:[#allocation4 + $0x4b] sm:$0xff]
      %v4097 = vld [vmem:[#allocation4 + $0x53] sm:$0xff]
      %v4098 = vld [vmem:[#allocation4 + $0x5b] sm:$0xff]
      %v4099 = vld [vmem:[#allocation4 + $0x63] sm:$0xff]
      %v4100 = vld [vmem:[#allocation4 + $0x6b] sm:$0xff]
      %v4101 = vld [vmem:[#allocation4 + $0x73] sm:$0xff]
      %v4102 = vld [vmem:[#allocation4 + $0x7b] sm:$0xff]
      %v4103 = vld [vmem:[#allocation4 + $0x83] sm:$0xff]
      %v4104 = vld [vmem:[#allocation4 + $0x8b] sm:$0xff]
      %s4105 = scalar_lea.vmem %s3, 184
      %v4106 = vld [vmem:[%s4105] sm:$0x3f]
      %v4108 = vsel %vm1016, %v4093, 0
      %v4111 = vsel %vm1016, %v4094, 0
      %v4114 = vsel %vm1016, %v4095, 0
      %v4117 = vsel %vm1016, %v4096, 0
      %v4120 = vsel %vm1016, %v4097, 0
      %v4123 = vsel %vm1016, %v4098, 0
      %v4126 = vsel %vm1016, %v4099, 0
      %v4129 = vsel %vm1016, %v4100, 0
      %v4132 = vsel %vm1016, %v4101, 0
      %v4135 = vsel %vm1016, %v4102, 0
      %v4138 = vsel %vm1016, %v4103, 0
      %v4141 = vsel %vm1016, %v4104, 0
      %v4144 = vsel %vm1466, %v4106, 0
      %4146 = vmatpush.msra.mxu0 0.0
      %4147 = vmatpush.msra.mxu0 0.0
      %4148 = vmatpush.msra.mxu0 0.0
      %4149 = vmatpush.msra.mxu0 0.0
      %4150 = vmatpush.msra.mxu0 0.0
      %4151 = vmatpush.msra.mxu0 0.0
      %4152 = vmatpush.msra.mxu0 0.0
      %4153 = vmatpush.msra.mxu0 0.0
      %4154 = vmatpush.msra.mxu0 0.0
      %4155 = vmatpush.msra.mxu0 0.0
      %4156 = vmatpush.msra.mxu0 0.0
      %4157 = vmatpush.msra.mxu0 0.0
      %4158 = vmatpush.msra.mxu0 0.0
      %4159 = vmatpush.msra.mxu0 0.0
      %4160 = vmatpush.msra.mxu0 0.0
      %4161 = vmatpush.msra.mxu0 %v4144
      %4162 = vmatmul.f32.gmra.mxu0 %v4108
      %v4163 = vpop.f32.mrf.mxu0
      %v4164 = vadd.f32 0.0, %v4163
      %4165 = vmatmul.f32.gmra.mxu0 %v4111
      %v4166 = vpop.f32.mrf.mxu0
      %v4167 = vadd.f32 0.0, %v4166
      %4168 = vmatmul.f32.gmra.mxu0 %v4114
      %v4169 = vpop.f32.mrf.mxu0
      %v4170 = vadd.f32 0.0, %v4169
      %4171 = vmatmul.f32.gmra.mxu0 %v4117
      %v4172 = vpop.f32.mrf.mxu0
      %v4173 = vadd.f32 0.0, %v4172
      %4174 = vmatmul.f32.gmra.mxu0 %v4120
      %v4175 = vpop.f32.mrf.mxu0
      %v4176 = vadd.f32 0.0, %v4175
      %4177 = vmatmul.f32.gmra.mxu0 %v4123
      %v4178 = vpop.f32.mrf.mxu0
      %v4179 = vadd.f32 0.0, %v4178
      %4180 = vmatmul.f32.gmra.mxu0 %v4126
      %v4181 = vpop.f32.mrf.mxu0
      %v4182 = vadd.f32 0.0, %v4181
      %4183 = vmatmul.f32.gmra.mxu0 %v4129
      %v4184 = vpop.f32.mrf.mxu0
      %v4185 = vadd.f32 0.0, %v4184
      %4186 = vmatmul.f32.gmra.mxu0 %v4132
      %v4187 = vpop.f32.mrf.mxu0
      %v4188 = vadd.f32 0.0, %v4187
      %4189 = vmatmul.f32.gmra.mxu0 %v4135
      %v4190 = vpop.f32.mrf.mxu0
      %v4191 = vadd.f32 0.0, %v4190
      %4192 = vmatmul.f32.gmra.mxu0 %v4138
      %v4193 = vpop.f32.mrf.mxu0
      %v4194 = vadd.f32 0.0, %v4193
      %4195 = vmatmul.f32.gmra.mxu0 %v4141
      %v4196 = vpop.f32.mrf.mxu0
      %v4197 = vadd.f32 0.0, %v4196
      %4198 = vdwg.mxu0
      %v4199 = vadd.f32 %v4081, %v4164
      %v4200 = vadd.f32 %v4082, %v4167
      %v4201 = vadd.f32 %v4083, %v4170
      %v4202 = vadd.f32 %v4084, %v4173
      %v4203 = vadd.f32 %v4085, %v4176
      %v4204 = vadd.f32 %v4086, %v4179
      %v4205 = vadd.f32 %v4087, %v4182
      %v4206 = vadd.f32 %v4088, %v4185
      %v4207 = vadd.f32 %v4089, %v4188
      %v4208 = vadd.f32 %v4090, %v4191
      %v4209 = vadd.f32 %v4091, %v4194
      %v4210 = vadd.f32 %v4092, %v4197
      %v4211 = vld [vmem:[#allocation4 + $0x34] sm:$0xff]
      %v4212 = vld [vmem:[#allocation4 + $0x3c] sm:$0xff]
      %v4213 = vld [vmem:[#allocation4 + $0x44] sm:$0xff]
      %v4214 = vld [vmem:[#allocation4 + $0x4c] sm:$0xff]
      %v4215 = vld [vmem:[#allocation4 + $0x54] sm:$0xff]
      %v4216 = vld [vmem:[#allocation4 + $0x5c] sm:$0xff]
      %v4217 = vld [vmem:[#allocation4 + $0x64] sm:$0xff]
      %v4218 = vld [vmem:[#allocation4 + $0x6c] sm:$0xff]
      %v4219 = vld [vmem:[#allocation4 + $0x74] sm:$0xff]
      %v4220 = vld [vmem:[#allocation4 + $0x7c] sm:$0xff]
      %v4221 = vld [vmem:[#allocation4 + $0x84] sm:$0xff]
      %v4222 = vld [vmem:[#allocation4 + $0x8c] sm:$0xff]
      %s4223 = scalar_lea.vmem %s3, 192
      %v4224 = vld [vmem:[%s4223] sm:$0x3f]
      %v4226 = vsel %vm1016, %v4211, 0
      %v4229 = vsel %vm1016, %v4212, 0
      %v4232 = vsel %vm1016, %v4213, 0
      %v4235 = vsel %vm1016, %v4214, 0
      %v4238 = vsel %vm1016, %v4215, 0
      %v4241 = vsel %vm1016, %v4216, 0
      %v4244 = vsel %vm1016, %v4217, 0
      %v4247 = vsel %vm1016, %v4218, 0
      %v4250 = vsel %vm1016, %v4219, 0
      %v4253 = vsel %vm1016, %v4220, 0
      %v4256 = vsel %vm1016, %v4221, 0
      %v4259 = vsel %vm1016, %v4222, 0
      %v4262 = vsel %vm1466, %v4224, 0
      %4264 = vmatpush.msra.mxu0 0.0
      %4265 = vmatpush.msra.mxu0 0.0
      %4266 = vmatpush.msra.mxu0 0.0
      %4267 = vmatpush.msra.mxu0 0.0
      %4268 = vmatpush.msra.mxu0 0.0
      %4269 = vmatpush.msra.mxu0 0.0
      %4270 = vmatpush.msra.mxu0 0.0
      %4271 = vmatpush.msra.mxu0 0.0
      %4272 = vmatpush.msra.mxu0 0.0
      %4273 = vmatpush.msra.mxu0 0.0
      %4274 = vmatpush.msra.mxu0 0.0
      %4275 = vmatpush.msra.mxu0 0.0
      %4276 = vmatpush.msra.mxu0 0.0
      %4277 = vmatpush.msra.mxu0 0.0
      %4278 = vmatpush.msra.mxu0 0.0
      %4279 = vmatpush.msra.mxu0 %v4262
      %4280 = vmatmul.f32.gmra.mxu0 %v4226
      %v4281 = vpop.f32.mrf.mxu0
      %v4282 = vadd.f32 0.0, %v4281
      %4283 = vmatmul.f32.gmra.mxu0 %v4229
      %v4284 = vpop.f32.mrf.mxu0
      %v4285 = vadd.f32 0.0, %v4284
      %4286 = vmatmul.f32.gmra.mxu0 %v4232
      %v4287 = vpop.f32.mrf.mxu0
      %v4288 = vadd.f32 0.0, %v4287
      %4289 = vmatmul.f32.gmra.mxu0 %v4235
      %v4290 = vpop.f32.mrf.mxu0
      %v4291 = vadd.f32 0.0, %v4290
      %4292 = vmatmul.f32.gmra.mxu0 %v4238
      %v4293 = vpop.f32.mrf.mxu0
      %v4294 = vadd.f32 0.0, %v4293
      %4295 = vmatmul.f32.gmra.mxu0 %v4241
      %v4296 = vpop.f32.mrf.mxu0
      %v4297 = vadd.f32 0.0, %v4296
      %4298 = vmatmul.f32.gmra.mxu0 %v4244
      %v4299 = vpop.f32.mrf.mxu0
      %v4300 = vadd.f32 0.0, %v4299
      %4301 = vmatmul.f32.gmra.mxu0 %v4247
      %v4302 = vpop.f32.mrf.mxu0
      %v4303 = vadd.f32 0.0, %v4302
      %4304 = vmatmul.f32.gmra.mxu0 %v4250
      %v4305 = vpop.f32.mrf.mxu0
      %v4306 = vadd.f32 0.0, %v4305
      %4307 = vmatmul.f32.gmra.mxu0 %v4253
      %v4308 = vpop.f32.mrf.mxu0
      %v4309 = vadd.f32 0.0, %v4308
      %4310 = vmatmul.f32.gmra.mxu0 %v4256
      %v4311 = vpop.f32.mrf.mxu0
      %v4312 = vadd.f32 0.0, %v4311
      %4313 = vmatmul.f32.gmra.mxu0 %v4259
      %v4314 = vpop.f32.mrf.mxu0
      %v4315 = vadd.f32 0.0, %v4314
      %4316 = vdwg.mxu0
      %v4317 = vadd.f32 %v4199, %v4282
      %v4318 = vadd.f32 %v4200, %v4285
      %v4319 = vadd.f32 %v4201, %v4288
      %v4320 = vadd.f32 %v4202, %v4291
      %v4321 = vadd.f32 %v4203, %v4294
      %v4322 = vadd.f32 %v4204, %v4297
      %v4323 = vadd.f32 %v4205, %v4300
      %v4324 = vadd.f32 %v4206, %v4303
      %v4325 = vadd.f32 %v4207, %v4306
      %v4326 = vadd.f32 %v4208, %v4309
      %v4327 = vadd.f32 %v4209, %v4312
      %v4328 = vadd.f32 %v4210, %v4315
      %v4329 = vld [vmem:[%s5] sm:$0xff]
      %v4330 = vld [vmem:[%s5 + $0x8] sm:$0xff]
      %v4331 = vld [vmem:[%s5 + $0x10] sm:$0xff]
      %v4332 = vld [vmem:[%s5 + $0x18] sm:$0xff]
      %v4333 = vld [vmem:[%s5 + $0x20] sm:$0xff]
      %v4334 = vld [vmem:[%s5 + $0x28] sm:$0xff]
      %v4335 = vld [vmem:[%s5 + $0x30] sm:$0xff]
      %v4336 = vld [vmem:[%s5 + $0x38] sm:$0xff]
      %v4337 = vld [vmem:[%s4] sm:$0x1]
      %v4339 = vperm.slane %v4337, 0
      %vm4341 = vcmask 785408
      %v4343 = vsel %vm4341, %v4329, 0
      %v4346 = vsel %vm4341, %v4330, 0
      %v4349 = vsel %vm4341, %v4331, 0
      %v4352 = vsel %vm4341, %v4332, 0
      %v4355 = vsel %vm4341, %v4333, 0
      %v4358 = vsel %vm4341, %v4334, 0
      %v4361 = vsel %vm4341, %v4335, 0
      %v4364 = vsel %vm4341, %v4336, 0
      %4366 = vmatpush.msra.mxu0 0.0
      %4367 = vmatpush.msra.mxu0 0.0
      %4368 = vmatpush.msra.mxu0 0.0
      %4369 = vmatpush.msra.mxu0 0.0
      %4370 = vmatpush.msra.mxu0 %v4328
      %4371 = vmatpush.msra.mxu0 %v4327
      %4372 = vmatpush.msra.mxu0 %v4326
      %4373 = vmatpush.msra.mxu0 %v4325
      %4374 = vmatpush.msra.mxu0 %v4324
      %4375 = vmatpush.msra.mxu0 %v4323
      %4376 = vmatpush.msra.mxu0 %v4322
      %4377 = vmatpush.msra.mxu0 %v4321
      %4378 = vmatpush.msra.mxu0 %v4320
      %4379 = vmatpush.msra.mxu0 %v4319
      %4380 = vmatpush.msra.mxu0 %v4318
      %4381 = vmatpush.msra.mxu0 %v4317
      %4382 = vmatmul.f32.gmra.mxu0 %v4343
      %v4383 = vpop.f32.mrf.mxu0
      %v4384 = vadd.f32 %v4339, %v4383
      %4385 = vmatmul.f32.gmra.mxu0 %v4346
      %v4386 = vpop.f32.mrf.mxu0
      %v4387 = vadd.f32 %v4339, %v4386
      %4388 = vmatmul.f32.gmra.mxu0 %v4349
      %v4389 = vpop.f32.mrf.mxu0
      %v4390 = vadd.f32 %v4339, %v4389
      %4391 = vmatmul.f32.gmra.mxu0 %v4352
      %v4392 = vpop.f32.mrf.mxu0
      %v4393 = vadd.f32 %v4339, %v4392
      %4394 = vmatmul.f32.gmra.mxu0 %v4355
      %v4395 = vpop.f32.mrf.mxu0
      %v4396 = vadd.f32 %v4339, %v4395
      %4397 = vmatmul.f32.gmra.mxu0 %v4358
      %v4398 = vpop.f32.mrf.mxu0
      %v4399 = vadd.f32 %v4339, %v4398
      %4400 = vmatmul.f32.gmra.mxu0 %v4361
      %v4401 = vpop.f32.mrf.mxu0
      %v4402 = vadd.f32 %v4339, %v4401
      %4403 = vmatmul.f32.gmra.mxu0 %v4364
      %v4404 = vpop.f32.mrf.mxu0
      %v4405 = vadd.f32 %v4339, %v4404
      %4406 = vdwg.mxu0
      %v4407 = vmax.f32 %v4384, 0.0
      %v4408 = vmax.f32 %v4387, 0.0
      %v4409 = vmax.f32 %v4390, 0.0
      %v4410 = vmax.f32 %v4393, 0.0
      %v4411 = vmax.f32 %v4396, 0.0
      %v4412 = vmax.f32 %v4399, 0.0
      %v4413 = vmax.f32 %v4402, 0.0
      %v4414 = vmax.f32 %v4405, 0.0
      %vm4415 = vcmask 97280
      %4416 = vst.msk [vmem:[#allocation5] sm:$0xff] %vm4415, %v4407
      %4417 = vst.msk [vmem:[#allocation5 + $0x8] sm:$0xff] %vm4415, %v4408
      %4418 = vst.msk [vmem:[#allocation5 + $0x10] sm:$0xff] %vm4415, %v4409
      %4419 = vst.msk [vmem:[#allocation5 + $0x18] sm:$0xff] %vm4415, %v4410
      %4420 = vst.msk [vmem:[#allocation5 + $0x20] sm:$0xff] %vm4415, %v4411
      %4421 = vst.msk [vmem:[#allocation5 + $0x28] sm:$0xff] %vm4415, %v4412
      %4422 = vst.msk [vmem:[#allocation5 + $0x30] sm:$0xff] %vm4415, %v4413
      %4423 = vst.msk [vmem:[#allocation5 + $0x38] sm:$0xff] %vm4415, %v4414
      %v4424 = vld [vmem:[#allocation5] ss:$2 sm:$0xff]
      %s4425 = scalar_lea.vmem [#allocation5], 16
      %v4426 = vld [vmem:[%s4425] ss:$2 sm:$0xff]
      %s4427 = scalar_lea.vmem [#allocation5], 32
      %v4428 = vld [vmem:[%s4427] ss:$2 sm:$0xff]
      %s4429 = scalar_lea.vmem [#allocation5], 48
      %v4430 = vld [vmem:[%s4429] ss:$2 sm:$0xff]
      %s4431 = scalar_lea.vmem [#allocation5], 1
      %v4432 = vld [vmem:[%s4431] ss:$2 sm:$0xff]
      %s4433 = scalar_lea.vmem [#allocation5], 17
      %v4434 = vld [vmem:[%s4433] ss:$2 sm:$0xff]
      %s4435 = scalar_lea.vmem [#allocation5], 33
      %v4436 = vld [vmem:[%s4435] ss:$2 sm:$0xff]
      %s4437 = scalar_lea.vmem [#allocation5], 49
      %v4438 = vld [vmem:[%s4437] ss:$2 sm:$0xff]
      %v4439 = vmax.f32 %v4424, %v4432
      %v4440 = vmax.f32 %v4426, %v4434
      %v4441 = vmax.f32 %v4428, %v4436
      %v4442 = vmax.f32 %v4430, %v4438
      %4443 = vst.msk [vmem:[#allocation6] sm:$0xff] %vm4415, %v4439
      %4444 = vst.msk [vmem:[#allocation6 + $0x8] sm:$0xff] %vm4415, %v4440
      %4445 = vst.msk [vmem:[#allocation6 + $0x10] sm:$0xff] %vm4415, %v4441
      %4446 = vst.msk [vmem:[#allocation6 + $0x18] sm:$0xff] %vm4415, %v4442
      %v4447 = vld [vmem:[#allocation6] sm:$0xf]
      %v4448 = vld [vmem:[#allocation6 + $0x4] sm:$0xf]
      %v4449 = vmax.f32 %v4447, %v4448
      %v4450 = vld [vmem:[%s6] sm:$0xff]
      %v4451 = vld [vmem:[%s6 + $0x8] sm:$0xf]
      %s4452 = scalar_lea.vmem %s6, 16
      %v4453 = vld [vmem:[%s4452] sm:$0xff]
      %v4454 = vld [vmem:[%s4452 + $0x8] sm:$0xf]
      %v4456 = vrot.slane %v4449, 1
      %v4457 = vsel %vm4415, %v4456, 0
      %vm4459 = vcmask 1043456
      %v4461 = vsel %vm4459, %v4454, 0
      %4463 = vmatpush.msra.mxu0 0.0
      %4464 = vmatpush.msra.mxu0 0.0
      %4465 = vmatpush.msra.mxu0 0.0
      %4466 = vmatpush.msra.mxu0 0.0
      %4467 = vmatpush.msra.mxu0 0.0
      %4468 = vmatpush.msra.mxu0 0.0
      %4469 = vmatpush.msra.mxu0 0.0
      %4470 = vmatpush.msra.mxu0 0.0
      %4471 = vmatpush.msra.mxu0 0.0
      %4472 = vmatpush.msra.mxu0 0.0
      %4473 = vmatpush.msra.mxu0 0.0
      %4474 = vmatpush.msra.mxu0 0.0
      %4475 = vmatpush.msra.mxu0 0.0
      %4476 = vmatpush.msra.mxu0 0.0
      %4477 = vmatpush.msra.mxu0 %v4461
      %4478 = vmatpush.msra.mxu0 %v4453
      %4479 = vmatmul.f32.gmra.mxu0 %v4457
      %v4480 = vpop.f32.mrf.mxu0
      %v4481 = vadd.f32 0.0, %v4480
      %4482 = vdwg.mxu0
      %s4483 = scalar_lea.vmem %s6, 32
      %v4484 = vld [vmem:[%s4483] sm:$0xff]
      %v4485 = vld [vmem:[%s4483 + $0x8] sm:$0xf]
      %s4486 = scalar_lea.vmem %s6, 48
      %v4487 = vld [vmem:[%s4486] sm:$0xff]
      %v4488 = vld [vmem:[%s4486 + $0x8] sm:$0xf]
      %v4489 = vrot.slane %v4449, 3
      %v4490 = vsel %vm4415, %v4489, 0
      %v4493 = vsel %vm4459, %v4488, 0
      %4495 = vmatpush.msra.mxu0 0.0
      %4496 = vmatpush.msra.mxu0 0.0
      %4497 = vmatpush.msra.mxu0 0.0
      %4498 = vmatpush.msra.mxu0 0.0
      %4499 = vmatpush.msra.mxu0 0.0
      %4500 = vmatpush.msra.mxu0 0.0
      %4501 = vmatpush.msra.mxu0 0.0
      %4502 = vmatpush.msra.mxu0 0.0
      %4503 = vmatpush.msra.mxu0 0.0
      %4504 = vmatpush.msra.mxu0 0.0
      %4505 = vmatpush.msra.mxu0 0.0
      %4506 = vmatpush.msra.mxu0 0.0
      %4507 = vmatpush.msra.mxu0 0.0
      %4508 = vmatpush.msra.mxu0 0.0
      %4509 = vmatpush.msra.mxu0 %v4493
      %4510 = vmatpush.msra.mxu0 %v4487
      %4511 = vmatmul.f32.gmra.mxu0 %v4490
      %v4512 = vpop.f32.mrf.mxu0
      %v4513 = vadd.f32 0.0, %v4512
      %4514 = vdwg.mxu0
      %v4515 = vld [vmem:[#allocation6 + $0x8] sm:$0xf]
      %v4516 = vld [vmem:[#allocation6 + $0xc] sm:$0xf]
      %v4517 = vmax.f32 %v4515, %v4516
      %s4518 = scalar_lea.vmem %s6, 64
      %v4519 = vld [vmem:[%s4518] sm:$0xff]
      %v4520 = vld [vmem:[%s4518 + $0x8] sm:$0xf]
      %s4521 = scalar_lea.vmem %s6, 80
      %v4522 = vld [vmem:[%s4521] sm:$0xff]
      %v4523 = vld [vmem:[%s4521 + $0x8] sm:$0xf]
      %v4525 = vrot.slane %v4517, 1
      %v4526 = vsel %vm4415, %v4525, 0
      %v4529 = vsel %vm4459, %v4523, 0
      %4531 = vmatpush.msra.mxu0 0.0
      %4532 = vmatpush.msra.mxu0 0.0
      %4533 = vmatpush.msra.mxu0 0.0
      %4534 = vmatpush.msra.mxu0 0.0
      %4535 = vmatpush.msra.mxu0 0.0
      %4536 = vmatpush.msra.mxu0 0.0
      %4537 = vmatpush.msra.mxu0 0.0
      %4538 = vmatpush.msra.mxu0 0.0
      %4539 = vmatpush.msra.mxu0 0.0
      %4540 = vmatpush.msra.mxu0 0.0
      %4541 = vmatpush.msra.mxu0 0.0
      %4542 = vmatpush.msra.mxu0 0.0
      %4543 = vmatpush.msra.mxu0 0.0
      %4544 = vmatpush.msra.mxu0 0.0
      %4545 = vmatpush.msra.mxu0 %v4529
      %4546 = vmatpush.msra.mxu0 %v4522
      %4547 = vmatmul.f32.gmra.mxu0 %v4526
      %v4548 = vpop.f32.mrf.mxu0
      %v4549 = vadd.f32 0.0, %v4548
      %4550 = vdwg.mxu0
      %s4551 = scalar_lea.vmem %s6, 96
      %v4552 = vld [vmem:[%s4551] sm:$0xff]
      %v4553 = vld [vmem:[%s4551 + $0x8] sm:$0xf]
      %s4554 = scalar_lea.vmem %s6, 112
      %v4555 = vld [vmem:[%s4554] sm:$0xff]
      %v4556 = vld [vmem:[%s4554 + $0x8] sm:$0xf]
      %v4557 = vrot.slane %v4517, 3
      %v4558 = vsel %vm4415, %v4557, 0
      %v4561 = vsel %vm4459, %v4556, 0
      %4563 = vmatpush.msra.mxu0 0.0
      %4564 = vmatpush.msra.mxu0 0.0
      %4565 = vmatpush.msra.mxu0 0.0
      %4566 = vmatpush.msra.mxu0 0.0
      %4567 = vmatpush.msra.mxu0 0.0
      %4568 = vmatpush.msra.mxu0 0.0
      %4569 = vmatpush.msra.mxu0 0.0
      %4570 = vmatpush.msra.mxu0 0.0
      %4571 = vmatpush.msra.mxu0 0.0
      %4572 = vmatpush.msra.mxu0 0.0
      %4573 = vmatpush.msra.mxu0 0.0
      %4574 = vmatpush.msra.mxu0 0.0
      %4575 = vmatpush.msra.mxu0 0.0
      %4576 = vmatpush.msra.mxu0 0.0
      %4577 = vmatpush.msra.mxu0 %v4561
      %4578 = vmatpush.msra.mxu0 %v4555
      %4579 = vmatmul.f32.gmra.mxu0 %v4558
      %v4580 = vpop.f32.mrf.mxu0
      %v4581 = vadd.f32 0.0, %v4580
      %4582 = vdwg.mxu0
      %v4583 = vld [vmem:[#allocation6 + $0x10] sm:$0xf]
      %v4584 = vld [vmem:[#allocation6 + $0x14] sm:$0xf]
      %v4585 = vmax.f32 %v4583, %v4584
      %s4586 = scalar_lea.vmem %s6, 128
      %v4587 = vld [vmem:[%s4586] sm:$0xff]
      %v4588 = vld [vmem:[%s4586 + $0x8] sm:$0xf]
      %s4589 = scalar_lea.vmem %s6, 144
      %v4590 = vld [vmem:[%s4589] sm:$0xff]
      %v4591 = vld [vmem:[%s4589 + $0x8] sm:$0xf]
      %v4593 = vrot.slane %v4585, 1
      %v4594 = vsel %vm4415, %v4593, 0
      %v4597 = vsel %vm4459, %v4591, 0
      %4599 = vmatpush.msra.mxu0 0.0
      %4600 = vmatpush.msra.mxu0 0.0
      %4601 = vmatpush.msra.mxu0 0.0
      %4602 = vmatpush.msra.mxu0 0.0
      %4603 = vmatpush.msra.mxu0 0.0
      %4604 = vmatpush.msra.mxu0 0.0
      %4605 = vmatpush.msra.mxu0 0.0
      %4606 = vmatpush.msra.mxu0 0.0
      %4607 = vmatpush.msra.mxu0 0.0
      %4608 = vmatpush.msra.mxu0 0.0
      %4609 = vmatpush.msra.mxu0 0.0
      %4610 = vmatpush.msra.mxu0 0.0
      %4611 = vmatpush.msra.mxu0 0.0
      %4612 = vmatpush.msra.mxu0 0.0
      %4613 = vmatpush.msra.mxu0 %v4597
      %4614 = vmatpush.msra.mxu0 %v4590
      %4615 = vmatmul.f32.gmra.mxu0 %v4594
      %v4616 = vpop.f32.mrf.mxu0
      %v4617 = vadd.f32 0.0, %v4616
      %4618 = vdwg.mxu0
      %s4619 = scalar_lea.vmem %s6, 160
      %v4620 = vld [vmem:[%s4619] sm:$0xff]
      %v4621 = vld [vmem:[%s4619 + $0x8] sm:$0xf]
      %s4622 = scalar_lea.vmem %s6, 176
      %v4623 = vld [vmem:[%s4622] sm:$0xff]
      %v4624 = vld [vmem:[%s4622 + $0x8] sm:$0xf]
      %v4625 = vrot.slane %v4585, 3
      %v4626 = vsel %vm4415, %v4625, 0
      %v4629 = vsel %vm4459, %v4624, 0
      %4631 = vmatpush.msra.mxu0 0.0
      %4632 = vmatpush.msra.mxu0 0.0
      %4633 = vmatpush.msra.mxu0 0.0
      %4634 = vmatpush.msra.mxu0 0.0
      %4635 = vmatpush.msra.mxu0 0.0
      %4636 = vmatpush.msra.mxu0 0.0
      %4637 = vmatpush.msra.mxu0 0.0
      %4638 = vmatpush.msra.mxu0 0.0
      %4639 = vmatpush.msra.mxu0 0.0
      %4640 = vmatpush.msra.mxu0 0.0
      %4641 = vmatpush.msra.mxu0 0.0
      %4642 = vmatpush.msra.mxu0 0.0
      %4643 = vmatpush.msra.mxu0 0.0
      %4644 = vmatpush.msra.mxu0 0.0
      %4645 = vmatpush.msra.mxu0 %v4629
      %4646 = vmatpush.msra.mxu0 %v4623
      %4647 = vmatmul.f32.gmra.mxu0 %v4626
      %v4648 = vpop.f32.mrf.mxu0
      %v4649 = vadd.f32 0.0, %v4648
      %4650 = vdwg.mxu0
      %v4651 = vld [vmem:[#allocation6 + $0x18] sm:$0xf]
      %v4652 = vld [vmem:[#allocation6 + $0x1c] sm:$0xf]
      %v4653 = vmax.f32 %v4651, %v4652
      %s4654 = scalar_lea.vmem %s6, 192
      %v4655 = vld [vmem:[%s4654] sm:$0xff]
      %v4656 = vld [vmem:[%s4654 + $0x8] sm:$0xf]
      %s4657 = scalar_lea.vmem %s6, 208
      %v4658 = vld [vmem:[%s4657] sm:$0xff]
      %v4659 = vld [vmem:[%s4657 + $0x8] sm:$0xf]
      %v4661 = vrot.slane %v4653, 1
      %v4662 = vsel %vm4415, %v4661, 0
      %v4665 = vsel %vm4459, %v4659, 0
      %4667 = vmatpush.msra.mxu0 0.0
      %4668 = vmatpush.msra.mxu0 0.0
      %4669 = vmatpush.msra.mxu0 0.0
      %4670 = vmatpush.msra.mxu0 0.0
      %4671 = vmatpush.msra.mxu0 0.0
      %4672 = vmatpush.msra.mxu0 0.0
      %4673 = vmatpush.msra.mxu0 0.0
      %4674 = vmatpush.msra.mxu0 0.0
      %4675 = vmatpush.msra.mxu0 0.0
      %4676 = vmatpush.msra.mxu0 0.0
      %4677 = vmatpush.msra.mxu0 0.0
      %4678 = vmatpush.msra.mxu0 0.0
      %4679 = vmatpush.msra.mxu0 0.0
      %4680 = vmatpush.msra.mxu0 0.0
      %4681 = vmatpush.msra.mxu0 %v4665
      %4682 = vmatpush.msra.mxu0 %v4658
      %4683 = vmatmul.f32.gmra.mxu0 %v4662
      %v4684 = vpop.f32.mrf.mxu0
      %v4685 = vadd.f32 0.0, %v4684
      %4686 = vdwg.mxu0
      %s4687 = scalar_lea.vmem %s6, 224
      %v4688 = vld [vmem:[%s4687] sm:$0xff]
      %v4689 = vld [vmem:[%s4687 + $0x8] sm:$0xf]
      %s4690 = scalar_lea.vmem %s6, 240
      %v4691 = vld [vmem:[%s4690] sm:$0xff]
      %v4692 = vld [vmem:[%s4690 + $0x8] sm:$0xf]
      %v4693 = vrot.slane %v4653, 3
      %v4694 = vsel %vm4415, %v4693, 0
      %v4697 = vsel %vm4459, %v4692, 0
      %4699 = vmatpush.msra.mxu0 0.0
      %4700 = vmatpush.msra.mxu0 0.0
      %4701 = vmatpush.msra.mxu0 0.0
      %4702 = vmatpush.msra.mxu0 0.0
      %4703 = vmatpush.msra.mxu0 0.0
      %4704 = vmatpush.msra.mxu0 0.0
      %4705 = vmatpush.msra.mxu0 0.0
      %4706 = vmatpush.msra.mxu0 0.0
      %4707 = vmatpush.msra.mxu0 0.0
      %4708 = vmatpush.msra.mxu0 0.0
      %4709 = vmatpush.msra.mxu0 0.0
      %4710 = vmatpush.msra.mxu0 0.0
      %4711 = vmatpush.msra.mxu0 0.0
      %4712 = vmatpush.msra.mxu0 0.0
      %4713 = vmatpush.msra.mxu0 %v4697
      %4714 = vmatpush.msra.mxu0 %v4691
      %4715 = vmatmul.f32.gmra.mxu0 %v4694
      %v4716 = vpop.f32.mrf.mxu0
      %v4717 = vadd.f32 0.0, %v4716
      %4718 = vdwg.mxu0
      %v4719 = vsel %vm4415, %v4449, 0
      %v4722 = vsel %vm4459, %v4451, 0
      %4724 = vmatpush.msra.mxu0 0.0
      %4725 = vmatpush.msra.mxu0 0.0
      %4726 = vmatpush.msra.mxu0 0.0
      %4727 = vmatpush.msra.mxu0 0.0
      %4728 = vmatpush.msra.mxu0 0.0
      %4729 = vmatpush.msra.mxu0 0.0
      %4730 = vmatpush.msra.mxu0 0.0
      %4731 = vmatpush.msra.mxu0 0.0
      %4732 = vmatpush.msra.mxu0 0.0
      %4733 = vmatpush.msra.mxu0 0.0
      %4734 = vmatpush.msra.mxu0 0.0
      %4735 = vmatpush.msra.mxu0 0.0
      %4736 = vmatpush.msra.mxu0 0.0
      %4737 = vmatpush.msra.mxu0 0.0
      %4738 = vmatpush.msra.mxu0 %v4722
      %4739 = vmatpush.msra.mxu0 %v4450
      %4740 = vmatmul.f32.gmra.mxu0 %v4719
      %v4741 = vpop.f32.mrf.mxu0
      %v4742 = vadd.f32 %v4481, %v4741
      %4743 = vdwg.mxu0
      %v4744 = vrot.slane %v4449, 2
      %v4745 = vsel %vm4415, %v4744, 0
      %v4748 = vsel %vm4459, %v4485, 0
      %4750 = vmatpush.msra.mxu0 0.0
      %4751 = vmatpush.msra.mxu0 0.0
      %4752 = vmatpush.msra.mxu0 0.0
      %4753 = vmatpush.msra.mxu0 0.0
      %4754 = vmatpush.msra.mxu0 0.0
      %4755 = vmatpush.msra.mxu0 0.0
      %4756 = vmatpush.msra.mxu0 0.0
      %4757 = vmatpush.msra.mxu0 0.0
      %4758 = vmatpush.msra.mxu0 0.0
      %4759 = vmatpush.msra.mxu0 0.0
      %4760 = vmatpush.msra.mxu0 0.0
      %4761 = vmatpush.msra.mxu0 0.0
      %4762 = vmatpush.msra.mxu0 0.0
      %4763 = vmatpush.msra.mxu0 0.0
      %4764 = vmatpush.msra.mxu0 %v4748
      %4765 = vmatpush.msra.mxu0 %v4484
      %4766 = vmatmul.f32.gmra.mxu0 %v4745
      %v4767 = vpop.f32.mrf.mxu0
      %v4768 = vadd.f32 %v4513, %v4767
      %4769 = vdwg.mxu0
      %v4770 = vsel %vm4415, %v4517, 0
      %v4773 = vsel %vm4459, %v4520, 0
      %4775 = vmatpush.msra.mxu0 0.0
      %4776 = vmatpush.msra.mxu0 0.0
      %4777 = vmatpush.msra.mxu0 0.0
      %4778 = vmatpush.msra.mxu0 0.0
      %4779 = vmatpush.msra.mxu0 0.0
      %4780 = vmatpush.msra.mxu0 0.0
      %4781 = vmatpush.msra.mxu0 0.0
      %4782 = vmatpush.msra.mxu0 0.0
      %4783 = vmatpush.msra.mxu0 0.0
      %4784 = vmatpush.msra.mxu0 0.0
      %4785 = vmatpush.msra.mxu0 0.0
      %4786 = vmatpush.msra.mxu0 0.0
      %4787 = vmatpush.msra.mxu0 0.0
      %4788 = vmatpush.msra.mxu0 0.0
      %4789 = vmatpush.msra.mxu0 %v4773
      %4790 = vmatpush.msra.mxu0 %v4519
      %4791 = vmatmul.f32.gmra.mxu0 %v4770
      %v4792 = vpop.f32.mrf.mxu0
      %v4793 = vadd.f32 %v4549, %v4792
      %4794 = vdwg.mxu0
      %v4795 = vrot.slane %v4517, 2
      %v4796 = vsel %vm4415, %v4795, 0
      %v4799 = vsel %vm4459, %v4553, 0
      %4801 = vmatpush.msra.mxu0 0.0
      %4802 = vmatpush.msra.mxu0 0.0
      %4803 = vmatpush.msra.mxu0 0.0
      %4804 = vmatpush.msra.mxu0 0.0
      %4805 = vmatpush.msra.mxu0 0.0
      %4806 = vmatpush.msra.mxu0 0.0
      %4807 = vmatpush.msra.mxu0 0.0
      %4808 = vmatpush.msra.mxu0 0.0
      %4809 = vmatpush.msra.mxu0 0.0
      %4810 = vmatpush.msra.mxu0 0.0
      %4811 = vmatpush.msra.mxu0 0.0
      %4812 = vmatpush.msra.mxu0 0.0
      %4813 = vmatpush.msra.mxu0 0.0
      %4814 = vmatpush.msra.mxu0 0.0
      %4815 = vmatpush.msra.mxu0 %v4799
      %4816 = vmatpush.msra.mxu0 %v4552
      %4817 = vmatmul.f32.gmra.mxu0 %v4796
      %v4818 = vpop.f32.mrf.mxu0
      %v4819 = vadd.f32 %v4581, %v4818
      %4820 = vdwg.mxu0
      %v4821 = vsel %vm4415, %v4585, 0
      %v4824 = vsel %vm4459, %v4588, 0
      %4826 = vmatpush.msra.mxu0 0.0
      %4827 = vmatpush.msra.mxu0 0.0
      %4828 = vmatpush.msra.mxu0 0.0
      %4829 = vmatpush.msra.mxu0 0.0
      %4830 = vmatpush.msra.mxu0 0.0
      %4831 = vmatpush.msra.mxu0 0.0
      %4832 = vmatpush.msra.mxu0 0.0
      %4833 = vmatpush.msra.mxu0 0.0
      %4834 = vmatpush.msra.mxu0 0.0
      %4835 = vmatpush.msra.mxu0 0.0
      %4836 = vmatpush.msra.mxu0 0.0
      %4837 = vmatpush.msra.mxu0 0.0
      %4838 = vmatpush.msra.mxu0 0.0
      %4839 = vmatpush.msra.mxu0 0.0
      %4840 = vmatpush.msra.mxu0 %v4824
      %4841 = vmatpush.msra.mxu0 %v4587
      %4842 = vmatmul.f32.gmra.mxu0 %v4821
      %v4843 = vpop.f32.mrf.mxu0
      %v4844 = vadd.f32 %v4617, %v4843
      %4845 = vdwg.mxu0
      %v4846 = vrot.slane %v4585, 2
      %v4847 = vsel %vm4415, %v4846, 0
      %v4850 = vsel %vm4459, %v4621, 0
      %4852 = vmatpush.msra.mxu0 0.0
      %4853 = vmatpush.msra.mxu0 0.0
      %4854 = vmatpush.msra.mxu0 0.0
      %4855 = vmatpush.msra.mxu0 0.0
      %4856 = vmatpush.msra.mxu0 0.0
      %4857 = vmatpush.msra.mxu0 0.0
      %4858 = vmatpush.msra.mxu0 0.0
      %4859 = vmatpush.msra.mxu0 0.0
      %4860 = vmatpush.msra.mxu0 0.0
      %4861 = vmatpush.msra.mxu0 0.0
      %4862 = vmatpush.msra.mxu0 0.0
      %4863 = vmatpush.msra.mxu0 0.0
      %4864 = vmatpush.msra.mxu0 0.0
      %4865 = vmatpush.msra.mxu0 0.0
      %4866 = vmatpush.msra.mxu0 %v4850
      %4867 = vmatpush.msra.mxu0 %v4620
      %4868 = vmatmul.f32.gmra.mxu0 %v4847
      %v4869 = vpop.f32.mrf.mxu0
      %v4870 = vadd.f32 %v4649, %v4869
      %4871 = vdwg.mxu0
      %v4872 = vsel %vm4415, %v4653, 0
      %v4875 = vsel %vm4459, %v4656, 0
      %4877 = vmatpush.msra.mxu0 0.0
      %4878 = vmatpush.msra.mxu0 0.0
      %4879 = vmatpush.msra.mxu0 0.0
      %4880 = vmatpush.msra.mxu0 0.0
      %4881 = vmatpush.msra.mxu0 0.0
      %4882 = vmatpush.msra.mxu0 0.0
      %4883 = vmatpush.msra.mxu0 0.0
      %4884 = vmatpush.msra.mxu0 0.0
      %4885 = vmatpush.msra.mxu0 0.0
      %4886 = vmatpush.msra.mxu0 0.0
      %4887 = vmatpush.msra.mxu0 0.0
      %4888 = vmatpush.msra.mxu0 0.0
      %4889 = vmatpush.msra.mxu0 0.0
      %4890 = vmatpush.msra.mxu0 0.0
      %4891 = vmatpush.msra.mxu0 %v4875
      %4892 = vmatpush.msra.mxu0 %v4655
      %4893 = vmatmul.f32.gmra.mxu0 %v4872
      %v4894 = vpop.f32.mrf.mxu0
      %v4895 = vadd.f32 %v4685, %v4894
      %4896 = vdwg.mxu0
      %v4897 = vrot.slane %v4653, 2
      %v4898 = vsel %vm4415, %v4897, 0
      %v4901 = vsel %vm4459, %v4689, 0
      %4903 = vmatpush.msra.mxu0 0.0
      %4904 = vmatpush.msra.mxu0 0.0
      %4905 = vmatpush.msra.mxu0 0.0
      %4906 = vmatpush.msra.mxu0 0.0
      %4907 = vmatpush.msra.mxu0 0.0
      %4908 = vmatpush.msra.mxu0 0.0
      %4909 = vmatpush.msra.mxu0 0.0
      %4910 = vmatpush.msra.mxu0 0.0
      %4911 = vmatpush.msra.mxu0 0.0
      %4912 = vmatpush.msra.mxu0 0.0
      %4913 = vmatpush.msra.mxu0 0.0
      %4914 = vmatpush.msra.mxu0 0.0
      %4915 = vmatpush.msra.mxu0 0.0
      %4916 = vmatpush.msra.mxu0 0.0
      %4917 = vmatpush.msra.mxu0 %v4901
      %4918 = vmatpush.msra.mxu0 %v4688
      %4919 = vmatmul.f32.gmra.mxu0 %v4898
      %v4920 = vpop.f32.mrf.mxu0
      %v4921 = vadd.f32 %v4717, %v4920
      %4922 = vdwg.mxu0
      %v4923 = vadd.f32 %v4742, %v4768
      %v4924 = vadd.f32 %v4793, %v4819
      %v4925 = vadd.f32 %v4844, %v4870
      %v4926 = vadd.f32 %v4895, %v4921
      %v4927 = vadd.f32 %v4923, %v4924
      %v4928 = vadd.f32 %v4925, %v4926
      %v4929 = vadd.f32 %v4927, %v4928
      %v4930 = vld [vmem:[%s7] sm:$0x1]
      %v4931 = vadd.f32 %v4929, %v4930
      %v4932 = vmax.f32 %v4931, 0.0
      %v4933 = vld [vmem:[%s8] sm:$0xff]
      %v4934 = vld [vmem:[%s8 + $0x8] sm:$0xff]
      %v4935 = vld [vmem:[%s8 + $0x10] sm:$0xff]
      %v4936 = vld [vmem:[%s8 + $0x18] sm:$0xff]
      %v4937 = vld [vmem:[%s8 + $0x20] sm:$0xff]
      %v4938 = vld [vmem:[%s8 + $0x28] sm:$0xff]
      %v4939 = vld [vmem:[%s8 + $0x30] sm:$0xff]
      %v4940 = vld [vmem:[%s8 + $0x38] sm:$0xff]
      %v4941 = vld [vmem:[%s8 + $0x40] sm:$0xff]
      %v4942 = vld [vmem:[%s8 + $0x48] sm:$0xff]
      %v4943 = vld [vmem:[%s8 + $0x50] sm:$0xf]
      %v4944 = vld [vmem:[%s9] sm:$0x1]
      %vm4945 = vcmask 687104
      %v4947 = vsel %vm4945, %v4932, 0
      %v4950 = vsel %vm4459, %v4943, 0
      %4952 = vmatpush.msra.mxu0 0.0
      %4953 = vmatpush.msra.mxu0 0.0
      %4954 = vmatpush.msra.mxu0 0.0
      %4955 = vmatpush.msra.mxu0 0.0
      %4956 = vmatpush.msra.mxu0 0.0
      %4957 = vmatpush.msra.mxu0 %v4950
      %4958 = vmatpush.msra.mxu0 %v4942
      %4959 = vmatpush.msra.mxu0 %v4941
      %4960 = vmatpush.msra.mxu0 %v4940
      %4961 = vmatpush.msra.mxu0 %v4939
      %4962 = vmatpush.msra.mxu0 %v4938
      %4963 = vmatpush.msra.mxu0 %v4937
      %4964 = vmatpush.msra.mxu0 %v4936
      %4965 = vmatpush.msra.mxu0 %v4935
      %4966 = vmatpush.msra.mxu0 %v4934
      %4967 = vmatpush.msra.mxu0 %v4933
      %4968 = vmatmul.f32.gmra.mxu0 %v4947
      %v4969 = vpop.f32.mrf.mxu0
      %v4970 = vadd.f32 %v4944, %v4969
      %4971 = vdwg.mxu0
      %v4972 = vmax.f32 %v4970, 0.0
      %v4973 = vld [vmem:[%s10] sm:$0xff]
      %v4974 = vld [vmem:[%s10 + $0x8] sm:$0xff]
      %v4975 = vld [vmem:[%s10 + $0x10] sm:$0xff]
      %v4976 = vld [vmem:[%s10 + $0x18] sm:$0xff]
      %v4977 = vld [vmem:[%s10 + $0x20] sm:$0xff]
      %v4978 = vld [vmem:[%s10 + $0x28] sm:$0x3]
      %v4979 = vld [vmem:[%s11] sm:$0x1]
      %vm4980 = vcmask 343040
      %v4982 = vsel %vm4980, %v4972, 0
      %vm4984 = vcmask 1041408
      %v4986 = vsel %vm4984, %v4978, 0
      %4988 = vmatpush.msra.mxu0 0.0
      %4989 = vmatpush.msra.mxu0 0.0
      %4990 = vmatpush.msra.mxu0 0.0
      %4991 = vmatpush.msra.mxu0 0.0
      %4992 = vmatpush.msra.mxu0 0.0
      %4993 = vmatpush.msra.mxu0 0.0
      %4994 = vmatpush.msra.mxu0 0.0
      %4995 = vmatpush.msra.mxu0 0.0
      %4996 = vmatpush.msra.mxu0 0.0
      %4997 = vmatpush.msra.mxu0 0.0
      %4998 = vmatpush.msra.mxu0 %v4986
      %4999 = vmatpush.msra.mxu0 %v4977
      %5000 = vmatpush.msra.mxu0 %v4976
      %5001 = vmatpush.msra.mxu0 %v4975
      %5002 = vmatpush.msra.mxu0 %v4974
      %5003 = vmatpush.msra.mxu0 %v4973
      %5004 = vmatmul.f32.gmra.mxu0 %v4982
      %v5005 = vpop.f32.mrf.mxu0
      %v5006 = vadd.f32 %v4979, %v5005
      %5007 = vdwg.mxu0
      %v5008 = vxor.u32 %v5006, 2147483648
      %v5009 = vmul.f32 %v5008, 1.442695
      %v5010 = vpow.pop %v5009
      %v5011 = vadd.f32 %v5010, 1.0
      %v5012 = vrcp.pop %v5011
      %v5013 = vmul.f32 %v5011, %v5012
      %v5014 = vsub.f32 1.0, %v5013
      %v5015 = vmul.f32 %v5012, %v5014
      %v5016 = vadd.f32 %v5012, %v5015
      %vm5017 = vweird.f32 %v5011
      %vm5018 = vweird.f32 %v5012
      %vm5019 = vmor %vm5017, %vm5018
      %v5020 = vsel %vm5019, %v5012, %v5016
      %v5021 = vand.u32 2147483647, %v5011
      %vm5022 = vcmp.eq.f32.partialorder %v5021, 8.507059e+37
      %v5023 = vand.u32 %v5011, 2147483648
      %v5024 = vor.u32 1.1754944e-38, %v5023
      %v5025 = vsel %vm5022, %v5024, %v5020
      %v5026 = vmul.f32 1.0, %v5025
      %5027 = vst [vmem:[%s409] sm:$0x1] %v5026
      %p5028 = scmp.lt.s32.totalorder %s23, 1
      %s5029 = scalar_select %p5028, %s23, 1
      %s5030 = scalar_lea.vmem %s12, %s5029
      // Predicated region
      $region69: #{gate_cnn_forward.1} parent=67 // pred_check
        %p5031 = pneg %p298
      $region70: #{gate_cnn_forward.1} parent=67 // pred_check_branch
        %5033 = sbr.rel (%p5031) target = $region72
      $region71: #{gate_cnn_forward.1} parent=67 // pred_region
        _
      $region72: #{gate_cnn_forward.1} parent=67 // pred_fallthru
        _
    $region68: #{gate_cnn_forward.1} parent=5 // pred_fallthru
      _
    %p5034 = scmp.le.s32.totalorder 2, %s18
    // Predicated region
    $region73: #{gate_cnn_forward.1} parent=5 // pred_check
      %p5035 = pneg %p5034
    $region74: #{gate_cnn_forward.1} parent=5 // pred_check_branch
      %5037 = sbr.rel (%p5035) target = $region76
    $region75: #{gate_cnn_forward.1} parent=5 // pred_region
      %s5038 = ssub.s32 %s18, 2
      // Predicated region
      $region77: #{gate_cnn_forward.1} parent=75 // pred_check
        %p5039 = pneg %p304
      $region78: #{gate_cnn_forward.1} parent=75 // pred_check_branch
        %5041 = sbr.rel (%p5039) target = $region80
      $region79: #{gate_cnn_forward.1} parent=75 // pred_region
        %p5042 = scmp.lt.s32.totalorder %s24, 1
        %s5043 = scalar_select %p5042, %s24, 1
        %s5044 = scalar_lea.vmem %s12, %s5043
      $region80: #{gate_cnn_forward.1} parent=75 // pred_fallthru
        _
    $region76: #{gate_cnn_forward.1} parent=5 // pred_fallthru
      _
  $region6: #{gate_cnn_forward.1} parent=0 // loop_footer
    %s22 = sadd.s32 1, %s18
  $region7: #{gate_cnn_forward.1} parent=0 // loop_footer_branch
    %17 = sbr.rel target = $region3
  $region8: #{gate_cnn_forward.1} parent=0 // loop_exit
    _

</llo_original>
